<compile_context>
chip_gen: v7x
topology: tpu7x:2x2x1
jax: 0.10.0
libtpu: 0.0.40
codegen_flags: <defaults>
</compile_context>

<pallas_src>
import numpy as np
import jax
import jax.numpy as jnp
from jax import lax
from jax.experimental import pallas as pl
from jax.experimental.pallas import tpu as pltpu

# ---------------- configuration (small, TPU-tile friendly) -----------------
BS = 2            # batch
T = 16            # num_word (dialog length)
D = 128           # d_model
VOCAB = 256       # vocab_size
NSEG = 8          # number of video segments
M = NSEG * NSEG   # flattened 2D temporal-map positions
NSENT = 2         # sentences per dialog (fixed so embs[sent_mask].view works)
D_RGB = D_FLOW = D_AUD = 64
D_AV = D_RGB + D_FLOW + D_AUD   # concatenated AV feature width (192)

PAD_IDX, CLS_IDX, SENT_START_IDX, SENT_END_IDX = 0, 1, 2, 3
MIN_IOU, MAX_IOU = 0.5, 1.0
SMOOTHING = 0.1
NEG_INF = -1e30

# batch rows handled per grid step.  With BS=2 the grid collapses to a single
# step (v5e/v6e advice); for larger batches keep BS % ROWS == 0 and the grid
# (marked "parallel") shards steps across the two v7x TensorCores.
ROWS = 2
RT = ROWS * T          # 32   flattened text rows per step
RM = ROWS * M          # 128  flattened map cells per step (lane-dense)
RNS = ROWS * NSENT     # 4    sentence-end rows per step
RSEG = ROWS * NSEG     # 16   AV segment rows per step


# ============================ fused Pallas kernels ==========================

def _forward_core(x_ref, tbias_ref, cbias_ref, sel_ref, sumbc_ref, av_ref, pool_ref,
                  wqkv1_ref, wo1_ref, wav_ref, wt3_ref, wq2_ref, wo2_ref,
                  wg_ref, bg_ref):
    """Shared forward body.  Everything stays in VMEM/vregs."""
    f32, bf16 = jnp.float32, jnp.bfloat16
    x = x_ref[0]                                                     # (RT, D) bf16

    # --- uni_decoder hot path: masked self-attention, fused QKV matmul -------
    qkv = jnp.dot(x, wqkv1_ref[...], preferred_element_type=f32)     # (RT, 3D)
    q, k, v = qkv[:, :D], qkv[:, D:2 * D], qkv[:, 2 * D:]
    s = lax.dot_general(q, k, (((1,), (1,)), ((), ())),
                        preferred_element_type=f32) + tbias_ref[0]   # (RT, RT)
    s = s - jnp.max(s, axis=-1, keepdims=True)
    p = jnp.exp(s)
    p = p * pl.reciprocal(jnp.sum(p, axis=-1, keepdims=True), approx=True)
    ctx = jnp.dot(p.astype(bf16), v.astype(bf16), preferred_element_type=f32)
    embs = x.astype(f32) + jnp.dot(ctx.astype(bf16), wo1_ref[...],
                                   preferred_element_type=f32)       # (RT, D)

    # --- sentence-end features (one-hot selector) + per-row summary ----------
    sent_feats = jnp.dot(sel_ref[0], embs, preferred_element_type=f32)       # (RNS, D)
    sent_bcast = jnp.dot(sumbc_ref[...], sent_feats, preferred_element_type=f32)  # (RSEG, D)

    # --- AVEncoder + AVFusion + TAN: wt / wt@wk2 / wt@wv2 folded into (D,3D) -
    av = jnp.dot(av_ref[0], wav_ref[...], preferred_element_type=f32) + sent_bcast
    seg3 = jnp.dot(av.astype(bf16), wt3_ref[...], preferred_element_type=f32)      # (RSEG, 3D)
    mkv = jnp.dot(pool_ref[...], seg3.astype(bf16), preferred_element_type=f32)    # (RM, 3D)
    map2d, k2, v2 = mkv[:, :D], mkv[:, D:2 * D], mkv[:, 2 * D:]

    # --- CrossDecoder hot path: text queries attend over the flattened map ---
    q2 = jnp.dot(embs.astype(bf16), wq2_ref[...], preferred_element_type=f32)
    s2 = lax.dot_general(q2, k2, (((1,), (1,)), ((), ())),
                         preferred_element_type=f32) + cbias_ref[...]         # (RT, RM)
    s2 = s2 - jnp.max(s2, axis=-1, keepdims=True)
    p2 = jnp.exp(s2)
    p2 = p2 * pl.reciprocal(jnp.sum(p2, axis=-1, keepdims=True), approx=True)
    ctx2 = jnp.dot(p2.astype(bf16), v2.astype(bf16), preferred_element_type=f32)
    embs2 = embs + jnp.dot(ctx2.astype(bf16), wo2_ref[...], preferred_element_type=f32)
    attn = jnp.dot(sel_ref[0], p2, preferred_element_type=f32)                # (RNS, RM)

    # --- Generator: vocab projection + log-softmax ---------------------------
    logits = jnp.dot(embs2.astype(bf16), wg_ref[...],
                     preferred_element_type=f32) + bg_ref[...]                # (RT, VOCAB)
    logits = logits - jnp.max(logits, axis=-1, keepdims=True)
    logp = logits - jnp.log(jnp.sum(jnp.exp(logits), axis=-1, keepdims=True))
    return logp, attn, map2d


def _infer_kernel(x_ref, tbias_ref, cbias_ref, sel_ref, sumbc_ref, av_ref, pool_ref,
                  wqkv1_ref, wo1_ref, wav_ref, wt3_ref, wq2_ref, wo2_ref, wg_ref, bg_ref,
                  logp_ref, attn_ref, map_ref):
    logp, attn, map2d = _forward_core(
        x_ref, tbias_ref, cbias_ref, sel_ref, sumbc_ref, av_ref, pool_ref,
        wqkv1_ref, wo1_ref, wav_ref, wt3_ref, wq2_ref, wo2_ref, wg_ref, bg_ref)
    logp_ref[0] = logp
    attn_ref[0] = attn
    map_ref[0] = map2d


def _loss_kernel(x_ref, tbias_ref, cbias_ref, sel_ref, sumbc_ref, av_ref, pool_ref,
                 wqkv1_ref, wo1_ref, wav_ref, wt3_ref, wq2_ref, wo2_ref, wg_ref, bg_ref,
                 y_ref, ttgt_ref, tmsk_ref,
                 attn_ref, tanp_ref, genp_ref):
    # Training path: (RT, VOCAB) log-probs and (RM, D) map never leave VMEM;
    # the loss reductions happen here and only tiny per-row partials go to HBM.
    logp, attn, _ = _forward_core(
        x_ref, tbias_ref, cbias_ref, sel_ref, sumbc_ref, av_ref, pool_ref,
        wqkv1_ref, wo1_ref, wav_ref, wt3_ref, wo2_ref=wo2_ref, wq2_ref=wq2_ref,
        wg_ref=wg_ref, bg_ref=bg_ref, wt3_ref=wt3_ref) if False else _forward_core(
        x_ref, tbias_ref, cbias_ref, sel_ref, sumbc_ref, av_ref, pool_ref,
        wqkv1_ref, wo1_ref, wav_ref, wt3_ref, wq2_ref, wo2_ref, wg_ref, bg_ref)
    attn_ref[0] = attn

    # --- TAN scaled-IoU BCE (block-diag masked; final mean done in wrapper) ---
    # TODO(synk): TanLoss internals not in source; standard 2D-TAN scaled-IoU BCE.
    t = jnp.clip((ttgt_ref[0] - MIN_IOU) / (MAX_IOU - MIN_IOU), 0.0, 1.0)
    sc = jnp.clip(attn, 1e-6, 1.0 - 1e-6)
    bce = -(t * jnp.log(sc) + (1.0 - t) * jnp.log(1.0 - sc))
    tanp_ref[0] = jnp.sum(bce * tmsk_ref[0], axis=-1, keepdims=True)          # (RNS, 1)

    # --- label-smoothing KL per token (final mean done in wrapper) -----------
    # TODO(synk): LabelSmoothing internals not in source; standard KL label smoothing.
    y = y_ref[0]                                                              # (RT, 1) int32
    col = lax.broadcasted_iota(jnp.int32, logp.shape, 1)
    lp_tgt = jnp.sum(jnp.where(col == y, logp, 0.0), axis=-1, keepdims=True)
    lp_pad = jnp.sum(jnp.where(col == PAD_IDX, logp, 0.0), axis=-1, keepdims=True)
    lp_sum = jnp.sum(logp, axis=-1, keepdims=True)
    conf = 1.0 - SMOOTHING
    smooth = SMOOTHING / (VOCAB - 2)
    ent = float(conf * np.log(conf) + SMOOTHING * np.log(smooth))             # sum t*log(t)
    kl = ent - conf * lp_tgt - smooth * (lp_sum - lp_pad - lp_tgt)
    tok = (y != PAD_IDX).astype(jnp.float32)
    genp_ref[0] = kl * tok                                                    # (RT, 1)


# ============================ pallas_call wrappers ==========================

def _common_specs():
    g3 = lambda g: (g, 0, 0)
    c2 = lambda g: (0, 0)
    return [
        pl.BlockSpec((1, RT, D), g3),        # x: token+pos embeddings (bf16)
        pl.BlockSpec((1, RT, RT), g3),       # additive text mask (block-diag)
        pl.BlockSpec((RT, RM), c2),          # additive cross/map-valid mask (const)
        pl.BlockSpec((1, RNS, RT), g3),      # one-hot sentence-end selector
        pl.BlockSpec((RSEG, RNS), c2),       # per-row sentence-summary broadcast (const)
        pl.BlockSpec((1, RSEG, D_AV), g3),   # rgb|flow|audio concat (bf16)
        pl.BlockSpec((RM, RSEG), c2),        # block-diag 2D-map pooling matrix (const)
        pl.BlockSpec((D, 3 * D), c2),        # wqkv1 = [wq1|wk1|wv1]
        pl.BlockSpec((D, D), c2),            # wo1
        pl.BlockSpec((D_AV, D), c2),         # wav (wr|wf|wa concat)
        pl.BlockSpec((D, 3 * D), c2),        # wt3 = [wt | wt@wk2 | wt@wv2]
        pl.BlockSpec((D, D), c2),            # wq2
        pl.BlockSpec((D, D), c2),            # wo2
        pl.BlockSpec((D, VOCAB), c2),        # wg
        pl.BlockSpec((1, VOCAB), c2),        # bg
    ]


def _common_args(x, tbias, cbias, sel, sumbc, av, pool_bd, w):
    return (x, tbias, cbias, sel, sumbc, av, pool_bd,
            w['wqkv1'], w['wo1'], w['wav'], w['wt3'], w['wq2'], w['wo2'],
            w['wg'], w['bg'])


def avsd_fused_infer(x, tbias, cbias, sel, sumbc, av, pool_bd, w):
    g = x.shape[0]
    g3 = lambda i: (i, 0, 0)
    return pl.pallas_call(
        _infer_kernel,
        out_shape=(jax.ShapeDtypeStruct((g, RT, VOCAB), jnp.float32),
                   jax.ShapeDtypeStruct((g, RNS, RM), jnp.float32),
                   jax.ShapeDtypeStruct((g, RM, D), jnp.float32)),
        grid=(g,),
        in_specs=_common_specs(),
        out_specs=(pl.BlockSpec((1, RT, VOCAB), g3),
                   pl.BlockSpec((1, RNS, RM), g3),
                   pl.BlockSpec((1, RM, D), g3)),
        compiler_params=pltpu.CompilerParams(dimension_semantics=("parallel",)),
    )(*_common_args(x, tbias, cbias, sel, sumbc, av, pool_bd, w))


def avsd_fused_loss(x, tbias, cbias, sel, sumbc, av, pool_bd, w, y, ttgt, tmsk):
    g = x.shape[0]
    g3 = lambda i: (i, 0, 0)
    in_specs = _common_specs() + [
        pl.BlockSpec((1, RT, 1), g3),        # next-token targets (int32)
        pl.BlockSpec((1, RNS, RM), g3),      # block-diag TAN target
        pl.BlockSpec((1, RNS, RM), g3),      # block-diag TAN mask
    ]
    return pl.pallas_call(
        _loss_kernel,
        out_shape=(jax.ShapeDtypeStruct((g, RNS, RM), jnp.float32),
                   jax.ShapeDtypeStruct((g, RNS, 1), jnp.float32),
                   jax.ShapeDtypeStruct((g, RT, 1), jnp.float32)),
        grid=(g,),
        in_specs=in_specs,
        out_specs=(pl.BlockSpec((1, RNS, RM), g3),
                   pl.BlockSpec((1, RNS, 1), g3),
                   pl.BlockSpec((1, RT, 1), g3)),
        compiler_params=pltpu.CompilerParams(dimension_semantics=("parallel",)),
    )(*_common_args(x, tbias, cbias, sel, sumbc, av, pool_bd, w), y, ttgt, tmsk)


# ============================ JAX glue (AVSDTan logic) ======================

def get_sent_indices(text):
    s = (text == SENT_START_IDX).astype(jnp.int32)
    s = jnp.cumsum(s, axis=-1) - 1
    return jnp.clip(s, 0, None)


def get_mask(text):
    bs, num_word = text.shape
    padding_mask = text != PAD_IDX
    tril = jnp.tril(jnp.ones((1, num_word, num_word), dtype=bool), 0)
    text_mask = padding_mask[:, None, :] & tril
    return padding_mask, text_mask


def _block_diag_groups(x, g, r):
    """(BS, A, B) -> (G, r*A, r*B), per-group block-diagonal placement."""
    _, a, b = x.shape
    eye = jnp.eye(r, dtype=x.dtype)
    xg = x.reshape(g, r, a, b)
    return jnp.einsum('grab,rq->graqb', xg, eye).reshape(g, r * a, r * b)


def _build_common_inputs(params, pool, valid, feats, dialog_x):
    rgb, flow, audio = feats['rgb'], feats['flow'], feats['audio']
    bs = rgb.shape[0]
    assert bs % ROWS == 0, "batch must be a multiple of ROWS"
    g = bs // ROWS

    _, text_mask = get_mask(dialog_x)
    # block-diag additive text bias: cross-batch and masked positions -> -1e30
    tbd = _block_diag_groups(text_mask.astype(jnp.float32), g, ROWS)
    tbias = jnp.where(tbd > 0.5, 0.0, NEG_INF).astype(jnp.float32)           # (G,RT,RT)

    # constant additive cross bias: only valid map cells of the same row are open
    valid_cols = jnp.tile(valid.reshape(-1), (ROWS,))                        # (RM,)
    blk = jnp.kron(jnp.eye(ROWS, dtype=jnp.float32),
                   jnp.ones((T, M), jnp.float32))                            # (RT,RM)
    cbias = jnp.where((blk > 0.5) & (valid_cols[None, :] > 0.5),
                      0.0, NEG_INF).astype(jnp.float32)

    # word + positional embedding (token gather kept in XLA glue)
    tok_emb = jnp.take(params['word_emb'], dialog_x, axis=0)
    x = (tok_emb + params['pos_emb'][None]).reshape(g, RT, D).astype(jnp.bfloat16)

    # one-hot selector: sel @ embs == embs[dialog_x == sent_end].view(bs,NSENT,D)
    # NOTE: assumes exactly NSENT SENT_END tokens per dialog row (as constructed).
    sent_mask = dialog_x == SENT_END_IDX
    sent_pos = jnp.argsort(jnp.where(sent_mask, 0, 1), axis=-1)[:, :NSENT]   # (BS,NSENT)
    flat_pos = (sent_pos.reshape(g, ROWS, NSENT)
                + (jnp.arange(ROWS) * T)[None, :, None]).reshape(g, RNS)
    sel = jax.nn.one_hot(flat_pos, RT, dtype=jnp.float32)                    # (G,RNS,RT)

    # broadcast matrix: per-batch mean of its sentence features -> its NSEG rows
    sumbc = jnp.kron(jnp.eye(ROWS, dtype=jnp.float32),
                     jnp.full((NSEG, NSENT), 1.0 / NSENT, jnp.float32))      # (RSEG,RNS)

    av_cat = jnp.concatenate([rgb, flow, audio], axis=-1)
    av_cat = av_cat.reshape(g, RSEG, D_AV).astype(jnp.bfloat16)

    pool_bd = jnp.kron(jnp.eye(ROWS, dtype=jnp.float32), pool).astype(jnp.bfloat16)

    return g, x, tbias, cbias, sel, sumbc, av_cat, pool_bd


def avsd_tan_forward(params, pool, valid, feats, dialog_x, dialog_y,
                     tan_target, tan_mask, compute_loss=True):
    bs = feats['rgb'].shape[0]
    g, x, tbias, cbias, sel, sumbc, av_cat, pool_bd = _build_common_inputs(
        params, pool, valid, feats, dialog_x)

    # TODO(synk): sent_indices drives per-sentence map selection in the real
    # CrossDecoder; the simplified stand-in shares one map per dialog.
    _ = get_sent_indices(dialog_x)

    if compute_loss:
        y = dialog_y.reshape(g, RT, 1).astype(jnp.int32)
        ttgt = _block_diag_groups(
            tan_target.reshape(bs, NSENT, M).astype(jnp.float32), g, ROWS)
        tmsk = _block_diag_groups(
            tan_mask.reshape(bs, NSENT, M).astype(jnp.float32), g, ROWS)
        _, tanp, genp = avsd_fused_loss(
            x, tbias, cbias, sel, sumbc, av_cat, pool_bd, params, y, ttgt, tmsk)
        tan_loss = jnp.sum(tanp) / jnp.maximum(jnp.sum(tan_mask.astype(jnp.float32)), 1.0)
        dialog_loss = jnp.sum(genp) / jnp.maximum(
            jnp.sum((dialog_y != PAD_IDX).astype(jnp.float32)), 1.0)
        return tan_loss, dialog_loss

    log_probs, attn_full, map2d = avsd_fused_infer(
        x, tbias, cbias, sel, sumbc, av_cat, pool_bd, params)
    a = attn_full.reshape(g, ROWS, NSENT, ROWS, M)
    attn_w = jnp.einsum('grsqm,rq->grsm', a, jnp.eye(ROWS, dtype=a.dtype))
    attn_w = attn_w.reshape(bs, NSENT, NSEG, NSEG)
    return (log_probs.reshape(bs, T, VOCAB), attn_w, map2d.reshape(bs, M, D))


# ============================ parameter / input setup =======================

def init_params(key):
    names_shapes = [
        ('word_emb', (VOCAB, D)), ('pos_emb', (T, D)),
        ('wq1', (D, D)), ('wk1', (D, D)), ('wv1', (D, D)), ('wo1', (D, D)),
        ('wav', (D_AV, D)),                 # concatenated wr|wf|wa
        ('wt', (D, D)),
        ('wq2', (D, D)), ('wk2', (D, D)), ('wv2', (D, D)), ('wo2', (D, D)),
        ('wg', (D, VOCAB)), ('bg', (1, VOCAB)),
    ]
    keys = jax.random.split(key, len(names_shapes))
    raw = {n: (jax.random.normal(k, s, jnp.float32) * 0.02)
           for (n, s), k in zip(names_shapes, keys)}
    inv_sqrt_d = np.float32(1.0 / np.sqrt(D))

    p = {'word_emb': raw['word_emb'], 'pos_emb': raw['pos_emb'], 'bg': raw['bg']}
    # fused/folded bf16 weights (attention scale folded into the query proj,
    # QKV concatenated, wt@wk2 / wt@wv2 reassociated through the pooling)
    p['wqkv1'] = jnp.concatenate(
        [raw['wq1'] * inv_sqrt_d, raw['wk1'], raw['wv1']], axis=1).astype(jnp.bfloat16)
    p['wo1'] = raw['wo1'].astype(jnp.bfloat16)
    p['wav'] = raw['wav'].astype(jnp.bfloat16)
    p['wt3'] = jnp.concatenate(
        [raw['wt'], raw['wt'] @ raw['wk2'], raw['wt'] @ raw['wv2']],
        axis=1).astype(jnp.bfloat16)
    p['wq2'] = (raw['wq2'] * inv_sqrt_d).astype(jnp.bfloat16)
    p['wo2'] = raw['wo2'].astype(jnp.bfloat16)
    p['wg'] = raw['wg'].astype(jnp.bfloat16)
    return p


def build_pool_and_valid():
    pool = np.zeros((M, NSEG), np.float32)
    valid = np.zeros((1, M), np.float32)
    for i in range(NSEG):
        for j in range(NSEG):
            if j >= i:
                pool[i * NSEG + j, i:j + 1] = 1.0 / (j - i + 1)
                valid[0, i * NSEG + j] = 1.0
    return jnp.asarray(pool), jnp.asarray(valid)


if __name__ == "__main__":
    key = jax.random.PRNGKey(0)
    k_p, k_r, k_f, k_a, k_t, k_w = jax.random.split(key, 6)

    params = init_params(k_p)
    pool, valid = build_pool_and_valid()

    # dialog: 2 sentences per row, identical structure so the sentence-end
    # gather reshapes cleanly (as embs[sent_mask].view(bs, -1, D) requires)
    words = np.asarray(jax.random.randint(k_w, (BS, 8), 4, VOCAB))
    dialog_np = np.full((BS, T), PAD_IDX, np.int32)
    for b in range(BS):
        row = [SENT_START_IDX, *words[b, :4], SENT_END_IDX,
               SENT_START_IDX, *words[b, 4:], SENT_END_IDX, CLS_IDX]
        dialog_np[b, :len(row)] = row
    dialog_x = jnp.asarray(dialog_np)
    dialog_y = jnp.concatenate(
        [dialog_x[:, 1:], jnp.full((BS, 1), PAD_IDX, jnp.int32)], axis=1)

    feats = {
        'rgb':   jax.random.normal(k_r, (BS, NSEG, D_RGB),  jnp.float32),
        'flow':  jax.random.normal(k_f, (BS, NSEG, D_FLOW), jnp.float32),
        'audio': jax.random.normal(k_a, (BS, NSEG, D_AUD),  jnp.float32),
    }
    tan_target = jax.random.uniform(k_t, (BS, NSENT, NSEG, NSEG), jnp.float32)
    tri = jnp.triu(jnp.ones((NSEG, NSEG), jnp.float32))
    tan_mask = jnp.broadcast_to(tri, (BS, NSENT, NSEG, NSEG))

    # training path (losses fused in-kernel; no log-prob / map2d HBM writeback)
    tan_loss, dialog_loss = avsd_tan_forward(
        params, pool, valid, feats, dialog_x, dialog_y, tan_target, tan_mask,
        compute_loss=True)
    # inference path (gen_dialog, attn_w, map2d)
    log_probs, attn_w, map2d = avsd_tan_forward(
        params, pool, valid, feats, dialog_x, dialog_y, tan_target, tan_mask,
        compute_loss=False)
    jax.block_until_ready((tan_loss, dialog_loss, log_probs, attn_w, map2d))

    assert jnp.isfinite(tan_loss) and jnp.isfinite(dialog_loss)
    assert bool(jnp.all(jnp.isfinite(log_probs)))
    assert bool(jnp.all(jnp.isfinite(attn_w)))
    assert bool(jnp.all(jnp.isfinite(map2d)))
    print("KERNEL_OK")
</pallas_src>

<mosaic_0001>
module attributes {stable_mosaic.version = 11 : i64} {
  func.func @_loss_kernel(%arg0: i32, %arg1: memref<1x32x128xbf16, #tpu.memory_space<vmem>>, %arg2: memref<1x32x32xf32, #tpu.memory_space<vmem>>, %arg3: memref<32x128xf32, #tpu.memory_space<vmem>>, %arg4: memref<1x4x32xf32, #tpu.memory_space<vmem>>, %arg5: memref<16x4xf32, #tpu.memory_space<vmem>>, %arg6: memref<1x16x192xbf16, #tpu.memory_space<vmem>>, %arg7: memref<128x16xbf16, #tpu.memory_space<vmem>>, %arg8: memref<128x384xbf16, #tpu.memory_space<vmem>>, %arg9: memref<128x128xbf16, #tpu.memory_space<vmem>>, %arg10: memref<192x128xbf16, #tpu.memory_space<vmem>>, %arg11: memref<128x384xbf16, #tpu.memory_space<vmem>>, %arg12: memref<128x128xbf16, #tpu.memory_space<vmem>>, %arg13: memref<128x128xbf16, #tpu.memory_space<vmem>>, %arg14: memref<128x256xbf16, #tpu.memory_space<vmem>>, %arg15: memref<1x256xf32, #tpu.memory_space<vmem>>, %arg16: memref<1x32x1xi32, #tpu.memory_space<vmem>>, %arg17: memref<1x4x128xf32, #tpu.memory_space<vmem>>, %arg18: memref<1x4x128xf32, #tpu.memory_space<vmem>>, %arg19: memref<1x4x128xf32, #tpu.memory_space<vmem>>, %arg20: memref<1x4x1xf32, #tpu.memory_space<vmem>>, %arg21: memref<1x32x1xf32, #tpu.memory_space<vmem>>) attributes {dimension_semantics = [#tpu.dimension_semantics<parallel>], iteration_bounds = array<i64: 1>, scalar_prefetch = 0 : i64, scratch_operands = 0 : i64, tpu.core_type = #tpu.core_type<tc>, window_params = [{transform_indices = @transform_0, window_bounds = array<i64: 1, 32, 128>}, {transform_indices = @transform_1, window_bounds = array<i64: 1, 32, 32>}, {pipeline_mode = #tpu.pipeline_mode<synchronous>, transform_indices = @transform_2, window_bounds = array<i64: 32, 128>}, {transform_indices = @transform_3, window_bounds = array<i64: 1, 4, 32>}, {pipeline_mode = #tpu.pipeline_mode<synchronous>, transform_indices = @transform_4, window_bounds = array<i64: 16, 4>}, {transform_indices = @transform_5, window_bounds = array<i64: 1, 16, 192>}, {pipeline_mode = #tpu.pipeline_mode<synchronous>, transform_indices = @transform_6, window_bounds = array<i64: 128, 16>}, {pipeline_mode = #tpu.pipeline_mode<synchronous>, transform_indices = @transform_7, window_bounds = array<i64: 128, 384>}, {pipeline_mode = #tpu.pipeline_mode<synchronous>, transform_indices = @transform_8, window_bounds = array<i64: 128, 128>}, {pipeline_mode = #tpu.pipeline_mode<synchronous>, transform_indices = @transform_9, window_bounds = array<i64: 192, 128>}, {pipeline_mode = #tpu.pipeline_mode<synchronous>, transform_indices = @transform_10, window_bounds = array<i64: 128, 384>}, {pipeline_mode = #tpu.pipeline_mode<synchronous>, transform_indices = @transform_11, window_bounds = array<i64: 128, 128>}, {pipeline_mode = #tpu.pipeline_mode<synchronous>, transform_indices = @transform_12, window_bounds = array<i64: 128, 128>}, {pipeline_mode = #tpu.pipeline_mode<synchronous>, transform_indices = @transform_13, window_bounds = array<i64: 128, 256>}, {pipeline_mode = #tpu.pipeline_mode<synchronous>, transform_indices = @transform_14, window_bounds = array<i64: 1, 256>}, {transform_indices = @transform_15, window_bounds = array<i64: 1, 32, 1>}, {transform_indices = @transform_16, window_bounds = array<i64: 1, 4, 128>}, {transform_indices = @transform_17, window_bounds = array<i64: 1, 4, 128>}, {transform_indices = @transform_18, window_bounds = array<i64: 1, 4, 128>}, {transform_indices = @transform_19, window_bounds = array<i64: 1, 4, 1>}, {transform_indices = @transform_20, window_bounds = array<i64: 1, 32, 1>}]} {
    %c0 = arith.constant 0 : index
    %c0_0 = arith.constant 0 : index
    %c0_1 = arith.constant 0 : index
    %0 = vector.load %arg1[%c0, %c0_0, %c0_1] : memref<1x32x128xbf16, #tpu.memory_space<vmem>>, vector<1x32x128xbf16>
    %1 = vector.shape_cast %0 : vector<1x32x128xbf16> to vector<32x128xbf16>
    %c0_2 = arith.constant 0 : index
    %c0_3 = arith.constant 0 : index
    %2 = vector.load %arg8[%c0_2, %c0_3] : memref<128x384xbf16, #tpu.memory_space<vmem>>, vector<128x384xbf16>
    %cst = arith.constant dense<0.000000e+00> : vector<32x384xf32>
    %3 = tpu.matmul %1, %2, %cst {dimension_numbers = #tpu.dot_dimension_numbers<[1], [0], [0], [1], [0, 0, 1, 1], [], []>} : vector<32x128xbf16>, vector<128x384xbf16>, vector<32x384xf32> -> vector<32x384xf32>
    %4 = vector.extract_strided_slice %3 {offsets = [0, 0], sizes = [32, 128], strides = [1, 1]} : vector<32x384xf32> to vector<32x128xf32>
    %5 = vector.extract_strided_slice %3 {offsets = [0, 128], sizes = [32, 128], strides = [1, 1]} : vector<32x384xf32> to vector<32x128xf32>
    %6 = vector.extract_strided_slice %3 {offsets = [0, 256], sizes = [32, 128], strides = [1, 1]} : vector<32x384xf32> to vector<32x128xf32>
    %cst_4 = arith.constant dense<0.000000e+00> : vector<32x32xf32>
    %7 = tpu.matmul %4, %5, %cst_4 {dimension_numbers = #tpu.dot_dimension_numbers<[1], [1], [0], [0], [0, 0, 1, 0], [], []>} : vector<32x128xf32>, vector<32x128xf32>, vector<32x32xf32> -> vector<32x32xf32>
    %c0_5 = arith.constant 0 : index
    %c0_6 = arith.constant 0 : index
    %c0_7 = arith.constant 0 : index
    %8 = vector.load %arg2[%c0_5, %c0_6, %c0_7] : memref<1x32x32xf32, #tpu.memory_space<vmem>>, vector<1x32x32xf32>
    %9 = vector.shape_cast %8 : vector<1x32x32xf32> to vector<32x32xf32>
    %10 = arith.addf %7, %9 : vector<32x32xf32>
    %cst_8 = arith.constant dense<0xFF800000> : vector<32xf32>
    %11 = vector.multi_reduction <maximumf>, %10, %cst_8 [1] : vector<32x32xf32> to vector<32xf32>
    %12 = vector.shape_cast %11 : vector<32xf32> to vector<32x1xf32>
    %13 = vector.broadcast %12 : vector<32x1xf32> to vector<32x32xf32>
    %14 = arith.subf %10, %13 : vector<32x32xf32>
    %15 = math.exp %14 : vector<32x32xf32>
    %cst_9 = arith.constant dense<0.000000e+00> : vector<32xf32>
    %16 = vector.multi_reduction <add>, %15, %cst_9 [1] : vector<32x32xf32> to vector<32xf32>
    %17 = vector.shape_cast %16 : vector<32xf32> to vector<32x1xf32>
    %18 = tpu.reciprocal %17 {approx = true} : vector<32x1xf32> -> vector<32x1xf32>
    %19 = vector.broadcast %18 : vector<32x1xf32> to vector<32x32xf32>
    %20 = arith.mulf %15, %19 : vector<32x32xf32>
    %21 = arith.truncf %20 : vector<32x32xf32> to vector<32x32xbf16>
    %22 = arith.truncf %6 : vector<32x128xf32> to vector<32x128xbf16>
    %cst_10 = arith.constant dense<0.000000e+00> : vector<32x128xf32>
    %23 = tpu.matmul %21, %22, %cst_10 {dimension_numbers = #tpu.dot_dimension_numbers<[1], [0], [0], [1], [0, 0, 1, 1], [], []>} : vector<32x32xbf16>, vector<32x128xbf16>, vector<32x128xf32> -> vector<32x128xf32>
    %24 = arith.extf %1 : vector<32x128xbf16> to vector<32x128xf32>
    %25 = arith.truncf %23 : vector<32x128xf32> to vector<32x128xbf16>
    %c0_11 = arith.constant 0 : index
    %c0_12 = arith.constant 0 : index
    %26 = vector.load %arg9[%c0_11, %c0_12] : memref<128x128xbf16, #tpu.memory_space<vmem>>, vector<128x128xbf16>
    %cst_13 = arith.constant dense<0.000000e+00> : vector<32x128xf32>
    %27 = tpu.matmul %25, %26, %cst_13 {dimension_numbers = #tpu.dot_dimension_numbers<[1], [0], [0], [1], [0, 0, 1, 1], [], []>} : vector<32x128xbf16>, vector<128x128xbf16>, vector<32x128xf32> -> vector<32x128xf32>
    %28 = arith.addf %24, %27 : vector<32x128xf32>
    %c0_14 = arith.constant 0 : index
    %c0_15 = arith.constant 0 : index
    %c0_16 = arith.constant 0 : index
    %29 = vector.load %arg4[%c0_14, %c0_15, %c0_16] : memref<1x4x32xf32, #tpu.memory_space<vmem>>, vector<1x4x32xf32>
    %30 = vector.shape_cast %29 : vector<1x4x32xf32> to vector<4x32xf32>
    %cst_17 = arith.constant dense<0.000000e+00> : vector<4x128xf32>
    %31 = tpu.matmul %30, %28, %cst_17 {dimension_numbers = #tpu.dot_dimension_numbers<[1], [0], [0], [1], [0, 0, 1, 1], [], []>} : vector<4x32xf32>, vector<32x128xf32>, vector<4x128xf32> -> vector<4x128xf32>
    %c0_18 = arith.constant 0 : index
    %c0_19 = arith.constant 0 : index
    %32 = vector.load %arg5[%c0_18, %c0_19] : memref<16x4xf32, #tpu.memory_space<vmem>>, vector<16x4xf32>
    %cst_20 = arith.constant dense<0.000000e+00> : vector<16x128xf32>
    %33 = tpu.matmul %32, %31, %cst_20 {dimension_numbers = #tpu.dot_dimension_numbers<[1], [0], [0], [1], [0, 0, 1, 1], [], []>} : vector<16x4xf32>, vector<4x128xf32>, vector<16x128xf32> -> vector<16x128xf32>
    %c0_21 = arith.constant 0 : index
    %c0_22 = arith.constant 0 : index
    %c0_23 = arith.constant 0 : index
    %34 = vector.load %arg6[%c0_21, %c0_22, %c0_23] : memref<1x16x192xbf16, #tpu.memory_space<vmem>>, vector<1x16x192xbf16>
    %35 = vector.shape_cast %34 : vector<1x16x192xbf16> to vector<16x192xbf16>
    %c0_24 = arith.constant 0 : index
    %c0_25 = arith.constant 0 : index
    %36 = vector.load %arg10[%c0_24, %c0_25] : memref<192x128xbf16, #tpu.memory_space<vmem>>, vector<192x128xbf16>
    %cst_26 = arith.constant dense<0.000000e+00> : vector<16x128xf32>
    %37 = tpu.matmul %35, %36, %cst_26 {dimension_numbers = #tpu.dot_dimension_numbers<[1], [0], [0], [1], [0, 0, 1, 1], [], []>} : vector<16x192xbf16>, vector<192x128xbf16>, vector<16x128xf32> -> vector<16x128xf32>
    %38 = arith.addf %37, %33 : vector<16x128xf32>
    %39 = arith.truncf %38 : vector<16x128xf32> to vector<16x128xbf16>
    %c0_27 = arith.constant 0 : index
    %c0_28 = arith.constant 0 : index
    %40 = vector.load %arg11[%c0_27, %c0_28] : memref<128x384xbf16, #tpu.memory_space<vmem>>, vector<128x384xbf16>
    %cst_29 = arith.constant dense<0.000000e+00> : vector<16x384xf32>
    %41 = tpu.matmul %39, %40, %cst_29 {dimension_numbers = #tpu.dot_dimension_numbers<[1], [0], [0], [1], [0, 0, 1, 1], [], []>} : vector<16x128xbf16>, vector<128x384xbf16>, vector<16x384xf32> -> vector<16x384xf32>
    %c0_30 = arith.constant 0 : index
    %c0_31 = arith.constant 0 : index
    %42 = vector.load %arg7[%c0_30, %c0_31] : memref<128x16xbf16, #tpu.memory_space<vmem>>, vector<128x16xbf16>
    %43 = arith.truncf %41 : vector<16x384xf32> to vector<16x384xbf16>
    %cst_32 = arith.constant dense<0.000000e+00> : vector<128x384xf32>
    %44 = tpu.matmul %42, %43, %cst_32 {dimension_numbers = #tpu.dot_dimension_numbers<[1], [0], [0], [1], [0, 0, 1, 1], [], []>} : vector<128x16xbf16>, vector<16x384xbf16>, vector<128x384xf32> -> vector<128x384xf32>
    %45 = vector.extract_strided_slice %44 {offsets = [0, 128], sizes = [128, 128], strides = [1, 1]} : vector<128x384xf32> to vector<128x128xf32>
    %46 = vector.extract_strided_slice %44 {offsets = [0, 256], sizes = [128, 128], strides = [1, 1]} : vector<128x384xf32> to vector<128x128xf32>
    %47 = arith.truncf %28 : vector<32x128xf32> to vector<32x128xbf16>
    %c0_33 = arith.constant 0 : index
    %c0_34 = arith.constant 0 : index
    %48 = vector.load %arg12[%c0_33, %c0_34] : memref<128x128xbf16, #tpu.memory_space<vmem>>, vector<128x128xbf16>
    %cst_35 = arith.constant dense<0.000000e+00> : vector<32x128xf32>
    %49 = tpu.matmul %47, %48, %cst_35 {dimension_numbers = #tpu.dot_dimension_numbers<[1], [0], [0], [1], [0, 0, 1, 1], [], []>} : vector<32x128xbf16>, vector<128x128xbf16>, vector<32x128xf32> -> vector<32x128xf32>
    %cst_36 = arith.constant dense<0.000000e+00> : vector<32x128xf32>
    %50 = tpu.matmul %49, %45, %cst_36 {dimension_numbers = #tpu.dot_dimension_numbers<[1], [1], [0], [0], [0, 0, 1, 0], [], []>} : vector<32x128xf32>, vector<128x128xf32>, vector<32x128xf32> -> vector<32x128xf32>
    %c0_37 = arith.constant 0 : index
    %c0_38 = arith.constant 0 : index
    %51 = vector.load %arg3[%c0_37, %c0_38] : memref<32x128xf32, #tpu.memory_space<vmem>>, vector<32x128xf32>
    %52 = arith.addf %50, %51 : vector<32x128xf32>
    %cst_39 = arith.constant dense<0xFF800000> : vector<32xf32>
    %53 = vector.multi_reduction <maximumf>, %52, %cst_39 [1] : vector<32x128xf32> to vector<32xf32>
    %54 = vector.shape_cast %53 : vector<32xf32> to vector<32x1xf32>
    %55 = vector.broadcast %54 : vector<32x1xf32> to vector<32x128xf32>
    %56 = arith.subf %52, %55 : vector<32x128xf32>
    %57 = math.exp %56 : vector<32x128xf32>
    %cst_40 = arith.constant dense<0.000000e+00> : vector<32xf32>
    %58 = vector.multi_reduction <add>, %57, %cst_40 [1] : vector<32x128xf32> to vector<32xf32>
    %59 = vector.shape_cast %58 : vector<32xf32> to vector<32x1xf32>
    %60 = tpu.reciprocal %59 {approx = true} : vector<32x1xf32> -> vector<32x1xf32>
    %61 = vector.broadcast %60 : vector<32x1xf32> to vector<32x128xf32>
    %62 = arith.mulf %57, %61 : vector<32x128xf32>
    %63 = arith.truncf %62 : vector<32x128xf32> to vector<32x128xbf16>
    %64 = arith.truncf %46 : vector<128x128xf32> to vector<128x128xbf16>
    %cst_41 = arith.constant dense<0.000000e+00> : vector<32x128xf32>
    %65 = tpu.matmul %63, %64, %cst_41 {dimension_numbers = #tpu.dot_dimension_numbers<[1], [0], [0], [1], [0, 0, 1, 1], [], []>} : vector<32x128xbf16>, vector<128x128xbf16>, vector<32x128xf32> -> vector<32x128xf32>
    %66 = arith.truncf %65 : vector<32x128xf32> to vector<32x128xbf16>
    %c0_42 = arith.constant 0 : index
    %c0_43 = arith.constant 0 : index
    %67 = vector.load %arg13[%c0_42, %c0_43] : memref<128x128xbf16, #tpu.memory_space<vmem>>, vector<128x128xbf16>
    %cst_44 = arith.constant dense<0.000000e+00> : vector<32x128xf32>
    %68 = tpu.matmul %66, %67, %cst_44 {dimension_numbers = #tpu.dot_dimension_numbers<[1], [0], [0], [1], [0, 0, 1, 1], [], []>} : vector<32x128xbf16>, vector<128x128xbf16>, vector<32x128xf32> -> vector<32x128xf32>
    %69 = arith.addf %28, %68 : vector<32x128xf32>
    %c0_45 = arith.constant 0 : index
    %c0_46 = arith.constant 0 : index
    %c0_47 = arith.constant 0 : index
    %70 = vector.load %arg4[%c0_45, %c0_46, %c0_47] : memref<1x4x32xf32, #tpu.memory_space<vmem>>, vector<1x4x32xf32>
    %71 = vector.shape_cast %70 : vector<1x4x32xf32> to vector<4x32xf32>
    %cst_48 = arith.constant dense<0.000000e+00> : vector<4x128xf32>
    %72 = tpu.matmul %71, %62, %cst_48 {dimension_numbers = #tpu.dot_dimension_numbers<[1], [0], [0], [1], [0, 0, 1, 1], [], []>} : vector<4x32xf32>, vector<32x128xf32>, vector<4x128xf32> -> vector<4x128xf32>
    %73 = arith.truncf %69 : vector<32x128xf32> to vector<32x128xbf16>
    %c0_49 = arith.constant 0 : index
    %c0_50 = arith.constant 0 : index
    %74 = vector.load %arg14[%c0_49, %c0_50] : memref<128x256xbf16, #tpu.memory_space<vmem>>, vector<128x256xbf16>
    %cst_51 = arith.constant dense<0.000000e+00> : vector<32x256xf32>
    %75 = tpu.matmul %73, %74, %cst_51 {dimension_numbers = #tpu.dot_dimension_numbers<[1], [0], [0], [1], [0, 0, 1, 1], [], []>} : vector<32x128xbf16>, vector<128x256xbf16>, vector<32x256xf32> -> vector<32x256xf32>
    %c0_52 = arith.constant 0 : index
    %c0_53 = arith.constant 0 : index
    %76 = vector.load %arg15[%c0_52, %c0_53] : memref<1x256xf32, #tpu.memory_space<vmem>>, vector<1x256xf32>
    %77 = vector.broadcast %76 : vector<1x256xf32> to vector<32x256xf32>
    %78 = arith.addf %75, %77 : vector<32x256xf32>
    %cst_54 = arith.constant dense<0xFF800000> : vector<32xf32>
    %79 = vector.multi_reduction <maximumf>, %78, %cst_54 [1] : vector<32x256xf32> to vector<32xf32>
    %80 = vector.shape_cast %79 : vector<32xf32> to vector<32x1xf32>
    %81 = vector.broadcast %80 : vector<32x1xf32> to vector<32x256xf32>
    %82 = arith.subf %78, %81 : vector<32x256xf32>
    %83 = math.exp %82 : vector<32x256xf32>
    %cst_55 = arith.constant dense<0.000000e+00> : vector<32xf32>
    %84 = vector.multi_reduction <add>, %83, %cst_55 [1] : vector<32x256xf32> to vector<32xf32>
    %85 = vector.shape_cast %84 : vector<32xf32> to vector<32x1xf32>
    %86 = math.log %85 : vector<32x1xf32>
    %87 = vector.broadcast %86 : vector<32x1xf32> to vector<32x256xf32>
    %88 = arith.subf %82, %87 : vector<32x256xf32>
    %c0_56 = arith.constant 0 : index
    %c0_57 = arith.constant 0 : index
    %c0_58 = arith.constant 0 : index
    %89 = vector.load %arg19[%c0_56, %c0_57, %c0_58] : memref<1x4x128xf32, #tpu.memory_space<vmem>>, vector<1x4x128xf32>
    %90 = vector.shape_cast %89 : vector<1x4x128xf32> to vector<4x128xf32>
    %91 = vector.shape_cast %72 : vector<4x128xf32> to vector<1x4x128xf32>
    tpu.vector_store %arg19[%c0_56, %c0_57, %c0_58], %91 {strides = array<i32>} : memref<1x4x128xf32, #tpu.memory_space<vmem>>, vector<1x4x128xf32>,
    %c0_59 = arith.constant 0 : index
    %c0_60 = arith.constant 0 : index
    %c0_61 = arith.constant 0 : index
    %92 = vector.load %arg17[%c0_59, %c0_60, %c0_61] : memref<1x4x128xf32, #tpu.memory_space<vmem>>, vector<1x4x128xf32>
    %93 = vector.shape_cast %92 : vector<1x4x128xf32> to vector<4x128xf32>
    %cst_62 = arith.constant 5.000000e-01 : f32
    %94 = vector.broadcast %cst_62 : f32 to vector<4x128xf32>
    %95 = arith.subf %93, %94 : vector<4x128xf32>
    %cst_63 = arith.constant 5.000000e-01 : f32
    %96 = vector.broadcast %cst_63 : f32 to vector<4x128xf32>
    %97 = arith.divf %95, %96 : vector<4x128xf32>
    %cst_64 = arith.constant 0.000000e+00 : f32
    %cst_65 = arith.constant 1.000000e+00 : f32
    %98 = vector.broadcast %cst_64 : f32 to vector<4x128xf32>
    %99 = arith.maximumf %98, %97 : vector<4x128xf32>
    %100 = vector.broadcast %cst_65 : f32 to vector<4x128xf32>
    %101 = arith.minimumf %100, %99 : vector<4x128xf32>
    %cst_66 = arith.constant 9.99999997E-7 : f32
    %cst_67 = arith.constant 0.999998986 : f32
    %102 = vector.broadcast %cst_66 : f32 to vector<4x128xf32>
    %103 = arith.maximumf %102, %72 : vector<4x128xf32>
    %104 = vector.broadcast %cst_67 : f32 to vector<4x128xf32>
    %105 = arith.minimumf %104, %103 : vector<4x128xf32>
    %106 = math.log %105 : vector<4x128xf32>
    %107 = arith.mulf %101, %106 : vector<4x128xf32>
    %cst_68 = arith.constant 1.000000e+00 : f32
    %108 = vector.broadcast %cst_68 : f32 to vector<4x128xf32>
    %109 = arith.subf %108, %101 : vector<4x128xf32>
    %cst_69 = arith.constant 1.000000e+00 : f32
    %110 = vector.broadcast %cst_69 : f32 to vector<4x128xf32>
    %111 = arith.subf %110, %105 : vector<4x128xf32>
    %112 = math.log %111 : vector<4x128xf32>
    %113 = arith.mulf %109, %112 : vector<4x128xf32>
    %114 = arith.addf %107, %113 : vector<4x128xf32>
    %cst_70 = arith.constant 0.000000e+00 : f32
    %115 = vector.broadcast %cst_70 : f32 to vector<4x128xf32>
    %116 = arith.subf %115, %114 : vector<4x128xf32>
    %c0_71 = arith.constant 0 : index
    %c0_72 = arith.constant 0 : index
    %c0_73 = arith.constant 0 : index
    %117 = vector.load %arg18[%c0_71, %c0_72, %c0_73] : memref<1x4x128xf32, #tpu.memory_space<vmem>>, vector<1x4x128xf32>
    %118 = vector.shape_cast %117 : vector<1x4x128xf32> to vector<4x128xf32>
    %119 = arith.mulf %116, %118 : vector<4x128xf32>
    %cst_74 = arith.constant dense<0.000000e+00> : vector<4xf32>
    %120 = vector.multi_reduction <add>, %119, %cst_74 [1] : vector<4x128xf32> to vector<4xf32>
    %121 = vector.shape_cast %120 : vector<4xf32> to vector<4x1xf32>
    %c0_75 = arith.constant 0 : index
    %c0_76 = arith.constant 0 : index
    %c0_77 = arith.constant 0 : index
    %122 = vector.load %arg20[%c0_75, %c0_76, %c0_77] : memref<1x4x1xf32, #tpu.memory_space<vmem>>, vector<1x4x1xf32>
    %123 = vector.shape_cast %122 : vector<1x4x1xf32> to vector<4x1xf32>
    %124 = vector.shape_cast %121 : vector<4x1xf32> to vector<1x4x1xf32>
    tpu.vector_store %arg20[%c0_75, %c0_76, %c0_77], %124 {strides = array<i32>} : memref<1x4x1xf32, #tpu.memory_space<vmem>>, vector<1x4x1xf32>,
    %c0_78 = arith.constant 0 : index
    %c0_79 = arith.constant 0 : index
    %c0_80 = arith.constant 0 : index
    %125 = vector.load %arg16[%c0_78, %c0_79, %c0_80] : memref<1x32x1xi32, #tpu.memory_space<vmem>>, vector<1x32x1xi32>
    %126 = vector.shape_cast %125 : vector<1x32x1xi32> to vector<32x1xi32>
    %127 = tpu.iota {dimensions = array<i32: 1>} : vector<32x256xi32>
    %128 = vector.broadcast %126 : vector<32x1xi32> to vector<32x256xi32>
    %129 = arith.cmpi eq, %127, %128 : vector<32x256xi32>
    %cst_81 = arith.constant 0.000000e+00 : f32
    %130 = vector.broadcast %cst_81 : f32 to vector<32x256xf32>
    %131 = arith.select %129, %88, %130 : vector<32x256xi1>, vector<32x256xf32>
    %cst_82 = arith.constant dense<0.000000e+00> : vector<32xf32>
    %132 = vector.multi_reduction <add>, %131, %cst_82 [1] : vector<32x256xf32> to vector<32xf32>
    %133 = vector.shape_cast %132 : vector<32xf32> to vector<32x1xf32>
    %c0_i32 = arith.constant 0 : i32
    %134 = vector.broadcast %c0_i32 : i32 to vector<32x256xi32>
    %135 = arith.cmpi eq, %127, %134 : vector<32x256xi32>
    %cst_83 = arith.constant 0.000000e+00 : f32
    %136 = vector.broadcast %cst_83 : f32 to vector<32x256xf32>
    %137 = arith.select %135, %88, %136 : vector<32x256xi1>, vector<32x256xf32>
    %cst_84 = arith.constant dense<0.000000e+00> : vector<32xf32>
    %138 = vector.multi_reduction <add>, %137, %cst_84 [1] : vector<32x256xf32> to vector<32xf32>
    %139 = vector.shape_cast %138 : vector<32xf32> to vector<32x1xf32>
    %cst_85 = arith.constant dense<0.000000e+00> : vector<32xf32>
    %140 = vector.multi_reduction <add>, %88, %cst_85 [1] : vector<32x256xf32> to vector<32xf32>
    %141 = vector.shape_cast %140 : vector<32xf32> to vector<32x1xf32>
    %cst_86 = arith.constant 0.899999976 : f32
    %142 = vector.broadcast %cst_86 : f32 to vector<32x1xf32>
    %143 = arith.mulf %142, %133 : vector<32x1xf32>
    %cst_87 = arith.constant -0.878816425 : f32
    %144 = vector.broadcast %cst_87 : f32 to vector<32x1xf32>
    %145 = arith.subf %144, %143 : vector<32x1xf32>
    %146 = arith.subf %141, %139 : vector<32x1xf32>
    %147 = arith.subf %146, %133 : vector<32x1xf32>
    %cst_88 = arith.constant 3.93700786E-4 : f32
    %148 = vector.broadcast %cst_88 : f32 to vector<32x1xf32>
    %149 = arith.mulf %148, %147 : vector<32x1xf32>
    %150 = arith.subf %145, %149 : vector<32x1xf32>
    %c0_i32_89 = arith.constant 0 : i32
    %151 = vector.broadcast %c0_i32_89 : i32 to vector<32x1xi32>
    %152 = arith.cmpi ne, %126, %151 : vector<32x1xi32>
    %153 = arith.extui %152 : vector<32x1xi1> to vector<32x1xi32>
    %154 = arith.sitofp %153 : vector<32x1xi32> to vector<32x1xf32>
    %155 = arith.mulf %150, %154 : vector<32x1xf32>
    %c0_90 = arith.constant 0 : index
    %c0_91 = arith.constant 0 : index
    %c0_92 = arith.constant 0 : index
    %156 = vector.load %arg21[%c0_90, %c0_91, %c0_92] : memref<1x32x1xf32, #tpu.memory_space<vmem>>, vector<1x32x1xf32>
    %157 = vector.shape_cast %156 : vector<1x32x1xf32> to vector<32x1xf32>
    %158 = vector.shape_cast %155 : vector<32x1xf32> to vector<1x32x1xf32>
    tpu.vector_store %arg21[%c0_90, %c0_91, %c0_92], %158 {strides = array<i32>} : memref<1x32x1xf32, #tpu.memory_space<vmem>>, vector<1x32x1xf32>,
    return
  }
  func.func @transform_0(%arg0: i32) -> (i32, i32, i32) {
    %c0_i32 = arith.constant 0 : i32
    %c0_i32_0 = arith.constant 0 : i32
    %c0_i32_1 = arith.constant 0 : i32
    return %arg0, %c0_i32, %c0_i32_0 : i32, i32, i32
  }
  func.func @transform_1(%arg0: i32) -> (i32, i32, i32) {
    %c0_i32 = arith.constant 0 : i32
    %c0_i32_0 = arith.constant 0 : i32
    %c0_i32_1 = arith.constant 0 : i32
    return %arg0, %c0_i32, %c0_i32_0 : i32, i32, i32
  }
  func.func @transform_2(%arg0: i32) -> (i32, i32) {
    %c0_i32 = arith.constant 0 : i32
    %c0_i32_0 = arith.constant 0 : i32
    %c0_i32_1 = arith.constant 0 : i32
    return %c0_i32, %c0_i32_0 : i32, i32
  }
  func.func @transform_3(%arg0: i32) -> (i32, i32, i32) {
    %c0_i32 = arith.constant 0 : i32
    %c0_i32_0 = arith.constant 0 : i32
    %c0_i32_1 = arith.constant 0 : i32
    return %arg0, %c0_i32, %c0_i32_0 : i32, i32, i32
  }
  func.func @transform_4(%arg0: i32) -> (i32, i32) {
    %c0_i32 = arith.constant 0 : i32
    %c0_i32_0 = arith.constant 0 : i32
    %c0_i32_1 = arith.constant 0 : i32
    return %c0_i32, %c0_i32_0 : i32, i32
  }
  func.func @transform_5(%arg0: i32) -> (i32, i32, i32) {
    %c0_i32 = arith.constant 0 : i32
    %c0_i32_0 = arith.constant 0 : i32
    %c0_i32_1 = arith.constant 0 : i32
    return %arg0, %c0_i32, %c0_i32_0 : i32, i32, i32
  }
  func.func @transform_6(%arg0: i32) -> (i32, i32) {
    %c0_i32 = arith.constant 0 : i32
    %c0_i32_0 = arith.constant 0 : i32
    %c0_i32_1 = arith.constant 0 : i32
    return %c0_i32, %c0_i32_0 : i32, i32
  }
  func.func @transform_7(%arg0: i32) -> (i32, i32) {
    %c0_i32 = arith.constant 0 : i32
    %c0_i32_0 = arith.constant 0 : i32
    %c0_i32_1 = arith.constant 0 : i32
    return %c0_i32, %c0_i32_0 : i32, i32
  }
  func.func @transform_8(%arg0: i32) -> (i32, i32) {
    %c0_i32 = arith.constant 0 : i32
    %c0_i32_0 = arith.constant 0 : i32
    %c0_i32_1 = arith.constant 0 : i32
    return %c0_i32, %c0_i32_0 : i32, i32
  }
  func.func @transform_9(%arg0: i32) -> (i32, i32) {
    %c0_i32 = arith.constant 0 : i32
    %c0_i32_0 = arith.constant 0 : i32
    %c0_i32_1 = arith.constant 0 : i32
    return %c0_i32, %c0_i32_0 : i32, i32
  }
  func.func @transform_10(%arg0: i32) -> (i32, i32) {
    %c0_i32 = arith.constant 0 : i32
    %c0_i32_0 = arith.constant 0 : i32
    %c0_i32_1 = arith.constant 0 : i32
    return %c0_i32, %c0_i32_0 : i32, i32
  }
  func.func @transform_11(%arg0: i32) -> (i32, i32) {
    %c0_i32 = arith.constant 0 : i32
    %c0_i32_0 = arith.constant 0 : i32
    %c0_i32_1 = arith.constant 0 : i32
    return %c0_i32, %c0_i32_0 : i32, i32
  }
  func.func @transform_12(%arg0: i32) -> (i32, i32) {
    %c0_i32 = arith.constant 0 : i32
    %c0_i32_0 = arith.constant 0 : i32
    %c0_i32_1 = arith.constant 0 : i32
    return %c0_i32, %c0_i32_0 : i32, i32
  }
  func.func @transform_13(%arg0: i32) -> (i32, i32) {
    %c0_i32 = arith.constant 0 : i32
    %c0_i32_0 = arith.constant 0 : i32
    %c0_i32_1 = arith.constant 0 : i32
    return %c0_i32, %c0_i32_0 : i32, i32
  }
  func.func @transform_14(%arg0: i32) -> (i32, i32) {
    %c0_i32 = arith.constant 0 : i32
    %c0_i32_0 = arith.constant 0 : i32
    %c0_i32_1 = arith.constant 0 : i32
    return %c0_i32, %c0_i32_0 : i32, i32
  }
  func.func @transform_15(%arg0: i32) -> (i32, i32, i32) {
    %c0_i32 = arith.constant 0 : i32
    %c0_i32_0 = arith.constant 0 : i32
    %c0_i32_1 = arith.constant 0 : i32
    return %arg0, %c0_i32, %c0_i32_0 : i32, i32, i32
  }
  func.func @transform_16(%arg0: i32) -> (i32, i32, i32) {
    %c0_i32 = arith.constant 0 : i32
    %c0_i32_0 = arith.constant 0 : i32
    %c0_i32_1 = arith.constant 0 : i32
    return %arg0, %c0_i32, %c0_i32_0 : i32, i32, i32
  }
  func.func @transform_17(%arg0: i32) -> (i32, i32, i32) {
    %c0_i32 = arith.constant 0 : i32
    %c0_i32_0 = arith.constant 0 : i32
    %c0_i32_1 = arith.constant 0 : i32
    return %arg0, %c0_i32, %c0_i32_0 : i32, i32, i32
  }
  func.func @transform_18(%arg0: i32) -> (i32, i32, i32) {
    %c0_i32 = arith.constant 0 : i32
    %c0_i32_0 = arith.constant 0 : i32
    %c0_i32_1 = arith.constant 0 : i32
    return %arg0, %c0_i32, %c0_i32_0 : i32, i32, i32
  }
  func.func @transform_19(%arg0: i32) -> (i32, i32, i32) {
    %c0_i32 = arith.constant 0 : i32
    %c0_i32_0 = arith.constant 0 : i32
    %c0_i32_1 = arith.constant 0 : i32
    return %arg0, %c0_i32, %c0_i32_0 : i32, i32, i32
  }
  func.func @transform_20(%arg0: i32) -> (i32, i32, i32) {
    %c0_i32 = arith.constant 0 : i32
    %c0_i32_0 = arith.constant 0 : i32
    %c0_i32_1 = arith.constant 0 : i32
    return %arg0, %c0_i32, %c0_i32_0 : i32, i32, i32
  }
}

</mosaic_0001>

<llo_original>
// kernel: tpu_custom_call.1
$region0: #{tpu_custom_call.1}
  #allocation0 [shape = 'u32[]', space=smem, size = 0x4, offset = 0x4, fixed_abs, tag = 'smem constant byte address 0x4 - core index']
  #allocation1 [shape = 'u32[144,128]{1,0:T(1,128)}', space=vmem, size = 0x12000, scoped, tag = 'internal scratch']
  %s0 = inlined_call_operand.hbm [shape: bf16[1,32,128], index: 0, kind: input, shape index: {}]
  %s1 = inlined_call_operand.vmem [shape: f32[1,32,32], index: 1, kind: input, shape index: {}]
  %s2 = inlined_call_operand.hbm [shape: f32[32,128], index: 2, kind: input, shape index: {}]
  %s3 = inlined_call_operand.vmem [shape: f32[1,4,32], index: 3, kind: input, shape index: {}]
  %s4 = inlined_call_operand.vmem [shape: f32[16,4], index: 4, kind: input, shape index: {}]
  %s5 = inlined_call_operand.hbm [shape: bf16[1,16,192], index: 5, kind: input, shape index: {}]
  %s6 = inlined_call_operand.vmem [shape: bf16[128,16], index: 6, kind: input, shape index: {}]
  %s7 = inlined_call_operand.hbm [shape: bf16[128,384], index: 7, kind: input, shape index: {}]
  %s8 = inlined_call_operand.hbm [shape: bf16[128,128], index: 8, kind: input, shape index: {}]
  %s9 = inlined_call_operand.hbm [shape: bf16[192,128], index: 9, kind: input, shape index: {}]
  %s10 = inlined_call_operand.hbm [shape: bf16[128,384], index: 10, kind: input, shape index: {}]
  %s11 = inlined_call_operand.hbm [shape: bf16[128,128], index: 11, kind: input, shape index: {}]
  %s12 = inlined_call_operand.hbm [shape: bf16[128,128], index: 12, kind: input, shape index: {}]
  %s13 = inlined_call_operand.vmem [shape: bf16[128,256], index: 13, kind: input, shape index: {}]
  %s14 = inlined_call_operand.vmem [shape: f32[1,256], index: 14, kind: input, shape index: {}]
  %s15 = inlined_call_operand.vmem [shape: s32[1,32,1], index: 15, kind: input, shape index: {}]
  %s16 = inlined_call_operand.vmem [shape: f32[1,4,128], index: 16, kind: input, shape index: {}]
  %s17 = inlined_call_operand.vmem [shape: f32[1,4,128], index: 17, kind: input, shape index: {}]
  %s18 = inlined_call_operand.hbm [shape: f32[1,4,128], index: 18, kind: output, shape index: {0}]
  %s19 = inlined_call_operand.vmem [shape: f32[1,4,1], index: 19, kind: output, shape index: {1}]
  %s20 = inlined_call_operand.vmem [shape: f32[1,32,1], index: 20, kind: output, shape index: {2}]
  %21 = xla_tuple %s18, %s19, %s20
  %s22 = sld [smem:[#allocation0]]
  $region134: #{tpu_custom_call.1} parent=0
    _
  %s24 = ssub.s32 1, %s22
  %s25 = scalar_select 0, %s24, %s22
  $region1: #{tpu_custom_call.1} parent=0
    #allocation2 [shape = 'u8[8192]{0}', space=vmem, size = 0x2000, scoped, tag = 'input window, operand 0, single buffered']
    #allocation3 [shape = 's32[1]{0}', space=sflag, size = 0x4, scoped, tag = 'scoped memory for tpu_custom_call.1']
    #allocation4 [shape = 's32[1]{0}', space=sflag, size = 0x4, scoped, tag = 'scoped memory for tpu_custom_call.1']
    #allocation5 [shape = 'u8[16384]{0}', space=vmem, size = 0x4000, scoped, tag = 'input window, operand 2, single buffered']
    #allocation6 [shape = 's32[1]{0}', space=sflag, size = 0x4, scoped, tag = 'scoped memory for tpu_custom_call.1']
    #allocation7 [shape = 'u8[8192]{0}', space=vmem, size = 0x2000, scoped, tag = 'input window, operand 5, single buffered']
    #allocation8 [shape = 'u8[98304]{0}', space=vmem, size = 0x18000, scoped, tag = 'input window, operand 7, single buffered']
    #allocation9 [shape = 's32[1]{0}', space=sflag, size = 0x4, scoped, tag = 'scoped memory for tpu_custom_call.1']
    #allocation10 [shape = 'u8[32768]{0}', space=vmem, size = 0x8000, scoped, tag = 'input window, operand 8, single buffered']
    #allocation11 [shape = 'u8[49152]{0}', space=vmem, size = 0xc000, scoped, tag = 'input window, operand 9, single buffered']
    #allocation12 [shape = 's32[1]{0}', space=sflag, size = 0x4, scoped, tag = 'scoped memory for tpu_custom_call.1']
    #allocation13 [shape = 'u8[98304]{0}', space=vmem, size = 0x18000, scoped, tag = 'input window, operand 10, single buffered']
    #allocation14 [shape = 'u8[32768]{0}', space=vmem, size = 0x8000, scoped, tag = 'input window, operand 11, single buffered']
    #allocation15 [shape = 's32[1]{0}', space=sflag, size = 0x4, scoped, tag = 'scoped memory for tpu_custom_call.1']
    #allocation16 [shape = 'u8[32768]{0}', space=vmem, size = 0x8000, scoped, tag = 'input window, operand 12, single buffered']
    #allocation17 [shape = 'u8[2048]{0}', space=vmem, size = 0x800, scoped, tag = 'output window, operand 0, single buffered']
    %26 = vsyncpa [#allocation3], 0
    %27 = vsyncpa [#allocation6], 0
    %28 = vsyncpa [#allocation9], 0
    %29 = vsyncpa [#allocation12], 0
    %30 = vsyncpa [#allocation15], 0
    %31 = vsyncpa [#allocation4], 0
    // Predicated region
    $region2: #{tpu_custom_call.1} parent=1 // pred_check
      _
    $region3: #{tpu_custom_call.1} parent=1 // pred_check_branch
      %33 = sbr.rel (0) target = $region5
    $region4: #{tpu_custom_call.1} parent=1 // pred_region
      %s35 = ssub.s32 256, 256
      %36 = vsyncadd [#allocation3], %s35
      %s37 = sshll.u32 [#allocation2], 4
      %s38 = int_to_ptr.vmem [resolvable:$true] %s37
      %43 = dma.hbm_to_vmem [thread:$0]  %s0, 256, %s38, [#allocation3], 64, 64, 4
    $region5: #{tpu_custom_call.1} parent=1 // pred_fallthru
      _
    // Predicated region
    $region6: #{tpu_custom_call.1} parent=1 // pred_check
      _
    $region7: #{tpu_custom_call.1} parent=1 // pred_check_branch
      %45 = sbr.rel (0) target = $region9
    $region8: #{tpu_custom_call.1} parent=1 // pred_region
      _
    $region9: #{tpu_custom_call.1} parent=1 // pred_fallthru
      _
    // Predicated region
    $region10: #{tpu_custom_call.1} parent=1 // pred_check
      _
    $region11: #{tpu_custom_call.1} parent=1 // pred_check_branch
      %47 = sbr.rel (0) target = $region13
    $region12: #{tpu_custom_call.1} parent=1 // pred_region
      %s49 = ssub.s32 512, 512
      %50 = vsyncadd [#allocation6], %s49
      %s51 = sshll.u32 [#allocation5], 4
      %s52 = int_to_ptr.vmem [resolvable:$true] %s51
      %57 = dma.hbm_to_vmem [thread:$0]  %s2, 512, %s52, [#allocation6], 128, 128, 8
    $region13: #{tpu_custom_call.1} parent=1 // pred_fallthru
      _
    // Predicated region
    $region14: #{tpu_custom_call.1} parent=1 // pred_check
      _
    $region15: #{tpu_custom_call.1} parent=1 // pred_check_branch
      %59 = sbr.rel (0) target = $region17
    $region16: #{tpu_custom_call.1} parent=1 // pred_region
      _
    $region17: #{tpu_custom_call.1} parent=1 // pred_fallthru
      _
    // Predicated region
    $region18: #{tpu_custom_call.1} parent=1 // pred_check
      _
    $region19: #{tpu_custom_call.1} parent=1 // pred_check_branch
      %61 = sbr.rel (0) target = $region21
    $region20: #{tpu_custom_call.1} parent=1 // pred_region
      _
    $region21: #{tpu_custom_call.1} parent=1 // pred_fallthru
      _
    // Predicated region
    $region22: #{tpu_custom_call.1} parent=1 // pred_check
      _
    $region23: #{tpu_custom_call.1} parent=1 // pred_check_branch
      %63 = sbr.rel (0) target = $region25
    $region24: #{tpu_custom_call.1} parent=1 // pred_region
      %s65 = ssub.s32 256, 256
      %66 = vsyncadd [#allocation6], %s65
      %s67 = sshll.u32 [#allocation7], 4
      %s68 = int_to_ptr.vmem [resolvable:$true] %s67
      %73 = dma.hbm_to_vmem [thread:$0]  %s5, 256, %s68, [#allocation6], 128, 128, 8
    $region25: #{tpu_custom_call.1} parent=1 // pred_fallthru
      _
    // Predicated region
    $region26: #{tpu_custom_call.1} parent=1 // pred_check
      _
    $region27: #{tpu_custom_call.1} parent=1 // pred_check_branch
      %75 = sbr.rel (0) target = $region29
    $region28: #{tpu_custom_call.1} parent=1 // pred_region
      _
    $region29: #{tpu_custom_call.1} parent=1 // pred_fallthru
      _
    // Predicated region
    $region30: #{tpu_custom_call.1} parent=1 // pred_check
      _
    $region31: #{tpu_custom_call.1} parent=1 // pred_check_branch
      %77 = sbr.rel (0) target = $region33
    $region32: #{tpu_custom_call.1} parent=1 // pred_region
      %s79 = ssub.s32 3072, 3072
      %80 = vsyncadd [#allocation9], %s79
      %s81 = sshll.u32 [#allocation8], 4
      %s82 = int_to_ptr.vmem [resolvable:$true] %s81
      %87 = dma.hbm_to_vmem [thread:$0]  %s7, 3072, %s82, [#allocation9], 192, 192, 12
    $region33: #{tpu_custom_call.1} parent=1 // pred_fallthru
      _
    // Predicated region
    $region34: #{tpu_custom_call.1} parent=1 // pred_check
      _
    $region35: #{tpu_custom_call.1} parent=1 // pred_check_branch
      %89 = sbr.rel (0) target = $region37
    $region36: #{tpu_custom_call.1} parent=1 // pred_region
      %s91 = ssub.s32 1024, 1024
      %92 = vsyncadd [#allocation9], %s91
      %s93 = sshll.u32 [#allocation10], 4
      %s94 = int_to_ptr.vmem [resolvable:$true] %s93
      %99 = dma.hbm_to_vmem [thread:$0]  %s8, 1024, %s94, [#allocation9], 64, 64, 4
    $region37: #{tpu_custom_call.1} parent=1 // pred_fallthru
      _
    // Predicated region
    $region38: #{tpu_custom_call.1} parent=1 // pred_check
      _
    $region39: #{tpu_custom_call.1} parent=1 // pred_check_branch
      %101 = sbr.rel (0) target = $region41
    $region40: #{tpu_custom_call.1} parent=1 // pred_region
      %s103 = ssub.s32 1536, 1536
      %104 = vsyncadd [#allocation12], %s103
      %s105 = sshll.u32 [#allocation11], 4
      %s106 = int_to_ptr.vmem [resolvable:$true] %s105
      %111 = dma.hbm_to_vmem [thread:$0]  %s9, 1536, %s106, [#allocation12], 64, 64, 4
    $region41: #{tpu_custom_call.1} parent=1 // pred_fallthru
      _
    // Predicated region
    $region42: #{tpu_custom_call.1} parent=1 // pred_check
      _
    $region43: #{tpu_custom_call.1} parent=1 // pred_check_branch
      %113 = sbr.rel (0) target = $region45
    $region44: #{tpu_custom_call.1} parent=1 // pred_region
      %s115 = ssub.s32 3072, 3072
      %116 = vsyncadd [#allocation12], %s115
      %s117 = sshll.u32 [#allocation13], 4
      %s118 = int_to_ptr.vmem [resolvable:$true] %s117
      %123 = dma.hbm_to_vmem [thread:$0]  %s10, 3072, %s118, [#allocation12], 192, 192, 12
    $region45: #{tpu_custom_call.1} parent=1 // pred_fallthru
      _
    // Predicated region
    $region46: #{tpu_custom_call.1} parent=1 // pred_check
      _
    $region47: #{tpu_custom_call.1} parent=1 // pred_check_branch
      %125 = sbr.rel (0) target = $region49
    $region48: #{tpu_custom_call.1} parent=1 // pred_region
      %s127 = ssub.s32 1024, 1024
      %128 = vsyncadd [#allocation15], %s127
      %s129 = sshll.u32 [#allocation14], 4
      %s130 = int_to_ptr.vmem [resolvable:$true] %s129
      %135 = dma.hbm_to_vmem [thread:$0]  %s11, 1024, %s130, [#allocation15], 64, 64, 4
    $region49: #{tpu_custom_call.1} parent=1 // pred_fallthru
      _
    // Predicated region
    $region50: #{tpu_custom_call.1} parent=1 // pred_check
      _
    $region51: #{tpu_custom_call.1} parent=1 // pred_check_branch
      %137 = sbr.rel (0) target = $region53
    $region52: #{tpu_custom_call.1} parent=1 // pred_region
      %s139 = ssub.s32 1024, 1024
      %140 = vsyncadd [#allocation15], %s139
      %s141 = sshll.u32 [#allocation16], 4
      %s142 = int_to_ptr.vmem [resolvable:$true] %s141
      %147 = dma.hbm_to_vmem [thread:$0]  %s12, 1024, %s142, [#allocation15], 64, 64, 4
    $region53: #{tpu_custom_call.1} parent=1 // pred_fallthru
      _
    // Predicated region
    $region54: #{tpu_custom_call.1} parent=1 // pred_check
      _
    $region55: #{tpu_custom_call.1} parent=1 // pred_check_branch
      %149 = sbr.rel (0) target = $region57
    $region56: #{tpu_custom_call.1} parent=1 // pred_region
      _
    $region57: #{tpu_custom_call.1} parent=1 // pred_fallthru
      _
    // Predicated region
    $region58: #{tpu_custom_call.1} parent=1 // pred_check
      _
    $region59: #{tpu_custom_call.1} parent=1 // pred_check_branch
      %151 = sbr.rel (0) target = $region61
    $region60: #{tpu_custom_call.1} parent=1 // pred_region
      _
    $region61: #{tpu_custom_call.1} parent=1 // pred_fallthru
      _
    // Predicated region
    $region62: #{tpu_custom_call.1} parent=1 // pred_check
      _
    $region63: #{tpu_custom_call.1} parent=1 // pred_check_branch
      %153 = sbr.rel (0) target = $region65
    $region64: #{tpu_custom_call.1} parent=1 // pred_region
      _
    $region65: #{tpu_custom_call.1} parent=1 // pred_fallthru
      _
    // Predicated region
    $region66: #{tpu_custom_call.1} parent=1 // pred_check
      _
    $region67: #{tpu_custom_call.1} parent=1 // pred_check_branch
      %155 = sbr.rel (0) target = $region69
    $region68: #{tpu_custom_call.1} parent=1 // pred_region
      _
    $region69: #{tpu_custom_call.1} parent=1 // pred_fallthru
      _
    // Predicated region
    $region70: #{tpu_custom_call.1} parent=1 // pred_check
      _
    $region71: #{tpu_custom_call.1} parent=1 // pred_check_branch
      %157 = sbr.rel (0) target = $region73
    $region72: #{tpu_custom_call.1} parent=1 // pred_region
      _
    $region73: #{tpu_custom_call.1} parent=1 // pred_fallthru
      _
    // Predicated region
    $region74: #{tpu_custom_call.1} parent=1 // pred_check
      _
    $region75: #{tpu_custom_call.1} parent=1 // pred_check_branch
      %159 = sbr.rel (0) target = $region77
    $region76: #{tpu_custom_call.1} parent=1 // pred_region
      %160 = dma.done [#allocation3], 256
    $region77: #{tpu_custom_call.1} parent=1 // pred_fallthru
      _
    // Predicated region
    $region78: #{tpu_custom_call.1} parent=1 // pred_check
      _
    $region79: #{tpu_custom_call.1} parent=1 // pred_check_branch
      %162 = sbr.rel (0) target = $region81
    $region80: #{tpu_custom_call.1} parent=1 // pred_region
      %163 = dma.done [#allocation6], 512
    $region81: #{tpu_custom_call.1} parent=1 // pred_fallthru
      _
    // Predicated region
    $region82: #{tpu_custom_call.1} parent=1 // pred_check
      _
    $region83: #{tpu_custom_call.1} parent=1 // pred_check_branch
      %165 = sbr.rel (0) target = $region85
    $region84: #{tpu_custom_call.1} parent=1 // pred_region
      %166 = dma.done [#allocation6], 256
    $region85: #{tpu_custom_call.1} parent=1 // pred_fallthru
      _
    // Predicated region
    $region86: #{tpu_custom_call.1} parent=1 // pred_check
      _
    $region87: #{tpu_custom_call.1} parent=1 // pred_check_branch
      %168 = sbr.rel (0) target = $region89
    $region88: #{tpu_custom_call.1} parent=1 // pred_region
      %169 = dma.done [#allocation9], 3072
    $region89: #{tpu_custom_call.1} parent=1 // pred_fallthru
      _
    // Predicated region
    $region90: #{tpu_custom_call.1} parent=1 // pred_check
      _
    $region91: #{tpu_custom_call.1} parent=1 // pred_check_branch
      %171 = sbr.rel (0) target = $region93
    $region92: #{tpu_custom_call.1} parent=1 // pred_region
      %172 = dma.done [#allocation9], 1024
    $region93: #{tpu_custom_call.1} parent=1 // pred_fallthru
      _
    // Predicated region
    $region94: #{tpu_custom_call.1} parent=1 // pred_check
      _
    $region95: #{tpu_custom_call.1} parent=1 // pred_check_branch
      %174 = sbr.rel (0) target = $region97
    $region96: #{tpu_custom_call.1} parent=1 // pred_region
      %175 = dma.done [#allocation12], 1536
    $region97: #{tpu_custom_call.1} parent=1 // pred_fallthru
      _
    // Predicated region
    $region98: #{tpu_custom_call.1} parent=1 // pred_check
      _
    $region99: #{tpu_custom_call.1} parent=1 // pred_check_branch
      %177 = sbr.rel (0) target = $region101
    $region100: #{tpu_custom_call.1} parent=1 // pred_region
      %178 = dma.done [#allocation12], 3072
    $region101: #{tpu_custom_call.1} parent=1 // pred_fallthru
      _
    // Predicated region
    $region102: #{tpu_custom_call.1} parent=1 // pred_check
      _
    $region103: #{tpu_custom_call.1} parent=1 // pred_check_branch
      %180 = sbr.rel (0) target = $region105
    $region104: #{tpu_custom_call.1} parent=1 // pred_region
      %181 = dma.done [#allocation15], 1024
    $region105: #{tpu_custom_call.1} parent=1 // pred_fallthru
      _
    // Predicated region
    $region106: #{tpu_custom_call.1} parent=1 // pred_check
      _
    $region107: #{tpu_custom_call.1} parent=1 // pred_check_branch
      %183 = sbr.rel (0) target = $region109
    $region108: #{tpu_custom_call.1} parent=1 // pred_region
      %184 = dma.done [#allocation15], 1024
    $region109: #{tpu_custom_call.1} parent=1 // pred_fallthru
      _
    %v186 = vld [vmem:[#allocation2] sm:$0xf]
    %v187 = vld [vmem:[#allocation2 + $0x4] sm:$0xf]
    %v188 = vld [vmem:[#allocation2 + $0x8] sm:$0xf]
    %v189 = vld [vmem:[#allocation2 + $0xc] sm:$0xf]
    %v190 = vld [vmem:[#allocation8] sm:$0xff]
    %v191 = vld [vmem:[#allocation8 + $0x8] sm:$0xf]
    %v192 = vld [vmem:[#allocation8 + $0xc] sm:$0xff]
    %v193 = vld [vmem:[#allocation8 + $0x14] sm:$0xf]
    %v194 = vld [vmem:[#allocation8 + $0x18] sm:$0xff]
    %v195 = vld [vmem:[#allocation8 + $0x20] sm:$0xf]
    %v196 = vld [vmem:[#allocation8 + $0x24] sm:$0xff]
    %v197 = vld [vmem:[#allocation8 + $0x2c] sm:$0xf]
    %v198 = vld [vmem:[#allocation8 + $0x30] sm:$0xff]
    %v199 = vld [vmem:[#allocation8 + $0x38] sm:$0xf]
    %v200 = vld [vmem:[#allocation8 + $0x3c] sm:$0xff]
    %v201 = vld [vmem:[#allocation8 + $0x44] sm:$0xf]
    %v202 = vld [vmem:[#allocation8 + $0x48] sm:$0xff]
    %v203 = vld [vmem:[#allocation8 + $0x50] sm:$0xf]
    %v204 = vld [vmem:[#allocation8 + $0x54] sm:$0xff]
    %v205 = vld [vmem:[#allocation8 + $0x5c] sm:$0xf]
    %v206 = vld [vmem:[#allocation8 + $0x60] sm:$0xff]
    %v207 = vld [vmem:[#allocation8 + $0x68] sm:$0xf]
    %v208 = vld [vmem:[#allocation8 + $0x6c] sm:$0xff]
    %v209 = vld [vmem:[#allocation8 + $0x74] sm:$0xf]
    %v210 = vld [vmem:[#allocation8 + $0x78] sm:$0xff]
    %v211 = vld [vmem:[#allocation8 + $0x80] sm:$0xf]
    %v212 = vld [vmem:[#allocation8 + $0x84] sm:$0xff]
    %v213 = vld [vmem:[#allocation8 + $0x8c] sm:$0xf]
    %v214 = vld [vmem:[#allocation8 + $0x90] sm:$0xff]
    %v215 = vld [vmem:[#allocation8 + $0x98] sm:$0xf]
    %v216 = vld [vmem:[#allocation8 + $0x9c] sm:$0xff]
    %v217 = vld [vmem:[#allocation8 + $0xa4] sm:$0xf]
    %v218 = vld [vmem:[#allocation8 + $0xa8] sm:$0xff]
    %v219 = vld [vmem:[#allocation8 + $0xb0] sm:$0xf]
    %v220 = vld [vmem:[#allocation8 + $0xb4] sm:$0xff]
    %v221 = vld [vmem:[#allocation8 + $0xbc] sm:$0xf]
    %v226 = vunpack.c.l.b16 %v186
    %v227 = vunpack.c.l.b16 %v187
    %v228 = vunpack.c.l.b16 %v188
    %v229 = vunpack.c.l.b16 %v189
    %v230 = vpack.c.b16 %v227, %v226
    %v231 = vpack.c.b16 %v229, %v228
    %v266 = vunpack.c.l.b16 %v190
    %v267 = vunpack.c.h.b16 %v190
    %v268 = vunpack.c.l.b16 %v191
    %v269 = vunpack.c.l.b16 %v192
    %v270 = vunpack.c.h.b16 %v192
    %v271 = vunpack.c.l.b16 %v193
    %v272 = vunpack.c.l.b16 %v194
    %v273 = vunpack.c.h.b16 %v194
    %v274 = vunpack.c.l.b16 %v195
    %v275 = vunpack.c.l.b16 %v196
    %v276 = vunpack.c.h.b16 %v196
    %v277 = vunpack.c.l.b16 %v197
    %v278 = vunpack.c.l.b16 %v198
    %v279 = vunpack.c.h.b16 %v198
    %v280 = vunpack.c.l.b16 %v199
    %v281 = vunpack.c.l.b16 %v200
    %v282 = vunpack.c.h.b16 %v200
    %v283 = vunpack.c.l.b16 %v201
    %v284 = vunpack.c.l.b16 %v202
    %v285 = vunpack.c.h.b16 %v202
    %v286 = vunpack.c.l.b16 %v203
    %v287 = vunpack.c.l.b16 %v204
    %v288 = vunpack.c.h.b16 %v204
    %v289 = vunpack.c.l.b16 %v205
    %v290 = vunpack.c.l.b16 %v206
    %v291 = vunpack.c.h.b16 %v206
    %v292 = vunpack.c.l.b16 %v207
    %v293 = vunpack.c.l.b16 %v208
    %v294 = vunpack.c.h.b16 %v208
    %v295 = vunpack.c.l.b16 %v209
    %v296 = vunpack.c.l.b16 %v210
    %v297 = vunpack.c.h.b16 %v210
    %v298 = vunpack.c.l.b16 %v211
    %v299 = vunpack.c.l.b16 %v212
    %v300 = vunpack.c.h.b16 %v212
    %v301 = vunpack.c.l.b16 %v213
    %v302 = vunpack.c.l.b16 %v214
    %v303 = vunpack.c.h.b16 %v214
    %v304 = vunpack.c.l.b16 %v215
    %v305 = vunpack.c.l.b16 %v216
    %v306 = vunpack.c.h.b16 %v216
    %v307 = vunpack.c.l.b16 %v217
    %v308 = vunpack.c.l.b16 %v218
    %v309 = vunpack.c.h.b16 %v218
    %v310 = vunpack.c.l.b16 %v219
    %v311 = vunpack.c.l.b16 %v220
    %v312 = vunpack.c.h.b16 %v220
    %v313 = vunpack.c.l.b16 %v221
    %v314 = vpack.c.b16 %v269, %v266
    %v315 = vpack.c.b16 %v270, %v267
    %v316 = vpack.c.b16 %v271, %v268
    %v317 = vpack.c.b16 %v275, %v272
    %v318 = vpack.c.b16 %v276, %v273
    %v319 = vpack.c.b16 %v277, %v274
    %v320 = vpack.c.b16 %v281, %v278
    %v321 = vpack.c.b16 %v282, %v279
    %v322 = vpack.c.b16 %v283, %v280
    %v323 = vpack.c.b16 %v287, %v284
    %v324 = vpack.c.b16 %v288, %v285
    %v325 = vpack.c.b16 %v289, %v286
    %v326 = vpack.c.b16 %v293, %v290
    %v327 = vpack.c.b16 %v294, %v291
    %v328 = vpack.c.b16 %v295, %v292
    %v329 = vpack.c.b16 %v299, %v296
    %v330 = vpack.c.b16 %v300, %v297
    %v331 = vpack.c.b16 %v301, %v298
    %v332 = vpack.c.b16 %v305, %v302
    %v333 = vpack.c.b16 %v306, %v303
    %v334 = vpack.c.b16 %v307, %v304
    %v335 = vpack.c.b16 %v311, %v308
    %v336 = vpack.c.b16 %v312, %v309
    %v337 = vpack.c.b16 %v313, %v310
    %362 = vmatprep.subr.bf16.mxu0 %v315
    %363 = vmatpush1.bf16.msra.mxu0 %v314
    %364 = vmatprep.subr.bf16.mxu0 %v318
    %365 = vmatpush1.bf16.msra.mxu0 %v317
    %366 = vmatprep.subr.bf16.mxu0 %v321
    %367 = vmatpush1.bf16.msra.mxu0 %v320
    %368 = vmatprep.subr.bf16.mxu0 %v324
    %369 = vmatpush1.bf16.msra.mxu0 %v323
    %370 = vmatprep.subr.bf16.mxu0 %v327
    %371 = vmatpush1.bf16.msra.mxu0 %v326
    %372 = vmatprep.subr.bf16.mxu0 %v330
    %373 = vmatpush1.bf16.msra.mxu0 %v329
    %374 = vmatprep.subr.bf16.mxu0 %v333
    %375 = vmatpush1.bf16.msra.mxu0 %v332
    %376 = vmatprep.subr.bf16.mxu0 %v336
    %377 = vmatpush1.bf16.msra.mxu0 %v335
    %378 = vmatprep.subr.bf16.mxu0 0
    %379 = vmatpush1.bf16.msra.mxu0 0
    %380 = vmatprep.subr.bf16.mxu0 0
    %381 = vmatpush1.bf16.msra.mxu0 0
    %382 = vmatprep.subr.bf16.mxu0 0
    %383 = vmatpush1.bf16.msra.mxu0 0
    %384 = vmatprep.subr.bf16.mxu0 0
    %385 = vmatpush1.bf16.msra.mxu0 0
    %386 = vmatprep.subr.bf16.mxu0 0
    %387 = vmatpush1.bf16.msra.mxu0 0
    %388 = vmatprep.subr.bf16.mxu0 0
    %389 = vmatpush1.bf16.msra.mxu0 0
    %390 = vmatprep.subr.bf16.mxu0 0
    %391 = vmatpush1.bf16.msra.mxu0 0
    %392 = vmatprep.subr.bf16.mxu0 0
    %393 = vmatpush1.bf16.msra.mxu0 0
    %394 = vmatprep.mubr.bf16.mxu0 0
    %395 = vmatmul.mubr.bf16.gmra.mrb[0].mxu0 %v230
    %v396 = vpop.f32.mrb[0].mxu0
    %v397 = vadd.f32 0.0, %v396
    %v398 = vpop.f32.mrb[0].mxu0
    %v399 = vadd.f32 0.0, %v398
    %v400 = vpop.f32.mrb[0].mxu0
    %v401 = vadd.f32 0.0, %v400
    %v402 = vpop.f32.mrb[0].mxu0
    %v403 = vadd.f32 0.0, %v402
    %404 = vmatprep.mubr.bf16.mxu0 0
    %405 = vmatmul.mubr.bf16.gmra.mrb[0].mxu0 %v231
    %v406 = vpop.f32.mrb[0].mxu0
    %v407 = vadd.f32 0.0, %v406
    %v408 = vpop.f32.mrb[0].mxu0
    %v409 = vadd.f32 0.0, %v408
    %v410 = vpop.f32.mrb[0].mxu0
    %v411 = vadd.f32 0.0, %v410
    %v412 = vpop.f32.mrb[0].mxu0
    %v413 = vadd.f32 0.0, %v412
    %414 = vdwg.mxu0
    %415 = vmatprep.subr.bf16.mxu0 0
    %416 = vmatpush1.bf16.msra.mxu0 %v316
    %417 = vmatprep.subr.bf16.mxu0 0
    %418 = vmatpush1.bf16.msra.mxu0 %v319
    %419 = vmatprep.subr.bf16.mxu0 0
    %420 = vmatpush1.bf16.msra.mxu0 %v322
    %421 = vmatprep.subr.bf16.mxu0 0
    %422 = vmatpush1.bf16.msra.mxu0 %v325
    %423 = vmatprep.subr.bf16.mxu0 0
    %424 = vmatpush1.bf16.msra.mxu0 %v328
    %425 = vmatprep.subr.bf16.mxu0 0
    %426 = vmatpush1.bf16.msra.mxu0 %v331
    %427 = vmatprep.subr.bf16.mxu0 0
    %428 = vmatpush1.bf16.msra.mxu0 %v334
    %429 = vmatprep.subr.bf16.mxu0 0
    %430 = vmatpush1.bf16.msra.mxu0 %v337
    %431 = vmatprep.subr.bf16.mxu0 0
    %432 = vmatpush1.bf16.msra.mxu0 0
    %433 = vmatprep.subr.bf16.mxu0 0
    %434 = vmatpush1.bf16.msra.mxu0 0
    %435 = vmatprep.subr.bf16.mxu0 0
    %436 = vmatpush1.bf16.msra.mxu0 0
    %437 = vmatprep.subr.bf16.mxu0 0
    %438 = vmatpush1.bf16.msra.mxu0 0
    %439 = vmatprep.subr.bf16.mxu0 0
    %440 = vmatpush1.bf16.msra.mxu0 0
    %441 = vmatprep.subr.bf16.mxu0 0
    %442 = vmatpush1.bf16.msra.mxu0 0
    %443 = vmatprep.subr.bf16.mxu0 0
    %444 = vmatpush1.bf16.msra.mxu0 0
    %445 = vmatprep.subr.bf16.mxu0 0
    %446 = vmatpush1.bf16.msra.mxu0 0
    %447 = vmatprep.mubr.bf16.mxu0 0
    %448 = vmatmul.mubr.bf16.gmra.mrb[0].mxu0 %v230
    %v449 = vpop.f32.mrb[0].mxu0
    %v450 = vadd.f32 0.0, %v449
    %v451 = vpop.f32.mrb[0].mxu0
    %v452 = vpop.f32.mrb[0].mxu0
    %v453 = vadd.f32 0.0, %v452
    %v454 = vpop.f32.mrb[0].mxu0
    %455 = vmatprep.mubr.bf16.mxu0 0
    %456 = vmatmul.mubr.bf16.gmra.mrb[0].mxu0 %v231
    %v457 = vpop.f32.mrb[0].mxu0
    %v458 = vadd.f32 0.0, %v457
    %v459 = vpop.f32.mrb[0].mxu0
    %v460 = vpop.f32.mrb[0].mxu0
    %v461 = vadd.f32 0.0, %v460
    %v462 = vpop.f32.mrb[0].mxu0
    %463 = vdwg.mxu0
    %v464 = vld [vmem:[%s1] sm:$0xff]
    %v465 = vld [vmem:[%s1 + $0x8] sm:$0xff]
    %v466 = vld [vmem:[%s1 + $0x10] sm:$0xff]
    %v467 = vld [vmem:[%s1 + $0x18] sm:$0xff]
    %468 = vmatprep.subr.mxu0 0.0
    %469 = vmatpush1.xpose.msra.mxu0 %v399
    %470 = vmatprep.subr.mxu0 0.0
    %471 = vmatpush1.xpose.msra.mxu0 %v403
    %472 = vmatprep.subr.mxu0 0.0
    %473 = vmatpush1.xpose.msra.mxu0 %v409
    %474 = vmatprep.subr.mxu0 0.0
    %475 = vmatpush1.xpose.msra.mxu0 %v413
    %476 = vmatprep.subr.mxu0 0.0
    %477 = vmatpush1.xpose.msra.mxu0 0.0
    %478 = vmatprep.subr.mxu0 0.0
    %479 = vmatpush1.xpose.msra.mxu0 0.0
    %480 = vmatprep.subr.mxu0 0.0
    %481 = vmatpush1.xpose.msra.mxu0 0.0
    %482 = vmatprep.subr.mxu0 0.0
    %483 = vmatpush1.xpose.msra.mxu0 0.0
    %484 = vmatprep.subr.mxu0 0.0
    %485 = vmatpush1.xpose.msra.mxu0 0.0
    %486 = vmatprep.subr.mxu0 0.0
    %487 = vmatpush1.xpose.msra.mxu0 0.0
    %488 = vmatprep.subr.mxu0 0.0
    %489 = vmatpush1.xpose.msra.mxu0 0.0
    %490 = vmatprep.subr.mxu0 0.0
    %491 = vmatpush1.xpose.msra.mxu0 0.0
    %492 = vmatprep.subr.mxu0 0.0
    %493 = vmatpush1.xpose.msra.mxu0 0.0
    %494 = vmatprep.subr.mxu0 0.0
    %495 = vmatpush1.xpose.msra.mxu0 0.0
    %496 = vmatprep.subr.mxu0 0.0
    %497 = vmatpush1.xpose.msra.mxu0 0.0
    %498 = vmatprep.subr.mxu0 0.0
    %499 = vmatpush1.xpose.msra.mxu0 0.0
    %500 = vmatprep.subr.mxu0 0.0
    %501 = vmatpush1.xpose.msra.mxu0 0.0
    %502 = vmatprep.subr.mxu0 0.0
    %503 = vmatpush1.xpose.msra.mxu0 0.0
    %504 = vmatprep.subr.mxu0 0.0
    %505 = vmatpush1.xpose.msra.mxu0 0.0
    %506 = vmatprep.subr.mxu0 0.0
    %507 = vmatpush1.xpose.msra.mxu0 0.0
    %508 = vmatprep.subr.mxu0 0.0
    %509 = vmatpush1.xpose.msra.mxu0 0.0
    %510 = vmatprep.subr.mxu0 0.0
    %511 = vmatpush1.xpose.msra.mxu0 0.0
    %512 = vmatprep.subr.mxu0 0.0
    %513 = vmatpush1.xpose.msra.mxu0 0.0
    %514 = vmatprep.subr.mxu0 0.0
    %515 = vmatpush1.xpose.msra.mxu0 0.0
    %516 = vmatprep.subr.mxu0 0.0
    %517 = vmatpush1.xpose.msra.mxu0 0.0
    %518 = vmatprep.subr.mxu0 0.0
    %519 = vmatpush1.xpose.msra.mxu0 0.0
    %520 = vmatprep.subr.mxu0 0.0
    %521 = vmatpush1.xpose.msra.mxu0 0.0
    %522 = vmatprep.subr.mxu0 0.0
    %523 = vmatpush1.xpose.msra.mxu0 0.0
    %524 = vmatprep.subr.mxu0 0.0
    %525 = vmatpush1.xpose.msra.mxu0 0.0
    %526 = vmatprep.subr.mxu0 0.0
    %527 = vmatpush1.xpose.msra.mxu0 0.0
    %528 = vmatprep.subr.mxu0 0.0
    %529 = vmatpush1.xpose.msra.mxu0 0.0
    %530 = vmatprep.subr.mxu0 0.0
    %531 = vmatpush1.xpose.msra.mxu0 0.0
    %532 = vmatprep.mubr.f32.mxu0 0.0
    %533 = vmatmul.mubr.f32.gmra.mrb[0].mxu0 %v397
    %v534 = vpop.f32.mrb[0].mxu0
    %v535 = vadd.f32 %v464, %v534
    %v536 = vpop.f32.mrb[0].mxu0
    %537 = vmatprep.mubr.f32.mxu0 0.0
    %538 = vmatmul.mubr.f32.gmra.mrb[0].mxu0 %v401
    %v539 = vpop.f32.mrb[0].mxu0
    %v540 = vadd.f32 %v465, %v539
    %v541 = vpop.f32.mrb[0].mxu0
    %542 = vmatprep.mubr.f32.mxu0 0.0
    %543 = vmatmul.mubr.f32.gmra.mrb[0].mxu0 %v407
    %v544 = vpop.f32.mrb[0].mxu0
    %v545 = vadd.f32 %v466, %v544
    %v546 = vpop.f32.mrb[0].mxu0
    %547 = vmatprep.mubr.f32.mxu0 0.0
    %548 = vmatmul.mubr.f32.gmra.mrb[0].mxu0 %v411
    %v549 = vpop.f32.mrb[0].mxu0
    %v550 = vadd.f32 %v467, %v549
    %v551 = vpop.f32.mrb[0].mxu0
    %552 = vdwg.mxu0
    %vm553 = vcmask 261120
    %v554 = vsel %vm553, %v535, -inf
    %555 = vmax.xlane.f32.xlu0 %v554
    %v556 = vpop.xlane.xlu0 %555
    %v557 = vsel %vm553, %v540, -inf
    %558 = vmax.xlane.f32.xlu0 %v557
    %v559 = vpop.xlane.xlu0 %558
    %v560 = vsel %vm553, %v545, -inf
    %561 = vmax.xlane.f32.xlu0 %v560
    %v562 = vpop.xlane.xlu0 %561
    %v563 = vsel %vm553, %v550, -inf
    %564 = vmax.xlane.f32.xlu0 %v563
    %v565 = vpop.xlane.xlu0 %564
    %v566 = vsub.f32 %v535, %v556
    %v567 = vsub.f32 %v540, %v559
    %v568 = vsub.f32 %v545, %v562
    %v569 = vsub.f32 %v550, %v565
    %v570 = vmul.f32 %v566, 1.442695
    %v571 = vpow.pop %v570
    %v572 = vmul.f32 %v567, 1.442695
    %v573 = vpow.pop %v572
    %v574 = vmul.f32 %v568, 1.442695
    %v575 = vpow.pop %v574
    %v576 = vmul.f32 %v569, 1.442695
    %v577 = vpow.pop %v576
    %v578 = vsel %vm553, %v571, 0.0
    %579 = vadd.xlane.f32.xlu0 %v578
    %v580 = vpop.xlane.xlu0 %579
    %v581 = vsel %vm553, %v573, 0.0
    %582 = vadd.xlane.f32.xlu0 %v581
    %v583 = vpop.xlane.xlu0 %582
    %v584 = vsel %vm553, %v575, 0.0
    %585 = vadd.xlane.f32.xlu0 %v584
    %v586 = vpop.xlane.xlu0 %585
    %v587 = vsel %vm553, %v577, 0.0
    %588 = vadd.xlane.f32.xlu0 %v587
    %v589 = vpop.xlane.xlu0 %588
    %v590 = vrcp.pop %v580
    %v591 = vrcp.pop %v583
    %v592 = vrcp.pop %v586
    %v593 = vrcp.pop %v589
    %v594 = vmul.f32 %v571, %v590
    %v595 = vmul.f32 %v573, %v591
    %v596 = vmul.f32 %v575, %v592
    %v597 = vmul.f32 %v577, %v593
    %v598 = vpack.c.bf16 %v595, %v594
    %v599 = vpack.c.bf16 %v597, %v596
    %v600 = vpack.c.bf16 %v453, %v450
    %v601 = vpack.c.bf16 %v461, %v458
    %v603 = vsel %vm553, %v598, 0
    %v606 = vsel %vm553, %v599, 0
    %608 = vmatprep.subr.bf16.mxu0 0
    %609 = vmatpush1.bf16.msra.mxu0 %v600
    %610 = vmatprep.subr.bf16.mxu0 0
    %611 = vmatpush1.bf16.msra.mxu0 %v601
    %612 = vmatprep.subr.bf16.mxu0 0
    %613 = vmatpush1.bf16.msra.mxu0 0
    %614 = vmatprep.subr.bf16.mxu0 0
    %615 = vmatpush1.bf16.msra.mxu0 0
    %616 = vmatprep.subr.bf16.mxu0 0
    %617 = vmatpush1.bf16.msra.mxu0 0
    %618 = vmatprep.subr.bf16.mxu0 0
    %619 = vmatpush1.bf16.msra.mxu0 0
    %620 = vmatprep.subr.bf16.mxu0 0
    %621 = vmatpush1.bf16.msra.mxu0 0
    %622 = vmatprep.subr.bf16.mxu0 0
    %623 = vmatpush1.bf16.msra.mxu0 0
    %624 = vmatprep.subr.bf16.mxu0 0
    %625 = vmatpush1.bf16.msra.mxu0 0
    %626 = vmatprep.subr.bf16.mxu0 0
    %627 = vmatpush1.bf16.msra.mxu0 0
    %628 = vmatprep.subr.bf16.mxu0 0
    %629 = vmatpush1.bf16.msra.mxu0 0
    %630 = vmatprep.subr.bf16.mxu0 0
    %631 = vmatpush1.bf16.msra.mxu0 0
    %632 = vmatprep.subr.bf16.mxu0 0
    %633 = vmatpush1.bf16.msra.mxu0 0
    %634 = vmatprep.subr.bf16.mxu0 0
    %635 = vmatpush1.bf16.msra.mxu0 0
    %636 = vmatprep.subr.bf16.mxu0 0
    %637 = vmatpush1.bf16.msra.mxu0 0
    %638 = vmatprep.subr.bf16.mxu0 0
    %639 = vmatpush1.bf16.msra.mxu0 0
    %640 = vmatprep.mubr.bf16.mxu0 0
    %641 = vmatmul.mubr.bf16.gmra.mrb[0].mxu0 %v603
    %v642 = vpop.f32.mrb[0].mxu0
    %v643 = vadd.f32 0.0, %v642
    %v644 = vpop.f32.mrb[0].mxu0
    %v645 = vpop.f32.mrb[0].mxu0
    %v646 = vadd.f32 0.0, %v645
    %v647 = vpop.f32.mrb[0].mxu0
    %648 = vmatprep.mubr.bf16.mxu0 0
    %649 = vmatmul.mubr.bf16.gmra.mrb[0].mxu0 %v606
    %v650 = vpop.f32.mrb[0].mxu0
    %v651 = vadd.f32 0.0, %v650
    %v652 = vpop.f32.mrb[0].mxu0
    %v653 = vpop.f32.mrb[0].mxu0
    %v654 = vadd.f32 0.0, %v653
    %v655 = vpop.f32.mrb[0].mxu0
    %656 = vdwg.mxu0
    %v657 = vunpack.c.l.bf16 %v186
    %v658 = vunpack.c.l.bf16 %v187
    %v659 = vunpack.c.l.bf16 %v188
    %v660 = vunpack.c.l.bf16 %v189
    %v661 = vpack.c.bf16 %v646, %v643
    %v662 = vpack.c.bf16 %v654, %v651
    %v663 = vld [vmem:[#allocation10] sm:$0xf]
    %v664 = vld [vmem:[#allocation10 + $0x4] sm:$0xf]
    %v665 = vld [vmem:[#allocation10 + $0x8] sm:$0xf]
    %v666 = vld [vmem:[#allocation10 + $0xc] sm:$0xf]
    %v667 = vld [vmem:[#allocation10 + $0x10] sm:$0xf]
    %v668 = vld [vmem:[#allocation10 + $0x14] sm:$0xf]
    %v669 = vld [vmem:[#allocation10 + $0x18] sm:$0xf]
    %v670 = vld [vmem:[#allocation10 + $0x1c] sm:$0xf]
    %v671 = vld [vmem:[#allocation10 + $0x20] sm:$0xf]
    %v672 = vld [vmem:[#allocation10 + $0x24] sm:$0xf]
    %v673 = vld [vmem:[#allocation10 + $0x28] sm:$0xf]
    %v674 = vld [vmem:[#allocation10 + $0x2c] sm:$0xf]
    %v675 = vld [vmem:[#allocation10 + $0x30] sm:$0xf]
    %v676 = vld [vmem:[#allocation10 + $0x34] sm:$0xf]
    %v677 = vld [vmem:[#allocation10 + $0x38] sm:$0xf]
    %v678 = vld [vmem:[#allocation10 + $0x3c] sm:$0xf]
    %v695 = vunpack.c.l.b16 %v663
    %v696 = vunpack.c.l.b16 %v664
    %v697 = vunpack.c.l.b16 %v665
    %v698 = vunpack.c.l.b16 %v666
    %v699 = vunpack.c.l.b16 %v667
    %v700 = vunpack.c.l.b16 %v668
    %v701 = vunpack.c.l.b16 %v669
    %v702 = vunpack.c.l.b16 %v670
    %v703 = vunpack.c.l.b16 %v671
    %v704 = vunpack.c.l.b16 %v672
    %v705 = vunpack.c.l.b16 %v673
    %v706 = vunpack.c.l.b16 %v674
    %v707 = vunpack.c.l.b16 %v675
    %v708 = vunpack.c.l.b16 %v676
    %v709 = vunpack.c.l.b16 %v677
    %v710 = vunpack.c.l.b16 %v678
    %v711 = vpack.c.b16 %v696, %v695
    %v712 = vpack.c.b16 %v698, %v697
    %v713 = vpack.c.b16 %v700, %v699
    %v714 = vpack.c.b16 %v702, %v701
    %v715 = vpack.c.b16 %v704, %v703
    %v716 = vpack.c.b16 %v706, %v705
    %v717 = vpack.c.b16 %v708, %v707
    %v718 = vpack.c.b16 %v710, %v709
    %727 = vmatprep.subr.bf16.mxu0 0
    %728 = vmatpush1.bf16.msra.mxu0 %v711
    %729 = vmatprep.subr.bf16.mxu0 0
    %730 = vmatpush1.bf16.msra.mxu0 %v712
    %731 = vmatprep.subr.bf16.mxu0 0
    %732 = vmatpush1.bf16.msra.mxu0 %v713
    %733 = vmatprep.subr.bf16.mxu0 0
    %734 = vmatpush1.bf16.msra.mxu0 %v714
    %735 = vmatprep.subr.bf16.mxu0 0
    %736 = vmatpush1.bf16.msra.mxu0 %v715
    %737 = vmatprep.subr.bf16.mxu0 0
    %738 = vmatpush1.bf16.msra.mxu0 %v716
    %739 = vmatprep.subr.bf16.mxu0 0
    %740 = vmatpush1.bf16.msra.mxu0 %v717
    %741 = vmatprep.subr.bf16.mxu0 0
    %742 = vmatpush1.bf16.msra.mxu0 %v718
    %743 = vmatprep.subr.bf16.mxu0 0
    %744 = vmatpush1.bf16.msra.mxu0 0
    %745 = vmatprep.subr.bf16.mxu0 0
    %746 = vmatpush1.bf16.msra.mxu0 0
    %747 = vmatprep.subr.bf16.mxu0 0
    %748 = vmatpush1.bf16.msra.mxu0 0
    %749 = vmatprep.subr.bf16.mxu0 0
    %750 = vmatpush1.bf16.msra.mxu0 0
    %751 = vmatprep.subr.bf16.mxu0 0
    %752 = vmatpush1.bf16.msra.mxu0 0
    %753 = vmatprep.subr.bf16.mxu0 0
    %754 = vmatpush1.bf16.msra.mxu0 0
    %755 = vmatprep.subr.bf16.mxu0 0
    %756 = vmatpush1.bf16.msra.mxu0 0
    %757 = vmatprep.subr.bf16.mxu0 0
    %758 = vmatpush1.bf16.msra.mxu0 0
    %759 = vmatprep.mubr.bf16.mxu0 0
    %760 = vmatmul.mubr.bf16.gmra.mrb[0].mxu0 %v661
    %v761 = vpop.f32.mrb[0].mxu0
    %v762 = vadd.f32 0.0, %v761
    %v763 = vpop.f32.mrb[0].mxu0
    %v764 = vpop.f32.mrb[0].mxu0
    %v765 = vadd.f32 0.0, %v764
    %v766 = vpop.f32.mrb[0].mxu0
    %767 = vmatprep.mubr.bf16.mxu0 0
    %768 = vmatmul.mubr.bf16.gmra.mrb[0].mxu0 %v662
    %v769 = vpop.f32.mrb[0].mxu0
    %v770 = vadd.f32 0.0, %v769
    %v771 = vpop.f32.mrb[0].mxu0
    %v772 = vpop.f32.mrb[0].mxu0
    %v773 = vadd.f32 0.0, %v772
    %v774 = vpop.f32.mrb[0].mxu0
    %775 = vdwg.mxu0
    %v776 = vadd.f32 %v657, %v762
    %v777 = vadd.f32 %v658, %v765
    %v778 = vadd.f32 %v659, %v770
    %v779 = vadd.f32 %v660, %v773
    %v780 = vld [vmem:[%s3] sm:$0xf]
    %v782 = vsel %vm553, %v780, 0
    %784 = vmatprep.subr.mxu0 0.0
    %785 = vmatpush1.msra.mxu0 %v776
    %786 = vmatprep.subr.mxu0 0.0
    %787 = vmatpush1.msra.mxu0 %v777
    %788 = vmatprep.subr.mxu0 0.0
    %789 = vmatpush1.msra.mxu0 %v778
    %790 = vmatprep.subr.mxu0 0.0
    %791 = vmatpush1.msra.mxu0 %v779
    %792 = vmatprep.subr.mxu0 0.0
    %793 = vmatpush1.msra.mxu0 0.0
    %794 = vmatprep.subr.mxu0 0.0
    %795 = vmatpush1.msra.mxu0 0.0
    %796 = vmatprep.subr.mxu0 0.0
    %797 = vmatpush1.msra.mxu0 0.0
    %798 = vmatprep.subr.mxu0 0.0
    %799 = vmatpush1.msra.mxu0 0.0
    %800 = vmatprep.subr.mxu0 0.0
    %801 = vmatpush1.msra.mxu0 0.0
    %802 = vmatprep.subr.mxu0 0.0
    %803 = vmatpush1.msra.mxu0 0.0
    %804 = vmatprep.subr.mxu0 0.0
    %805 = vmatpush1.msra.mxu0 0.0
    %806 = vmatprep.subr.mxu0 0.0
    %807 = vmatpush1.msra.mxu0 0.0
    %808 = vmatprep.subr.mxu0 0.0
    %809 = vmatpush1.msra.mxu0 0.0
    %810 = vmatprep.subr.mxu0 0.0
    %811 = vmatpush1.msra.mxu0 0.0
    %812 = vmatprep.subr.mxu0 0.0
    %813 = vmatpush1.msra.mxu0 0.0
    %814 = vmatprep.subr.mxu0 0.0
    %815 = vmatpush1.msra.mxu0 0.0
    %816 = vmatprep.subr.mxu0 0.0
    %817 = vmatpush1.msra.mxu0 0.0
    %818 = vmatprep.subr.mxu0 0.0
    %819 = vmatpush1.msra.mxu0 0.0
    %820 = vmatprep.subr.mxu0 0.0
    %821 = vmatpush1.msra.mxu0 0.0
    %822 = vmatprep.subr.mxu0 0.0
    %823 = vmatpush1.msra.mxu0 0.0
    %824 = vmatprep.subr.mxu0 0.0
    %825 = vmatpush1.msra.mxu0 0.0
    %826 = vmatprep.subr.mxu0 0.0
    %827 = vmatpush1.msra.mxu0 0.0
    %828 = vmatprep.subr.mxu0 0.0
    %829 = vmatpush1.msra.mxu0 0.0
    %830 = vmatprep.subr.mxu0 0.0
    %831 = vmatpush1.msra.mxu0 0.0
    %832 = vmatprep.subr.mxu0 0.0
    %833 = vmatpush1.msra.mxu0 0.0
    %834 = vmatprep.subr.mxu0 0.0
    %835 = vmatpush1.msra.mxu0 0.0
    %836 = vmatprep.subr.mxu0 0.0
    %837 = vmatpush1.msra.mxu0 0.0
    %838 = vmatprep.subr.mxu0 0.0
    %839 = vmatpush1.msra.mxu0 0.0
    %840 = vmatprep.subr.mxu0 0.0
    %841 = vmatpush1.msra.mxu0 0.0
    %842 = vmatprep.subr.mxu0 0.0
    %843 = vmatpush1.msra.mxu0 0.0
    %844 = vmatprep.subr.mxu0 0.0
    %845 = vmatpush1.msra.mxu0 0.0
    %846 = vmatprep.subr.mxu0 0.0
    %847 = vmatpush1.msra.mxu0 0.0
    %848 = vmatprep.mubr.f32.mxu0 0.0
    %849 = vmatmul.mubr.f32.gmra.mrb[0].mxu0 %v782
    %v850 = vpop.f32.mrb[0].mxu0
    %v851 = vadd.f32 0.0, %v850
    %v852 = vpop.f32.mrb[0].mxu0
    %853 = vdwg.mxu0
    %v854 = vld [vmem:[%s4] sm:$0xff]
    %v855 = vld [vmem:[%s4 + $0x8] sm:$0xff]
    %vm856 = vcmask 31744
    %v858 = vsel %vm856, %v854, 0
    %v861 = vsel %vm856, %v855, 0
    %vm863 = vcmask 1043456
    %v865 = vsel %vm863, %v851, 0
    %867 = vmatprep.subr.mxu0 0.0
    %868 = vmatpush1.msra.mxu0 %v865
    %869 = vmatprep.subr.mxu0 0.0
    %870 = vmatpush1.msra.mxu0 0.0
    %871 = vmatprep.subr.mxu0 0.0
    %872 = vmatpush1.msra.mxu0 0.0
    %873 = vmatprep.subr.mxu0 0.0
    %874 = vmatpush1.msra.mxu0 0.0
    %875 = vmatprep.subr.mxu0 0.0
    %876 = vmatpush1.msra.mxu0 0.0
    %877 = vmatprep.subr.mxu0 0.0
    %878 = vmatpush1.msra.mxu0 0.0
    %879 = vmatprep.subr.mxu0 0.0
    %880 = vmatpush1.msra.mxu0 0.0
    %881 = vmatprep.subr.mxu0 0.0
    %882 = vmatpush1.msra.mxu0 0.0
    %883 = vmatprep.subr.mxu0 0.0
    %884 = vmatpush1.msra.mxu0 0.0
    %885 = vmatprep.subr.mxu0 0.0
    %886 = vmatpush1.msra.mxu0 0.0
    %887 = vmatprep.subr.mxu0 0.0
    %888 = vmatpush1.msra.mxu0 0.0
    %889 = vmatprep.subr.mxu0 0.0
    %890 = vmatpush1.msra.mxu0 0.0
    %891 = vmatprep.subr.mxu0 0.0
    %892 = vmatpush1.msra.mxu0 0.0
    %893 = vmatprep.subr.mxu0 0.0
    %894 = vmatpush1.msra.mxu0 0.0
    %895 = vmatprep.subr.mxu0 0.0
    %896 = vmatpush1.msra.mxu0 0.0
    %897 = vmatprep.subr.mxu0 0.0
    %898 = vmatpush1.msra.mxu0 0.0
    %899 = vmatprep.subr.mxu0 0.0
    %900 = vmatpush1.msra.mxu0 0.0
    %901 = vmatprep.subr.mxu0 0.0
    %902 = vmatpush1.msra.mxu0 0.0
    %903 = vmatprep.subr.mxu0 0.0
    %904 = vmatpush1.msra.mxu0 0.0
    %905 = vmatprep.subr.mxu0 0.0
    %906 = vmatpush1.msra.mxu0 0.0
    %907 = vmatprep.subr.mxu0 0.0
    %908 = vmatpush1.msra.mxu0 0.0
    %909 = vmatprep.subr.mxu0 0.0
    %910 = vmatpush1.msra.mxu0 0.0
    %911 = vmatprep.subr.mxu0 0.0
    %912 = vmatpush1.msra.mxu0 0.0
    %913 = vmatprep.subr.mxu0 0.0
    %914 = vmatpush1.msra.mxu0 0.0
    %915 = vmatprep.subr.mxu0 0.0
    %916 = vmatpush1.msra.mxu0 0.0
    %917 = vmatprep.subr.mxu0 0.0
    %918 = vmatpush1.msra.mxu0 0.0
    %919 = vmatprep.subr.mxu0 0.0
    %920 = vmatpush1.msra.mxu0 0.0
    %921 = vmatprep.subr.mxu0 0.0
    %922 = vmatpush1.msra.mxu0 0.0
    %923 = vmatprep.subr.mxu0 0.0
    %924 = vmatpush1.msra.mxu0 0.0
    %925 = vmatprep.subr.mxu0 0.0
    %926 = vmatpush1.msra.mxu0 0.0
    %927 = vmatprep.subr.mxu0 0.0
    %928 = vmatpush1.msra.mxu0 0.0
    %929 = vmatprep.subr.mxu0 0.0
    %930 = vmatpush1.msra.mxu0 0.0
    %931 = vmatprep.mubr.f32.mxu0 0.0
    %932 = vmatmul.mubr.f32.gmra.mrb[0].mxu0 %v858
    %v933 = vpop.f32.mrb[0].mxu0
    %v934 = vadd.f32 0.0, %v933
    %v935 = vpop.f32.mrb[0].mxu0
    %936 = vmatprep.mubr.f32.mxu0 0.0
    %937 = vmatmul.mubr.f32.gmra.mrb[0].mxu0 %v861
    %v938 = vpop.f32.mrb[0].mxu0
    %v939 = vadd.f32 0.0, %v938
    %v940 = vpop.f32.mrb[0].mxu0
    %941 = vdwg.mxu0
    %v942 = vld [vmem:[#allocation7] sm:$0xff]
    %v943 = vld [vmem:[#allocation7 + $0x8] sm:$0xff]
    %v944 = vld [vmem:[#allocation11] sm:$0xf]
    %v945 = vld [vmem:[#allocation11 + $0x4] sm:$0xf]
    %v946 = vld [vmem:[#allocation11 + $0x8] sm:$0xf]
    %v947 = vld [vmem:[#allocation11 + $0xc] sm:$0xf]
    %v948 = vld [vmem:[#allocation11 + $0x10] sm:$0xf]
    %v949 = vld [vmem:[#allocation11 + $0x14] sm:$0xf]
    %v950 = vld [vmem:[#allocation11 + $0x18] sm:$0xf]
    %v951 = vld [vmem:[#allocation11 + $0x1c] sm:$0xf]
    %v952 = vld [vmem:[#allocation11 + $0x20] sm:$0xf]
    %v953 = vld [vmem:[#allocation11 + $0x24] sm:$0xf]
    %v954 = vld [vmem:[#allocation11 + $0x28] sm:$0xf]
    %v955 = vld [vmem:[#allocation11 + $0x2c] sm:$0xf]
    %v956 = vld [vmem:[#allocation11 + $0x30] sm:$0xf]
    %v957 = vld [vmem:[#allocation11 + $0x34] sm:$0xf]
    %v958 = vld [vmem:[#allocation11 + $0x38] sm:$0xf]
    %v959 = vld [vmem:[#allocation11 + $0x3c] sm:$0xf]
    %v960 = vld [vmem:[#allocation11 + $0x40] sm:$0xf]
    %v961 = vld [vmem:[#allocation11 + $0x44] sm:$0xf]
    %v962 = vld [vmem:[#allocation11 + $0x48] sm:$0xf]
    %v963 = vld [vmem:[#allocation11 + $0x4c] sm:$0xf]
    %v964 = vld [vmem:[#allocation11 + $0x50] sm:$0xf]
    %v965 = vld [vmem:[#allocation11 + $0x54] sm:$0xf]
    %v966 = vld [vmem:[#allocation11 + $0x58] sm:$0xf]
    %v967 = vld [vmem:[#allocation11 + $0x5c] sm:$0xf]
    %v970 = vunpack.c.l.b16 %v942
    %v971 = vunpack.c.h.b16 %v942
    %v972 = vunpack.c.l.b16 %v943
    %v973 = vunpack.c.h.b16 %v943
    %v974 = vpack.c.b16 %v972, %v970
    %v975 = vpack.c.b16 %v973, %v971
    %v1001 = vunpack.c.l.b16 %v944
    %v1002 = vunpack.c.l.b16 %v945
    %v1003 = vunpack.c.l.b16 %v946
    %v1004 = vunpack.c.l.b16 %v947
    %v1005 = vunpack.c.l.b16 %v948
    %v1006 = vunpack.c.l.b16 %v949
    %v1007 = vunpack.c.l.b16 %v950
    %v1008 = vunpack.c.l.b16 %v951
    %v1009 = vunpack.c.l.b16 %v952
    %v1010 = vunpack.c.l.b16 %v953
    %v1011 = vunpack.c.l.b16 %v954
    %v1012 = vunpack.c.l.b16 %v955
    %v1013 = vunpack.c.l.b16 %v956
    %v1014 = vunpack.c.l.b16 %v957
    %v1015 = vunpack.c.l.b16 %v958
    %v1016 = vunpack.c.l.b16 %v959
    %v1017 = vunpack.c.l.b16 %v960
    %v1018 = vunpack.c.l.b16 %v961
    %v1019 = vunpack.c.l.b16 %v962
    %v1020 = vunpack.c.l.b16 %v963
    %v1021 = vunpack.c.l.b16 %v964
    %v1022 = vunpack.c.l.b16 %v965
    %v1023 = vunpack.c.l.b16 %v966
    %v1024 = vunpack.c.l.b16 %v967
    %v1025 = vpack.c.b16 %v1002, %v1001
    %v1026 = vpack.c.b16 %v1004, %v1003
    %v1027 = vpack.c.b16 %v1006, %v1005
    %v1028 = vpack.c.b16 %v1008, %v1007
    %v1029 = vpack.c.b16 %v1010, %v1009
    %v1030 = vpack.c.b16 %v1012, %v1011
    %v1031 = vpack.c.b16 %v1014, %v1013
    %v1032 = vpack.c.b16 %v1016, %v1015
    %v1033 = vpack.c.b16 %v1018, %v1017
    %v1034 = vpack.c.b16 %v1020, %v1019
    %v1035 = vpack.c.b16 %v1022, %v1021
    %v1036 = vpack.c.b16 %v1024, %v1023
    %vm1049 = vcmask 523264
    %v1051 = vsel %vm1049, %v975, 0
    %1053 = vmatprep.subr.bf16.mxu0 0
    %1054 = vmatpush1.bf16.msra.mxu0 %v1025
    %1055 = vmatprep.subr.bf16.mxu0 0
    %1056 = vmatpush1.bf16.msra.mxu0 %v1026
    %1057 = vmatprep.subr.bf16.mxu0 0
    %1058 = vmatpush1.bf16.msra.mxu0 %v1027
    %1059 = vmatprep.subr.bf16.mxu0 0
    %1060 = vmatpush1.bf16.msra.mxu0 %v1028
    %1061 = vmatprep.subr.bf16.mxu0 0
    %1062 = vmatpush1.bf16.msra.mxu0 %v1029
    %1063 = vmatprep.subr.bf16.mxu0 0
    %1064 = vmatpush1.bf16.msra.mxu0 %v1030
    %1065 = vmatprep.subr.bf16.mxu0 0
    %1066 = vmatpush1.bf16.msra.mxu0 %v1031
    %1067 = vmatprep.subr.bf16.mxu0 0
    %1068 = vmatpush1.bf16.msra.mxu0 %v1032
    %1069 = vmatprep.subr.bf16.mxu0 0
    %1070 = vmatpush1.bf16.msra.mxu0 %v1033
    %1071 = vmatprep.subr.bf16.mxu0 0
    %1072 = vmatpush1.bf16.msra.mxu0 %v1034
    %1073 = vmatprep.subr.bf16.mxu0 0
    %1074 = vmatpush1.bf16.msra.mxu0 %v1035
    %1075 = vmatprep.subr.bf16.mxu0 0
    %1076 = vmatpush1.bf16.msra.mxu0 %v1036
    %1077 = vmatprep.subr.bf16.mxu0 0
    %1078 = vmatpush1.bf16.msra.mxu0 0
    %1079 = vmatprep.subr.bf16.mxu0 0
    %1080 = vmatpush1.bf16.msra.mxu0 0
    %1081 = vmatprep.subr.bf16.mxu0 0
    %1082 = vmatpush1.bf16.msra.mxu0 0
    %1083 = vmatprep.subr.bf16.mxu0 0
    %1084 = vmatpush1.bf16.msra.mxu0 0
    %1085 = vmatprep.mubr.bf16.mxu0 %v1051
    %1086 = vmatmul.mubr.bf16.gmra.mrb[0].mxu0 %v974
    %v1087 = vpop.f32.mrb[0].mxu0
    %v1088 = vadd.f32 %v934, %v1087
    %v1089 = vpop.f32.mrb[0].mxu0
    %v1090 = vpop.f32.mrb[0].mxu0
    %v1091 = vadd.f32 %v939, %v1090
    %v1092 = vpop.f32.mrb[0].mxu0
    %1093 = vdwg.mxu0
    %v1094 = vpack.c.bf16 %v1091, %v1088
    %v1095 = vld [vmem:[#allocation13] sm:$0xff]
    %v1096 = vld [vmem:[#allocation13 + $0x8] sm:$0xf]
    %v1097 = vld [vmem:[#allocation13 + $0xc] sm:$0xff]
    %v1098 = vld [vmem:[#allocation13 + $0x14] sm:$0xf]
    %v1099 = vld [vmem:[#allocation13 + $0x18] sm:$0xff]
    %v1100 = vld [vmem:[#allocation13 + $0x20] sm:$0xf]
    %v1101 = vld [vmem:[#allocation13 + $0x24] sm:$0xff]
    %v1102 = vld [vmem:[#allocation13 + $0x2c] sm:$0xf]
    %v1103 = vld [vmem:[#allocation13 + $0x30] sm:$0xff]
    %v1104 = vld [vmem:[#allocation13 + $0x38] sm:$0xf]
    %v1105 = vld [vmem:[#allocation13 + $0x3c] sm:$0xff]
    %v1106 = vld [vmem:[#allocation13 + $0x44] sm:$0xf]
    %v1107 = vld [vmem:[#allocation13 + $0x48] sm:$0xff]
    %v1108 = vld [vmem:[#allocation13 + $0x50] sm:$0xf]
    %v1109 = vld [vmem:[#allocation13 + $0x54] sm:$0xff]
    %v1110 = vld [vmem:[#allocation13 + $0x5c] sm:$0xf]
    %v1111 = vld [vmem:[#allocation13 + $0x60] sm:$0xff]
    %v1112 = vld [vmem:[#allocation13 + $0x68] sm:$0xf]
    %v1113 = vld [vmem:[#allocation13 + $0x6c] sm:$0xff]
    %v1114 = vld [vmem:[#allocation13 + $0x74] sm:$0xf]
    %v1115 = vld [vmem:[#allocation13 + $0x78] sm:$0xff]
    %v1116 = vld [vmem:[#allocation13 + $0x80] sm:$0xf]
    %v1117 = vld [vmem:[#allocation13 + $0x84] sm:$0xff]
    %v1118 = vld [vmem:[#allocation13 + $0x8c] sm:$0xf]
    %v1119 = vld [vmem:[#allocation13 + $0x90] sm:$0xff]
    %v1120 = vld [vmem:[#allocation13 + $0x98] sm:$0xf]
    %v1121 = vld [vmem:[#allocation13 + $0x9c] sm:$0xff]
    %v1122 = vld [vmem:[#allocation13 + $0xa4] sm:$0xf]
    %v1123 = vld [vmem:[#allocation13 + $0xa8] sm:$0xff]
    %v1124 = vld [vmem:[#allocation13 + $0xb0] sm:$0xf]
    %v1125 = vld [vmem:[#allocation13 + $0xb4] sm:$0xff]
    %v1126 = vld [vmem:[#allocation13 + $0xbc] sm:$0xf]
    %v1159 = vunpack.c.l.b16 %v1095
    %v1160 = vunpack.c.h.b16 %v1095
    %v1161 = vunpack.c.l.b16 %v1096
    %v1162 = vunpack.c.l.b16 %v1097
    %v1163 = vunpack.c.h.b16 %v1097
    %v1164 = vunpack.c.l.b16 %v1098
    %v1165 = vunpack.c.l.b16 %v1099
    %v1166 = vunpack.c.h.b16 %v1099
    %v1167 = vunpack.c.l.b16 %v1100
    %v1168 = vunpack.c.l.b16 %v1101
    %v1169 = vunpack.c.h.b16 %v1101
    %v1170 = vunpack.c.l.b16 %v1102
    %v1171 = vunpack.c.l.b16 %v1103
    %v1172 = vunpack.c.h.b16 %v1103
    %v1173 = vunpack.c.l.b16 %v1104
    %v1174 = vunpack.c.l.b16 %v1105
    %v1175 = vunpack.c.h.b16 %v1105
    %v1176 = vunpack.c.l.b16 %v1106
    %v1177 = vunpack.c.l.b16 %v1107
    %v1178 = vunpack.c.h.b16 %v1107
    %v1179 = vunpack.c.l.b16 %v1108
    %v1180 = vunpack.c.l.b16 %v1109
    %v1181 = vunpack.c.h.b16 %v1109
    %v1182 = vunpack.c.l.b16 %v1110
    %v1183 = vunpack.c.l.b16 %v1111
    %v1184 = vunpack.c.h.b16 %v1111
    %v1185 = vunpack.c.l.b16 %v1112
    %v1186 = vunpack.c.l.b16 %v1113
    %v1187 = vunpack.c.h.b16 %v1113
    %v1188 = vunpack.c.l.b16 %v1114
    %v1189 = vunpack.c.l.b16 %v1115
    %v1190 = vunpack.c.h.b16 %v1115
    %v1191 = vunpack.c.l.b16 %v1116
    %v1192 = vunpack.c.l.b16 %v1117
    %v1193 = vunpack.c.h.b16 %v1117
    %v1194 = vunpack.c.l.b16 %v1118
    %v1195 = vunpack.c.l.b16 %v1119
    %v1196 = vunpack.c.h.b16 %v1119
    %v1197 = vunpack.c.l.b16 %v1120
    %v1198 = vunpack.c.l.b16 %v1121
    %v1199 = vunpack.c.h.b16 %v1121
    %v1200 = vunpack.c.l.b16 %v1122
    %v1201 = vunpack.c.l.b16 %v1123
    %v1202 = vunpack.c.h.b16 %v1123
    %v1203 = vunpack.c.l.b16 %v1124
    %v1204 = vunpack.c.l.b16 %v1125
    %v1205 = vunpack.c.h.b16 %v1125
    %v1206 = vunpack.c.l.b16 %v1126
    %v1207 = vpack.c.b16 %v1162, %v1159
    %v1208 = vpack.c.b16 %v1163, %v1160
    %v1209 = vpack.c.b16 %v1164, %v1161
    %v1210 = vpack.c.b16 %v1168, %v1165
    %v1211 = vpack.c.b16 %v1169, %v1166
    %v1212 = vpack.c.b16 %v1170, %v1167
    %v1213 = vpack.c.b16 %v1174, %v1171
    %v1214 = vpack.c.b16 %v1175, %v1172
    %v1215 = vpack.c.b16 %v1176, %v1173
    %v1216 = vpack.c.b16 %v1180, %v1177
    %v1217 = vpack.c.b16 %v1181, %v1178
    %v1218 = vpack.c.b16 %v1182, %v1179
    %v1219 = vpack.c.b16 %v1186, %v1183
    %v1220 = vpack.c.b16 %v1187, %v1184
    %v1221 = vpack.c.b16 %v1188, %v1185
    %v1222 = vpack.c.b16 %v1192, %v1189
    %v1223 = vpack.c.b16 %v1193, %v1190
    %v1224 = vpack.c.b16 %v1194, %v1191
    %v1225 = vpack.c.b16 %v1198, %v1195
    %v1226 = vpack.c.b16 %v1199, %v1196
    %v1227 = vpack.c.b16 %v1200, %v1197
    %v1228 = vpack.c.b16 %v1204, %v1201
    %v1229 = vpack.c.b16 %v1205, %v1202
    %v1230 = vpack.c.b16 %v1206, %v1203
    %1255 = vmatprep.subr.bf16.mxu0 %v1208
    %1256 = vmatpush1.bf16.msra.mxu0 %v1207
    %1257 = vmatprep.subr.bf16.mxu0 %v1211
    %1258 = vmatpush1.bf16.msra.mxu0 %v1210
    %1259 = vmatprep.subr.bf16.mxu0 %v1214
    %1260 = vmatpush1.bf16.msra.mxu0 %v1213
    %1261 = vmatprep.subr.bf16.mxu0 %v1217
    %1262 = vmatpush1.bf16.msra.mxu0 %v1216
    %1263 = vmatprep.subr.bf16.mxu0 %v1220
    %1264 = vmatpush1.bf16.msra.mxu0 %v1219
    %1265 = vmatprep.subr.bf16.mxu0 %v1223
    %1266 = vmatpush1.bf16.msra.mxu0 %v1222
    %1267 = vmatprep.subr.bf16.mxu0 %v1226
    %1268 = vmatpush1.bf16.msra.mxu0 %v1225
    %1269 = vmatprep.subr.bf16.mxu0 %v1229
    %1270 = vmatpush1.bf16.msra.mxu0 %v1228
    %1271 = vmatprep.subr.bf16.mxu0 0
    %1272 = vmatpush1.bf16.msra.mxu0 0
    %1273 = vmatprep.subr.bf16.mxu0 0
    %1274 = vmatpush1.bf16.msra.mxu0 0
    %1275 = vmatprep.subr.bf16.mxu0 0
    %1276 = vmatpush1.bf16.msra.mxu0 0
    %1277 = vmatprep.subr.bf16.mxu0 0
    %1278 = vmatpush1.bf16.msra.mxu0 0
    %1279 = vmatprep.subr.bf16.mxu0 0
    %1280 = vmatpush1.bf16.msra.mxu0 0
    %1281 = vmatprep.subr.bf16.mxu0 0
    %1282 = vmatpush1.bf16.msra.mxu0 0
    %1283 = vmatprep.subr.bf16.mxu0 0
    %1284 = vmatpush1.bf16.msra.mxu0 0
    %1285 = vmatprep.subr.bf16.mxu0 0
    %1286 = vmatpush1.bf16.msra.mxu0 0
    %1287 = vmatprep.mubr.bf16.mxu0 0
    %1288 = vmatmul.mubr.bf16.gmra.mrb[0].mxu0 %v1094
    %v1289 = vpop.f32.mrb[0].mxu0
    %v1290 = vadd.f32 0.0, %v1289
    %v1291 = vpop.f32.mrb[0].mxu0
    %v1292 = vadd.f32 0.0, %v1291
    %v1293 = vpop.f32.mrb[0].mxu0
    %v1294 = vadd.f32 0.0, %v1293
    %v1295 = vpop.f32.mrb[0].mxu0
    %v1296 = vadd.f32 0.0, %v1295
    %1297 = vdwg.mxu0
    %1298 = vmatprep.subr.bf16.mxu0 0
    %1299 = vmatpush1.bf16.msra.mxu0 %v1209
    %1300 = vmatprep.subr.bf16.mxu0 0
    %1301 = vmatpush1.bf16.msra.mxu0 %v1212
    %1302 = vmatprep.subr.bf16.mxu0 0
    %1303 = vmatpush1.bf16.msra.mxu0 %v1215
    %1304 = vmatprep.subr.bf16.mxu0 0
    %1305 = vmatpush1.bf16.msra.mxu0 %v1218
    %1306 = vmatprep.subr.bf16.mxu0 0
    %1307 = vmatpush1.bf16.msra.mxu0 %v1221
    %1308 = vmatprep.subr.bf16.mxu0 0
    %1309 = vmatpush1.bf16.msra.mxu0 %v1224
    %1310 = vmatprep.subr.bf16.mxu0 0
    %1311 = vmatpush1.bf16.msra.mxu0 %v1227
    %1312 = vmatprep.subr.bf16.mxu0 0
    %1313 = vmatpush1.bf16.msra.mxu0 %v1230
    %1314 = vmatprep.subr.bf16.mxu0 0
    %1315 = vmatpush1.bf16.msra.mxu0 0
    %1316 = vmatprep.subr.bf16.mxu0 0
    %1317 = vmatpush1.bf16.msra.mxu0 0
    %1318 = vmatprep.subr.bf16.mxu0 0
    %1319 = vmatpush1.bf16.msra.mxu0 0
    %1320 = vmatprep.subr.bf16.mxu0 0
    %1321 = vmatpush1.bf16.msra.mxu0 0
    %1322 = vmatprep.subr.bf16.mxu0 0
    %1323 = vmatpush1.bf16.msra.mxu0 0
    %1324 = vmatprep.subr.bf16.mxu0 0
    %1325 = vmatpush1.bf16.msra.mxu0 0
    %1326 = vmatprep.subr.bf16.mxu0 0
    %1327 = vmatpush1.bf16.msra.mxu0 0
    %1328 = vmatprep.subr.bf16.mxu0 0
    %1329 = vmatpush1.bf16.msra.mxu0 0
    %1330 = vmatprep.mubr.bf16.mxu0 0
    %1331 = vmatmul.mubr.bf16.gmra.mrb[0].mxu0 %v1094
    %v1332 = vpop.f32.mrb[0].mxu0
    %v1333 = vadd.f32 0.0, %v1332
    %v1334 = vpop.f32.mrb[0].mxu0
    %v1335 = vpop.f32.mrb[0].mxu0
    %v1336 = vadd.f32 0.0, %v1335
    %v1337 = vpop.f32.mrb[0].mxu0
    %1338 = vdwg.mxu0
    %v1339 = vld [vmem:[%s6] sm:$0xf]
    %v1340 = vld [vmem:[%s6 + $0x4] sm:$0xf]
    %v1341 = vld [vmem:[%s6 + $0x8] sm:$0xf]
    %v1342 = vld [vmem:[%s6 + $0xc] sm:$0xf]
    %v1343 = vld [vmem:[%s6 + $0x10] sm:$0xf]
    %v1344 = vld [vmem:[%s6 + $0x14] sm:$0xf]
    %v1345 = vld [vmem:[%s6 + $0x18] sm:$0xf]
    %v1346 = vld [vmem:[%s6 + $0x1c] sm:$0xf]
    %v1347 = vld [vmem:[%s6 + $0x20] sm:$0xf]
    %v1348 = vld [vmem:[%s6 + $0x24] sm:$0xf]
    %v1349 = vld [vmem:[%s6 + $0x28] sm:$0xf]
    %v1350 = vld [vmem:[%s6 + $0x2c] sm:$0xf]
    %v1351 = vld [vmem:[%s6 + $0x30] sm:$0xf]
    %v1352 = vld [vmem:[%s6 + $0x34] sm:$0xf]
    %v1353 = vld [vmem:[%s6 + $0x38] sm:$0xf]
    %v1354 = vld [vmem:[%s6 + $0x3c] sm:$0xf]
    %v1355 = vpack.c.bf16 %v1294, %v1290
    %v1356 = vpack.c.bf16 %v1296, %v1292
    %v1357 = vpack.c.bf16 %v1336, %v1333
    %v1374 = vunpack.c.l.b16 %v1339
    %v1375 = vunpack.c.l.b16 %v1340
    %v1376 = vunpack.c.l.b16 %v1341
    %v1377 = vunpack.c.l.b16 %v1342
    %v1378 = vunpack.c.l.b16 %v1343
    %v1379 = vunpack.c.l.b16 %v1344
    %v1380 = vunpack.c.l.b16 %v1345
    %v1381 = vunpack.c.l.b16 %v1346
    %v1382 = vunpack.c.l.b16 %v1347
    %v1383 = vunpack.c.l.b16 %v1348
    %v1384 = vunpack.c.l.b16 %v1349
    %v1385 = vunpack.c.l.b16 %v1350
    %v1386 = vunpack.c.l.b16 %v1351
    %v1387 = vunpack.c.l.b16 %v1352
    %v1388 = vunpack.c.l.b16 %v1353
    %v1389 = vunpack.c.l.b16 %v1354
    %v1390 = vpack.c.b16 %v1375, %v1374
    %v1391 = vpack.c.b16 %v1377, %v1376
    %v1392 = vpack.c.b16 %v1379, %v1378
    %v1393 = vpack.c.b16 %v1381, %v1380
    %v1394 = vpack.c.b16 %v1383, %v1382
    %v1395 = vpack.c.b16 %v1385, %v1384
    %v1396 = vpack.c.b16 %v1387, %v1386
    %v1397 = vpack.c.b16 %v1389, %v1388
    %vm1398 = vcmask 130048
    %v1400 = vsel %vm1398, %v1390, 0
    %v1403 = vsel %vm1398, %v1391, 0
    %v1406 = vsel %vm1398, %v1392, 0
    %v1409 = vsel %vm1398, %v1393, 0
    %v1412 = vsel %vm1398, %v1394, 0
    %v1415 = vsel %vm1398, %v1395, 0
    %v1418 = vsel %vm1398, %v1396, 0
    %v1421 = vsel %vm1398, %v1397, 0
    %1423 = vmatprep.subr.bf16.mxu0 %v1356
    %1424 = vmatpush1.bf16.msra.mxu0 %v1355
    %1425 = vmatprep.subr.bf16.mxu0 0
    %1426 = vmatpush1.bf16.msra.mxu0 0
    %1427 = vmatprep.subr.bf16.mxu0 0
    %1428 = vmatpush1.bf16.msra.mxu0 0
    %1429 = vmatprep.subr.bf16.mxu0 0
    %1430 = vmatpush1.bf16.msra.mxu0 0
    %1431 = vmatprep.subr.bf16.mxu0 0
    %1432 = vmatpush1.bf16.msra.mxu0 0
    %1433 = vmatprep.subr.bf16.mxu0 0
    %1434 = vmatpush1.bf16.msra.mxu0 0
    %1435 = vmatprep.subr.bf16.mxu0 0
    %1436 = vmatpush1.bf16.msra.mxu0 0
    %1437 = vmatprep.subr.bf16.mxu0 0
    %1438 = vmatpush1.bf16.msra.mxu0 0
    %1439 = vmatprep.subr.bf16.mxu0 0
    %1440 = vmatpush1.bf16.msra.mxu0 0
    %1441 = vmatprep.subr.bf16.mxu0 0
    %1442 = vmatpush1.bf16.msra.mxu0 0
    %1443 = vmatprep.subr.bf16.mxu0 0
    %1444 = vmatpush1.bf16.msra.mxu0 0
    %1445 = vmatprep.subr.bf16.mxu0 0
    %1446 = vmatpush1.bf16.msra.mxu0 0
    %1447 = vmatprep.subr.bf16.mxu0 0
    %1448 = vmatpush1.bf16.msra.mxu0 0
    %1449 = vmatprep.subr.bf16.mxu0 0
    %1450 = vmatpush1.bf16.msra.mxu0 0
    %1451 = vmatprep.subr.bf16.mxu0 0
    %1452 = vmatpush1.bf16.msra.mxu0 0
    %1453 = vmatprep.subr.bf16.mxu0 0
    %1454 = vmatpush1.bf16.msra.mxu0 0
    %1455 = vmatprep.mubr.bf16.mxu0 0
    %1456 = vmatmul.mubr.bf16.gmra.mrb[0].mxu0 %v1400
    %v1457 = vpop.f32.mrb[0].mxu0
    %v1458 = vpop.f32.mrb[0].mxu0
    %v1459 = vadd.f32 0.0, %v1458
    %v1460 = vpop.f32.mrb[0].mxu0
    %v1461 = vpop.f32.mrb[0].mxu0
    %v1462 = vadd.f32 0.0, %v1461
    %1463 = vmatprep.mubr.bf16.mxu0 0
    %1464 = vmatmul.mubr.bf16.gmra.mrb[0].mxu0 %v1403
    %v1465 = vpop.f32.mrb[0].mxu0
    %v1466 = vpop.f32.mrb[0].mxu0
    %v1467 = vadd.f32 0.0, %v1466
    %v1468 = vpop.f32.mrb[0].mxu0
    %v1469 = vpop.f32.mrb[0].mxu0
    %v1470 = vadd.f32 0.0, %v1469
    %1471 = vmatprep.mubr.bf16.mxu0 0
    %1472 = vmatmul.mubr.bf16.gmra.mrb[0].mxu0 %v1406
    %v1473 = vpop.f32.mrb[0].mxu0
    %v1474 = vpop.f32.mrb[0].mxu0
    %v1475 = vadd.f32 0.0, %v1474
    %v1476 = vpop.f32.mrb[0].mxu0
    %v1477 = vpop.f32.mrb[0].mxu0
    %v1478 = vadd.f32 0.0, %v1477
    %1479 = vmatprep.mubr.bf16.mxu0 0
    %1480 = vmatmul.mubr.bf16.gmra.mrb[0].mxu0 %v1409
    %v1481 = vpop.f32.mrb[0].mxu0
    %v1482 = vpop.f32.mrb[0].mxu0
    %v1483 = vadd.f32 0.0, %v1482
    %v1484 = vpop.f32.mrb[0].mxu0
    %v1485 = vpop.f32.mrb[0].mxu0
    %v1486 = vadd.f32 0.0, %v1485
    %1487 = vmatprep.mubr.bf16.mxu0 0
    %1488 = vmatmul.mubr.bf16.gmra.mrb[0].mxu0 %v1412
    %v1489 = vpop.f32.mrb[0].mxu0
    %v1490 = vpop.f32.mrb[0].mxu0
    %v1491 = vadd.f32 0.0, %v1490
    %v1492 = vpop.f32.mrb[0].mxu0
    %v1493 = vpop.f32.mrb[0].mxu0
    %v1494 = vadd.f32 0.0, %v1493
    %1495 = vmatprep.mubr.bf16.mxu0 0
    %1496 = vmatmul.mubr.bf16.gmra.mrb[0].mxu0 %v1415
    %v1497 = vpop.f32.mrb[0].mxu0
    %v1498 = vpop.f32.mrb[0].mxu0
    %v1499 = vadd.f32 0.0, %v1498
    %v1500 = vpop.f32.mrb[0].mxu0
    %v1501 = vpop.f32.mrb[0].mxu0
    %v1502 = vadd.f32 0.0, %v1501
    %1503 = vmatprep.mubr.bf16.mxu0 0
    %1504 = vmatmul.mubr.bf16.gmra.mrb[0].mxu0 %v1418
    %v1505 = vpop.f32.mrb[0].mxu0
    %v1506 = vpop.f32.mrb[0].mxu0
    %v1507 = vadd.f32 0.0, %v1506
    %v1508 = vpop.f32.mrb[0].mxu0
    %v1509 = vpop.f32.mrb[0].mxu0
    %v1510 = vadd.f32 0.0, %v1509
    %1511 = vmatprep.mubr.bf16.mxu0 0
    %1512 = vmatmul.mubr.bf16.gmra.mrb[0].mxu0 %v1421
    %v1513 = vpop.f32.mrb[0].mxu0
    %v1514 = vpop.f32.mrb[0].mxu0
    %v1515 = vadd.f32 0.0, %v1514
    %v1516 = vpop.f32.mrb[0].mxu0
    %v1517 = vpop.f32.mrb[0].mxu0
    %v1518 = vadd.f32 0.0, %v1517
    %1519 = vdwg.mxu0
    %1520 = vmatprep.subr.bf16.mxu0 0
    %1521 = vmatpush1.bf16.msra.mxu0 %v1357
    %1522 = vmatprep.subr.bf16.mxu0 0
    %1523 = vmatpush1.bf16.msra.mxu0 0
    %1524 = vmatprep.subr.bf16.mxu0 0
    %1525 = vmatpush1.bf16.msra.mxu0 0
    %1526 = vmatprep.subr.bf16.mxu0 0
    %1527 = vmatpush1.bf16.msra.mxu0 0
    %1528 = vmatprep.subr.bf16.mxu0 0
    %1529 = vmatpush1.bf16.msra.mxu0 0
    %1530 = vmatprep.subr.bf16.mxu0 0
    %1531 = vmatpush1.bf16.msra.mxu0 0
    %1532 = vmatprep.subr.bf16.mxu0 0
    %1533 = vmatpush1.bf16.msra.mxu0 0
    %1534 = vmatprep.subr.bf16.mxu0 0
    %1535 = vmatpush1.bf16.msra.mxu0 0
    %1536 = vmatprep.subr.bf16.mxu0 0
    %1537 = vmatpush1.bf16.msra.mxu0 0
    %1538 = vmatprep.subr.bf16.mxu0 0
    %1539 = vmatpush1.bf16.msra.mxu0 0
    %1540 = vmatprep.subr.bf16.mxu0 0
    %1541 = vmatpush1.bf16.msra.mxu0 0
    %1542 = vmatprep.subr.bf16.mxu0 0
    %1543 = vmatpush1.bf16.msra.mxu0 0
    %1544 = vmatprep.subr.bf16.mxu0 0
    %1545 = vmatpush1.bf16.msra.mxu0 0
    %1546 = vmatprep.subr.bf16.mxu0 0
    %1547 = vmatpush1.bf16.msra.mxu0 0
    %1548 = vmatprep.subr.bf16.mxu0 0
    %1549 = vmatpush1.bf16.msra.mxu0 0
    %1550 = vmatprep.subr.bf16.mxu0 0
    %1551 = vmatpush1.bf16.msra.mxu0 0
    %1552 = vmatprep.mubr.bf16.mxu0 0
    %1553 = vmatmul.mubr.bf16.gmra.mrb[0].mxu0 %v1400
    %v1554 = vpop.f32.mrb[0].mxu0
    %v1555 = vadd.f32 0.0, %v1554
    %v1556 = vpop.f32.mrb[0].mxu0
    %v1557 = vpop.f32.mrb[0].mxu0
    %v1558 = vadd.f32 0.0, %v1557
    %v1559 = vpop.f32.mrb[0].mxu0
    %1560 = vmatprep.mubr.bf16.mxu0 0
    %1561 = vmatmul.mubr.bf16.gmra.mrb[0].mxu0 %v1403
    %v1562 = vpop.f32.mrb[0].mxu0
    %v1563 = vadd.f32 0.0, %v1562
    %v1564 = vpop.f32.mrb[0].mxu0
    %v1565 = vpop.f32.mrb[0].mxu0
    %v1566 = vadd.f32 0.0, %v1565
    %v1567 = vpop.f32.mrb[0].mxu0
    %1568 = vmatprep.mubr.bf16.mxu0 0
    %1569 = vmatmul.mubr.bf16.gmra.mrb[0].mxu0 %v1406
    %v1570 = vpop.f32.mrb[0].mxu0
    %v1571 = vadd.f32 0.0, %v1570
    %v1572 = vpop.f32.mrb[0].mxu0
    %v1573 = vpop.f32.mrb[0].mxu0
    %v1574 = vadd.f32 0.0, %v1573
    %v1575 = vpop.f32.mrb[0].mxu0
    %1576 = vmatprep.mubr.bf16.mxu0 0
    %1577 = vmatmul.mubr.bf16.gmra.mrb[0].mxu0 %v1409
    %v1578 = vpop.f32.mrb[0].mxu0
    %v1579 = vadd.f32 0.0, %v1578
    %v1580 = vpop.f32.mrb[0].mxu0
    %v1581 = vpop.f32.mrb[0].mxu0
    %v1582 = vadd.f32 0.0, %v1581
    %v1583 = vpop.f32.mrb[0].mxu0
    %1584 = vmatprep.mubr.bf16.mxu0 0
    %1585 = vmatmul.mubr.bf16.gmra.mrb[0].mxu0 %v1412
    %v1586 = vpop.f32.mrb[0].mxu0
    %v1587 = vadd.f32 0.0, %v1586
    %v1588 = vpop.f32.mrb[0].mxu0
    %v1589 = vpop.f32.mrb[0].mxu0
    %v1590 = vadd.f32 0.0, %v1589
    %v1591 = vpop.f32.mrb[0].mxu0
    %1592 = vmatprep.mubr.bf16.mxu0 0
    %1593 = vmatmul.mubr.bf16.gmra.mrb[0].mxu0 %v1415
    %v1594 = vpop.f32.mrb[0].mxu0
    %v1595 = vadd.f32 0.0, %v1594
    %v1596 = vpop.f32.mrb[0].mxu0
    %v1597 = vpop.f32.mrb[0].mxu0
    %v1598 = vadd.f32 0.0, %v1597
    %v1599 = vpop.f32.mrb[0].mxu0
    %1600 = vmatprep.mubr.bf16.mxu0 0
    %1601 = vmatmul.mubr.bf16.gmra.mrb[0].mxu0 %v1418
    %v1602 = vpop.f32.mrb[0].mxu0
    %v1603 = vadd.f32 0.0, %v1602
    %v1604 = vpop.f32.mrb[0].mxu0
    %v1605 = vpop.f32.mrb[0].mxu0
    %v1606 = vadd.f32 0.0, %v1605
    %v1607 = vpop.f32.mrb[0].mxu0
    %1608 = vmatprep.mubr.bf16.mxu0 0
    %1609 = vmatmul.mubr.bf16.gmra.mrb[0].mxu0 %v1421
    %v1610 = vpop.f32.mrb[0].mxu0
    %v1611 = vadd.f32 0.0, %v1610
    %v1612 = vpop.f32.mrb[0].mxu0
    %v1613 = vpop.f32.mrb[0].mxu0
    %v1614 = vadd.f32 0.0, %v1613
    %v1615 = vpop.f32.mrb[0].mxu0
    %1616 = vdwg.mxu0
    %v1617 = vpack.c.bf16 %v777, %v776
    %v1618 = vpack.c.bf16 %v779, %v778
    %v1619 = vld [vmem:[#allocation14] sm:$0xf]
    %v1620 = vld [vmem:[#allocation14 + $0x4] sm:$0xf]
    %v1621 = vld [vmem:[#allocation14 + $0x8] sm:$0xf]
    %v1622 = vld [vmem:[#allocation14 + $0xc] sm:$0xf]
    %v1623 = vld [vmem:[#allocation14 + $0x10] sm:$0xf]
    %v1624 = vld [vmem:[#allocation14 + $0x14] sm:$0xf]
    %v1625 = vld [vmem:[#allocation14 + $0x18] sm:$0xf]
    %v1626 = vld [vmem:[#allocation14 + $0x1c] sm:$0xf]
    %v1627 = vld [vmem:[#allocation14 + $0x20] sm:$0xf]
    %v1628 = vld [vmem:[#allocation14 + $0x24] sm:$0xf]
    %v1629 = vld [vmem:[#allocation14 + $0x28] sm:$0xf]
    %v1630 = vld [vmem:[#allocation14 + $0x2c] sm:$0xf]
    %v1631 = vld [vmem:[#allocation14 + $0x30] sm:$0xf]
    %v1632 = vld [vmem:[#allocation14 + $0x34] sm:$0xf]
    %v1633 = vld [vmem:[#allocation14 + $0x38] sm:$0xf]
    %v1634 = vld [vmem:[#allocation14 + $0x3c] sm:$0xf]
    %v1651 = vunpack.c.l.b16 %v1619
    %v1652 = vunpack.c.l.b16 %v1620
    %v1653 = vunpack.c.l.b16 %v1621
    %v1654 = vunpack.c.l.b16 %v1622
    %v1655 = vunpack.c.l.b16 %v1623
    %v1656 = vunpack.c.l.b16 %v1624
    %v1657 = vunpack.c.l.b16 %v1625
    %v1658 = vunpack.c.l.b16 %v1626
    %v1659 = vunpack.c.l.b16 %v1627
    %v1660 = vunpack.c.l.b16 %v1628
    %v1661 = vunpack.c.l.b16 %v1629
    %v1662 = vunpack.c.l.b16 %v1630
    %v1663 = vunpack.c.l.b16 %v1631
    %v1664 = vunpack.c.l.b16 %v1632
    %v1665 = vunpack.c.l.b16 %v1633
    %v1666 = vunpack.c.l.b16 %v1634
    %v1667 = vpack.c.b16 %v1652, %v1651
    %v1668 = vpack.c.b16 %v1654, %v1653
    %v1669 = vpack.c.b16 %v1656, %v1655
    %v1670 = vpack.c.b16 %v1658, %v1657
    %v1671 = vpack.c.b16 %v1660, %v1659
    %v1672 = vpack.c.b16 %v1662, %v1661
    %v1673 = vpack.c.b16 %v1664, %v1663
    %v1674 = vpack.c.b16 %v1666, %v1665
    %1683 = vmatprep.subr.bf16.mxu0 0
    %1684 = vmatpush1.bf16.msra.mxu0 %v1667
    %1685 = vmatprep.subr.bf16.mxu0 0
    %1686 = vmatpush1.bf16.msra.mxu0 %v1668
    %1687 = vmatprep.subr.bf16.mxu0 0
    %1688 = vmatpush1.bf16.msra.mxu0 %v1669
    %1689 = vmatprep.subr.bf16.mxu0 0
    %1690 = vmatpush1.bf16.msra.mxu0 %v1670
    %1691 = vmatprep.subr.bf16.mxu0 0
    %1692 = vmatpush1.bf16.msra.mxu0 %v1671
    %1693 = vmatprep.subr.bf16.mxu0 0
    %1694 = vmatpush1.bf16.msra.mxu0 %v1672
    %1695 = vmatprep.subr.bf16.mxu0 0
    %1696 = vmatpush1.bf16.msra.mxu0 %v1673
    %1697 = vmatprep.subr.bf16.mxu0 0
    %1698 = vmatpush1.bf16.msra.mxu0 %v1674
    %1699 = vmatprep.subr.bf16.mxu0 0
    %1700 = vmatpush1.bf16.msra.mxu0 0
    %1701 = vmatprep.subr.bf16.mxu0 0
    %1702 = vmatpush1.bf16.msra.mxu0 0
    %1703 = vmatprep.subr.bf16.mxu0 0
    %1704 = vmatpush1.bf16.msra.mxu0 0
    %1705 = vmatprep.subr.bf16.mxu0 0
    %1706 = vmatpush1.bf16.msra.mxu0 0
    %1707 = vmatprep.subr.bf16.mxu0 0
    %1708 = vmatpush1.bf16.msra.mxu0 0
    %1709 = vmatprep.subr.bf16.mxu0 0
    %1710 = vmatpush1.bf16.msra.mxu0 0
    %1711 = vmatprep.subr.bf16.mxu0 0
    %1712 = vmatpush1.bf16.msra.mxu0 0
    %1713 = vmatprep.subr.bf16.mxu0 0
    %1714 = vmatpush1.bf16.msra.mxu0 0
    %1715 = vmatprep.mubr.bf16.mxu0 0
    %1716 = vmatmul.mubr.bf16.gmra.mrb[0].mxu0 %v1617
    %v1717 = vpop.f32.mrb[0].mxu0
    %v1718 = vadd.f32 0.0, %v1717
    %v1719 = vpop.f32.mrb[0].mxu0
    %v1720 = vpop.f32.mrb[0].mxu0
    %v1721 = vadd.f32 0.0, %v1720
    %v1722 = vpop.f32.mrb[0].mxu0
    %1723 = vmatprep.mubr.bf16.mxu0 0
    %1724 = vmatmul.mubr.bf16.gmra.mrb[0].mxu0 %v1618
    %v1725 = vpop.f32.mrb[0].mxu0
    %v1726 = vadd.f32 0.0, %v1725
    %v1727 = vpop.f32.mrb[0].mxu0
    %v1728 = vpop.f32.mrb[0].mxu0
    %v1729 = vadd.f32 0.0, %v1728
    %v1730 = vpop.f32.mrb[0].mxu0
    %1731 = vdwg.mxu0
    %v1732 = vld [vmem:[#allocation5] sm:$0xff]
    %v1733 = vld [vmem:[#allocation5 + $0x8] sm:$0xff]
    %v1734 = vld [vmem:[#allocation5 + $0x10] sm:$0xff]
    %v1735 = vld [vmem:[#allocation5 + $0x18] sm:$0xff]
    %1736 = vmatprep.subr.mxu0 0.0
    %1737 = vmatpush1.xpose.msra.mxu0 %v1459
    %1738 = vmatprep.subr.mxu0 0.0
    %1739 = vmatpush1.xpose.msra.mxu0 %v1462
    %1740 = vmatprep.subr.mxu0 0.0
    %1741 = vmatpush1.xpose.msra.mxu0 %v1467
    %1742 = vmatprep.subr.mxu0 0.0
    %1743 = vmatpush1.xpose.msra.mxu0 %v1470
    %1744 = vmatprep.subr.mxu0 0.0
    %1745 = vmatpush1.xpose.msra.mxu0 %v1475
    %1746 = vmatprep.subr.mxu0 0.0
    %1747 = vmatpush1.xpose.msra.mxu0 %v1478
    %1748 = vmatprep.subr.mxu0 0.0
    %1749 = vmatpush1.xpose.msra.mxu0 %v1483
    %1750 = vmatprep.subr.mxu0 0.0
    %1751 = vmatpush1.xpose.msra.mxu0 %v1486
    %1752 = vmatprep.subr.mxu0 0.0
    %1753 = vmatpush1.xpose.msra.mxu0 %v1491
    %1754 = vmatprep.subr.mxu0 0.0
    %1755 = vmatpush1.xpose.msra.mxu0 %v1494
    %1756 = vmatprep.subr.mxu0 0.0
    %1757 = vmatpush1.xpose.msra.mxu0 %v1499
    %1758 = vmatprep.subr.mxu0 0.0
    %1759 = vmatpush1.xpose.msra.mxu0 %v1502
    %1760 = vmatprep.subr.mxu0 0.0
    %1761 = vmatpush1.xpose.msra.mxu0 %v1507
    %1762 = vmatprep.subr.mxu0 0.0
    %1763 = vmatpush1.xpose.msra.mxu0 %v1510
    %1764 = vmatprep.subr.mxu0 0.0
    %1765 = vmatpush1.xpose.msra.mxu0 %v1515
    %1766 = vmatprep.subr.mxu0 0.0
    %1767 = vmatpush1.xpose.msra.mxu0 %v1518
    %1768 = vmatprep.subr.mxu0 0.0
    %1769 = vmatpush1.xpose.msra.mxu0 0.0
    %1770 = vmatprep.subr.mxu0 0.0
    %1771 = vmatpush1.xpose.msra.mxu0 0.0
    %1772 = vmatprep.subr.mxu0 0.0
    %1773 = vmatpush1.xpose.msra.mxu0 0.0
    %1774 = vmatprep.subr.mxu0 0.0
    %1775 = vmatpush1.xpose.msra.mxu0 0.0
    %1776 = vmatprep.subr.mxu0 0.0
    %1777 = vmatpush1.xpose.msra.mxu0 0.0
    %1778 = vmatprep.subr.mxu0 0.0
    %1779 = vmatpush1.xpose.msra.mxu0 0.0
    %1780 = vmatprep.subr.mxu0 0.0
    %1781 = vmatpush1.xpose.msra.mxu0 0.0
    %1782 = vmatprep.subr.mxu0 0.0
    %1783 = vmatpush1.xpose.msra.mxu0 0.0
    %1784 = vmatprep.subr.mxu0 0.0
    %1785 = vmatpush1.xpose.msra.mxu0 0.0
    %1786 = vmatprep.subr.mxu0 0.0
    %1787 = vmatpush1.xpose.msra.mxu0 0.0
    %1788 = vmatprep.subr.mxu0 0.0
    %1789 = vmatpush1.xpose.msra.mxu0 0.0
    %1790 = vmatprep.subr.mxu0 0.0
    %1791 = vmatpush1.xpose.msra.mxu0 0.0
    %1792 = vmatprep.subr.mxu0 0.0
    %1793 = vmatpush1.xpose.msra.mxu0 0.0
    %1794 = vmatprep.subr.mxu0 0.0
    %1795 = vmatpush1.xpose.msra.mxu0 0.0
    %1796 = vmatprep.subr.mxu0 0.0
    %1797 = vmatpush1.xpose.msra.mxu0 0.0
    %1798 = vmatprep.subr.mxu0 0.0
    %1799 = vmatpush1.xpose.msra.mxu0 0.0
    %1800 = vmatprep.mubr.f32.mxu0 0.0
    %1801 = vmatmul.mubr.f32.gmra.mrb[0].mxu0 %v1718
    %v1802 = vpop.f32.mrb[0].mxu0
    %v1803 = vadd.f32 %v1732, %v1802
    %v1804 = vpop.f32.mrb[0].mxu0
    %1805 = vmatprep.mubr.f32.mxu0 0.0
    %1806 = vmatmul.mubr.f32.gmra.mrb[0].mxu0 %v1721
    %v1807 = vpop.f32.mrb[0].mxu0
    %v1808 = vadd.f32 %v1733, %v1807
    %v1809 = vpop.f32.mrb[0].mxu0
    %1810 = vmatprep.mubr.f32.mxu0 0.0
    %1811 = vmatmul.mubr.f32.gmra.mrb[0].mxu0 %v1726
    %v1812 = vpop.f32.mrb[0].mxu0
    %v1813 = vadd.f32 %v1734, %v1812
    %v1814 = vpop.f32.mrb[0].mxu0
    %1815 = vmatprep.mubr.f32.mxu0 0.0
    %1816 = vmatmul.mubr.f32.gmra.mrb[0].mxu0 %v1729
    %v1817 = vpop.f32.mrb[0].mxu0
    %v1818 = vadd.f32 %v1735, %v1817
    %v1819 = vpop.f32.mrb[0].mxu0
    %1820 = vdwg.mxu0
    %1821 = vmax.xlane.f32.xlu0 %v1803
    %v1822 = vpop.xlane.xlu0 %1821
    %1823 = vmax.xlane.f32.xlu0 %v1808
    %v1824 = vpop.xlane.xlu0 %1823
    %1825 = vmax.xlane.f32.xlu0 %v1813
    %v1826 = vpop.xlane.xlu0 %1825
    %1827 = vmax.xlane.f32.xlu0 %v1818
    %v1828 = vpop.xlane.xlu0 %1827
    %v1829 = vsub.f32 %v1803, %v1822
    %v1830 = vsub.f32 %v1808, %v1824
    %v1831 = vsub.f32 %v1813, %v1826
    %v1832 = vsub.f32 %v1818, %v1828
    %v1833 = vmul.f32 %v1829, 1.442695
    %v1834 = vpow.pop %v1833
    %v1835 = vmul.f32 %v1830, 1.442695
    %v1836 = vpow.pop %v1835
    %v1837 = vmul.f32 %v1831, 1.442695
    %v1838 = vpow.pop %v1837
    %v1839 = vmul.f32 %v1832, 1.442695
    %v1840 = vpow.pop %v1839
    %1841 = vadd.xlane.f32.xlu0 %v1834
    %v1842 = vpop.xlane.xlu0 %1841
    %1843 = vadd.xlane.f32.xlu0 %v1836
    %v1844 = vpop.xlane.xlu0 %1843
    %1845 = vadd.xlane.f32.xlu0 %v1838
    %v1846 = vpop.xlane.xlu0 %1845
    %1847 = vadd.xlane.f32.xlu0 %v1840
    %v1848 = vpop.xlane.xlu0 %1847
    %v1849 = vrcp.pop %v1842
    %v1850 = vrcp.pop %v1844
    %v1851 = vrcp.pop %v1846
    %v1852 = vrcp.pop %v1848
    %v1853 = vmul.f32 %v1834, %v1849
    %v1854 = vmul.f32 %v1836, %v1850
    %v1855 = vmul.f32 %v1838, %v1851
    %v1856 = vmul.f32 %v1840, %v1852
    %v1857 = vpack.c.bf16 %v1854, %v1853
    %v1858 = vpack.c.bf16 %v1856, %v1855
    %v1859 = vpack.c.bf16 %v1558, %v1555
    %v1860 = vpack.c.bf16 %v1566, %v1563
    %v1861 = vpack.c.bf16 %v1574, %v1571
    %v1862 = vpack.c.bf16 %v1582, %v1579
    %v1863 = vpack.c.bf16 %v1590, %v1587
    %v1864 = vpack.c.bf16 %v1598, %v1595
    %v1865 = vpack.c.bf16 %v1606, %v1603
    %v1866 = vpack.c.bf16 %v1614, %v1611
    %1867 = vmatprep.subr.bf16.mxu0 0
    %1868 = vmatpush1.bf16.msra.mxu0 %v1859
    %1869 = vmatprep.subr.bf16.mxu0 0
    %1870 = vmatpush1.bf16.msra.mxu0 %v1860
    %1871 = vmatprep.subr.bf16.mxu0 0
    %1872 = vmatpush1.bf16.msra.mxu0 %v1861
    %1873 = vmatprep.subr.bf16.mxu0 0
    %1874 = vmatpush1.bf16.msra.mxu0 %v1862
    %1875 = vmatprep.subr.bf16.mxu0 0
    %1876 = vmatpush1.bf16.msra.mxu0 %v1863
    %1877 = vmatprep.subr.bf16.mxu0 0
    %1878 = vmatpush1.bf16.msra.mxu0 %v1864
    %1879 = vmatprep.subr.bf16.mxu0 0
    %1880 = vmatpush1.bf16.msra.mxu0 %v1865
    %1881 = vmatprep.subr.bf16.mxu0 0
    %1882 = vmatpush1.bf16.msra.mxu0 %v1866
    %1883 = vmatprep.subr.bf16.mxu0 0
    %1884 = vmatpush1.bf16.msra.mxu0 0
    %1885 = vmatprep.subr.bf16.mxu0 0
    %1886 = vmatpush1.bf16.msra.mxu0 0
    %1887 = vmatprep.subr.bf16.mxu0 0
    %1888 = vmatpush1.bf16.msra.mxu0 0
    %1889 = vmatprep.subr.bf16.mxu0 0
    %1890 = vmatpush1.bf16.msra.mxu0 0
    %1891 = vmatprep.subr.bf16.mxu0 0
    %1892 = vmatpush1.bf16.msra.mxu0 0
    %1893 = vmatprep.subr.bf16.mxu0 0
    %1894 = vmatpush1.bf16.msra.mxu0 0
    %1895 = vmatprep.subr.bf16.mxu0 0
    %1896 = vmatpush1.bf16.msra.mxu0 0
    %1897 = vmatprep.subr.bf16.mxu0 0
    %1898 = vmatpush1.bf16.msra.mxu0 0
    %1899 = vmatprep.mubr.bf16.mxu0 0
    %1900 = vmatmul.mubr.bf16.gmra.mrb[0].mxu0 %v1857
    %v1901 = vpop.f32.mrb[0].mxu0
    %v1902 = vadd.f32 0.0, %v1901
    %v1903 = vpop.f32.mrb[0].mxu0
    %v1904 = vpop.f32.mrb[0].mxu0
    %v1905 = vadd.f32 0.0, %v1904
    %v1906 = vpop.f32.mrb[0].mxu0
    %1907 = vmatprep.mubr.bf16.mxu0 0
    %1908 = vmatmul.mubr.bf16.gmra.mrb[0].mxu0 %v1858
    %v1909 = vpop.f32.mrb[0].mxu0
    %v1910 = vadd.f32 0.0, %v1909
    %v1911 = vpop.f32.mrb[0].mxu0
    %v1912 = vpop.f32.mrb[0].mxu0
    %v1913 = vadd.f32 0.0, %v1912
    %v1914 = vpop.f32.mrb[0].mxu0
    %1915 = vdwg.mxu0
    %v1916 = vpack.c.bf16 %v1905, %v1902
    %v1917 = vpack.c.bf16 %v1913, %v1910
    %v1918 = vld [vmem:[#allocation16] sm:$0xf]
    %v1919 = vld [vmem:[#allocation16 + $0x4] sm:$0xf]
    %v1920 = vld [vmem:[#allocation16 + $0x8] sm:$0xf]
    %v1921 = vld [vmem:[#allocation16 + $0xc] sm:$0xf]
    %v1922 = vld [vmem:[#allocation16 + $0x10] sm:$0xf]
    %v1923 = vld [vmem:[#allocation16 + $0x14] sm:$0xf]
    %v1924 = vld [vmem:[#allocation16 + $0x18] sm:$0xf]
    %v1925 = vld [vmem:[#allocation16 + $0x1c] sm:$0xf]
    %v1926 = vld [vmem:[#allocation16 + $0x20] sm:$0xf]
    %v1927 = vld [vmem:[#allocation16 + $0x24] sm:$0xf]
    %v1928 = vld [vmem:[#allocation16 + $0x28] sm:$0xf]
    %v1929 = vld [vmem:[#allocation16 + $0x2c] sm:$0xf]
    %v1930 = vld [vmem:[#allocation16 + $0x30] sm:$0xf]
    %v1931 = vld [vmem:[#allocation16 + $0x34] sm:$0xf]
    %v1932 = vld [vmem:[#allocation16 + $0x38] sm:$0xf]
    %v1933 = vld [vmem:[#allocation16 + $0x3c] sm:$0xf]
    %v1950 = vunpack.c.l.b16 %v1918
    %v1951 = vunpack.c.l.b16 %v1919
    %v1952 = vunpack.c.l.b16 %v1920
    %v1953 = vunpack.c.l.b16 %v1921
    %v1954 = vunpack.c.l.b16 %v1922
    %v1955 = vunpack.c.l.b16 %v1923
    %v1956 = vunpack.c.l.b16 %v1924
    %v1957 = vunpack.c.l.b16 %v1925
    %v1958 = vunpack.c.l.b16 %v1926
    %v1959 = vunpack.c.l.b16 %v1927
    %v1960 = vunpack.c.l.b16 %v1928
    %v1961 = vunpack.c.l.b16 %v1929
    %v1962 = vunpack.c.l.b16 %v1930
    %v1963 = vunpack.c.l.b16 %v1931
    %v1964 = vunpack.c.l.b16 %v1932
    %v1965 = vunpack.c.l.b16 %v1933
    %v1966 = vpack.c.b16 %v1951, %v1950
    %v1967 = vpack.c.b16 %v1953, %v1952
    %v1968 = vpack.c.b16 %v1955, %v1954
    %v1969 = vpack.c.b16 %v1957, %v1956
    %v1970 = vpack.c.b16 %v1959, %v1958
    %v1971 = vpack.c.b16 %v1961, %v1960
    %v1972 = vpack.c.b16 %v1963, %v1962
    %v1973 = vpack.c.b16 %v1965, %v1964
    %1982 = vmatprep.subr.bf16.mxu0 0
    %1983 = vmatpush1.bf16.msra.mxu0 %v1966
    %1984 = vmatprep.subr.bf16.mxu0 0
    %1985 = vmatpush1.bf16.msra.mxu0 %v1967
    %1986 = vmatprep.subr.bf16.mxu0 0
    %1987 = vmatpush1.bf16.msra.mxu0 %v1968
    %1988 = vmatprep.subr.bf16.mxu0 0
    %1989 = vmatpush1.bf16.msra.mxu0 %v1969
    %1990 = vmatprep.subr.bf16.mxu0 0
    %1991 = vmatpush1.bf16.msra.mxu0 %v1970
    %1992 = vmatprep.subr.bf16.mxu0 0
    %1993 = vmatpush1.bf16.msra.mxu0 %v1971
    %1994 = vmatprep.subr.bf16.mxu0 0
    %1995 = vmatpush1.bf16.msra.mxu0 %v1972
    %1996 = vmatprep.subr.bf16.mxu0 0
    %1997 = vmatpush1.bf16.msra.mxu0 %v1973
    %1998 = vmatprep.subr.bf16.mxu0 0
    %1999 = vmatpush1.bf16.msra.mxu0 0
    %2000 = vmatprep.subr.bf16.mxu0 0
    %2001 = vmatpush1.bf16.msra.mxu0 0
    %2002 = vmatprep.subr.bf16.mxu0 0
    %2003 = vmatpush1.bf16.msra.mxu0 0
    %2004 = vmatprep.subr.bf16.mxu0 0
    %2005 = vmatpush1.bf16.msra.mxu0 0
    %2006 = vmatprep.subr.bf16.mxu0 0
    %2007 = vmatpush1.bf16.msra.mxu0 0
    %2008 = vmatprep.subr.bf16.mxu0 0
    %2009 = vmatpush1.bf16.msra.mxu0 0
    %2010 = vmatprep.subr.bf16.mxu0 0
    %2011 = vmatpush1.bf16.msra.mxu0 0
    %2012 = vmatprep.subr.bf16.mxu0 0
    %2013 = vmatpush1.bf16.msra.mxu0 0
    %2014 = vmatprep.mubr.bf16.mxu0 0
    %2015 = vmatmul.mubr.bf16.gmra.mrb[0].mxu0 %v1916
    %v2016 = vpop.f32.mrb[0].mxu0
    %v2017 = vadd.f32 0.0, %v2016
    %v2018 = vpop.f32.mrb[0].mxu0
    %v2019 = vpop.f32.mrb[0].mxu0
    %v2020 = vadd.f32 0.0, %v2019
    %v2021 = vpop.f32.mrb[0].mxu0
    %2022 = vmatprep.mubr.bf16.mxu0 0
    %2023 = vmatmul.mubr.bf16.gmra.mrb[0].mxu0 %v1917
    %v2024 = vpop.f32.mrb[0].mxu0
    %v2025 = vadd.f32 0.0, %v2024
    %v2026 = vpop.f32.mrb[0].mxu0
    %v2027 = vpop.f32.mrb[0].mxu0
    %v2028 = vadd.f32 0.0, %v2027
    %v2029 = vpop.f32.mrb[0].mxu0
    %2030 = vdwg.mxu0
    %v2031 = vadd.f32 %v776, %v2017
    %v2032 = vadd.f32 %v777, %v2020
    %v2033 = vadd.f32 %v778, %v2025
    %v2034 = vadd.f32 %v779, %v2028
    %2035 = vmatprep.subr.mxu0 0.0
    %2036 = vmatpush1.msra.mxu0 %v1853
    %2037 = vmatprep.subr.mxu0 0.0
    %2038 = vmatpush1.msra.mxu0 %v1854
    %2039 = vmatprep.subr.mxu0 0.0
    %2040 = vmatpush1.msra.mxu0 %v1855
    %2041 = vmatprep.subr.mxu0 0.0
    %2042 = vmatpush1.msra.mxu0 %v1856
    %2043 = vmatprep.subr.mxu0 0.0
    %2044 = vmatpush1.msra.mxu0 0.0
    %2045 = vmatprep.subr.mxu0 0.0
    %2046 = vmatpush1.msra.mxu0 0.0
    %2047 = vmatprep.subr.mxu0 0.0
    %2048 = vmatpush1.msra.mxu0 0.0
    %2049 = vmatprep.subr.mxu0 0.0
    %2050 = vmatpush1.msra.mxu0 0.0
    %2051 = vmatprep.subr.mxu0 0.0
    %2052 = vmatpush1.msra.mxu0 0.0
    %2053 = vmatprep.subr.mxu0 0.0
    %2054 = vmatpush1.msra.mxu0 0.0
    %2055 = vmatprep.subr.mxu0 0.0
    %2056 = vmatpush1.msra.mxu0 0.0
    %2057 = vmatprep.subr.mxu0 0.0
    %2058 = vmatpush1.msra.mxu0 0.0
    %2059 = vmatprep.subr.mxu0 0.0
    %2060 = vmatpush1.msra.mxu0 0.0
    %2061 = vmatprep.subr.mxu0 0.0
    %2062 = vmatpush1.msra.mxu0 0.0
    %2063 = vmatprep.subr.mxu0 0.0
    %2064 = vmatpush1.msra.mxu0 0.0
    %2065 = vmatprep.subr.mxu0 0.0
    %2066 = vmatpush1.msra.mxu0 0.0
    %2067 = vmatprep.subr.mxu0 0.0
    %2068 = vmatpush1.msra.mxu0 0.0
    %2069 = vmatprep.subr.mxu0 0.0
    %2070 = vmatpush1.msra.mxu0 0.0
    %2071 = vmatprep.subr.mxu0 0.0
    %2072 = vmatpush1.msra.mxu0 0.0
    %2073 = vmatprep.subr.mxu0 0.0
    %2074 = vmatpush1.msra.mxu0 0.0
    %2075 = vmatprep.subr.mxu0 0.0
    %2076 = vmatpush1.msra.mxu0 0.0
    %2077 = vmatprep.subr.mxu0 0.0
    %2078 = vmatpush1.msra.mxu0 0.0
    %2079 = vmatprep.subr.mxu0 0.0
    %2080 = vmatpush1.msra.mxu0 0.0
    %2081 = vmatprep.subr.mxu0 0.0
    %2082 = vmatpush1.msra.mxu0 0.0
    %2083 = vmatprep.subr.mxu0 0.0
    %2084 = vmatpush1.msra.mxu0 0.0
    %2085 = vmatprep.subr.mxu0 0.0
    %2086 = vmatpush1.msra.mxu0 0.0
    %2087 = vmatprep.subr.mxu0 0.0
    %2088 = vmatpush1.msra.mxu0 0.0
    %2089 = vmatprep.subr.mxu0 0.0
    %2090 = vmatpush1.msra.mxu0 0.0
    %2091 = vmatprep.subr.mxu0 0.0
    %2092 = vmatpush1.msra.mxu0 0.0
    %2093 = vmatprep.subr.mxu0 0.0
    %2094 = vmatpush1.msra.mxu0 0.0
    %2095 = vmatprep.subr.mxu0 0.0
    %2096 = vmatpush1.msra.mxu0 0.0
    %2097 = vmatprep.subr.mxu0 0.0
    %2098 = vmatpush1.msra.mxu0 0.0
    %2099 = vmatprep.mubr.f32.mxu0 0.0
    %2100 = vmatmul.mubr.f32.gmra.mrb[0].mxu0 %v782
    %v2101 = vpop.f32.mrb[0].mxu0
    %v2102 = vadd.f32 0.0, %v2101
    %v2103 = vpop.f32.mrb[0].mxu0
    %2104 = vdwg.mxu0
    %v2105 = vpack.c.bf16 %v2032, %v2031
    %v2106 = vpack.c.bf16 %v2034, %v2033
    %v2107 = vld [vmem:[%s13] sm:$0xff]
    %v2108 = vld [vmem:[%s13 + $0x8] sm:$0xff]
    %v2109 = vld [vmem:[%s13 + $0x10] sm:$0xff]
    %v2110 = vld [vmem:[%s13 + $0x18] sm:$0xff]
    %v2111 = vld [vmem:[%s13 + $0x20] sm:$0xff]
    %v2112 = vld [vmem:[%s13 + $0x28] sm:$0xff]
    %v2113 = vld [vmem:[%s13 + $0x30] sm:$0xff]
    %v2114 = vld [vmem:[%s13 + $0x38] sm:$0xff]
    %v2115 = vld [vmem:[%s13 + $0x40] sm:$0xff]
    %v2116 = vld [vmem:[%s13 + $0x48] sm:$0xff]
    %v2117 = vld [vmem:[%s13 + $0x50] sm:$0xff]
    %v2118 = vld [vmem:[%s13 + $0x58] sm:$0xff]
    %v2119 = vld [vmem:[%s13 + $0x60] sm:$0xff]
    %v2120 = vld [vmem:[%s13 + $0x68] sm:$0xff]
    %v2121 = vld [vmem:[%s13 + $0x70] sm:$0xff]
    %v2122 = vld [vmem:[%s13 + $0x78] sm:$0xff]
    %v2123 = vld [vmem:[%s14] sm:$0x3]
    %v2125 = vlaneseq
    %v2126 = vshrl.u32 %v2125, 7
    %v2127 = vsub.s32 0, %v2126
    %v2128 = vrot.slane %v2123, %v2127
    %v2129 = vlaneseq
    %v2130 = vshrl.u32 %v2129, 7
    %v2131 = vsub.s32 1, %v2130
    %v2132 = vrot.slane %v2123, %v2131
    %v2151 = vunpack.c.l.b16 %v2107
    %v2152 = vunpack.c.h.b16 %v2107
    %v2153 = vunpack.c.l.b16 %v2108
    %v2154 = vunpack.c.h.b16 %v2108
    %v2155 = vunpack.c.l.b16 %v2109
    %v2156 = vunpack.c.h.b16 %v2109
    %v2157 = vunpack.c.l.b16 %v2110
    %v2158 = vunpack.c.h.b16 %v2110
    %v2159 = vunpack.c.l.b16 %v2111
    %v2160 = vunpack.c.h.b16 %v2111
    %v2161 = vunpack.c.l.b16 %v2112
    %v2162 = vunpack.c.h.b16 %v2112
    %v2163 = vunpack.c.l.b16 %v2113
    %v2164 = vunpack.c.h.b16 %v2113
    %v2165 = vunpack.c.l.b16 %v2114
    %v2166 = vunpack.c.h.b16 %v2114
    %v2167 = vunpack.c.l.b16 %v2115
    %v2168 = vunpack.c.h.b16 %v2115
    %v2169 = vunpack.c.l.b16 %v2116
    %v2170 = vunpack.c.h.b16 %v2116
    %v2171 = vunpack.c.l.b16 %v2117
    %v2172 = vunpack.c.h.b16 %v2117
    %v2173 = vunpack.c.l.b16 %v2118
    %v2174 = vunpack.c.h.b16 %v2118
    %v2175 = vunpack.c.l.b16 %v2119
    %v2176 = vunpack.c.h.b16 %v2119
    %v2177 = vunpack.c.l.b16 %v2120
    %v2178 = vunpack.c.h.b16 %v2120
    %v2179 = vunpack.c.l.b16 %v2121
    %v2180 = vunpack.c.h.b16 %v2121
    %v2181 = vunpack.c.l.b16 %v2122
    %v2182 = vunpack.c.h.b16 %v2122
    %v2183 = vpack.c.b16 %v2153, %v2151
    %v2184 = vpack.c.b16 %v2154, %v2152
    %v2185 = vpack.c.b16 %v2157, %v2155
    %v2186 = vpack.c.b16 %v2158, %v2156
    %v2187 = vpack.c.b16 %v2161, %v2159
    %v2188 = vpack.c.b16 %v2162, %v2160
    %v2189 = vpack.c.b16 %v2165, %v2163
    %v2190 = vpack.c.b16 %v2166, %v2164
    %v2191 = vpack.c.b16 %v2169, %v2167
    %v2192 = vpack.c.b16 %v2170, %v2168
    %v2193 = vpack.c.b16 %v2173, %v2171
    %v2194 = vpack.c.b16 %v2174, %v2172
    %v2195 = vpack.c.b16 %v2177, %v2175
    %v2196 = vpack.c.b16 %v2178, %v2176
    %v2197 = vpack.c.b16 %v2181, %v2179
    %v2198 = vpack.c.b16 %v2182, %v2180
    %2215 = vmatprep.subr.bf16.mxu0 %v2184
    %2216 = vmatpush1.bf16.msra.mxu0 %v2183
    %2217 = vmatprep.subr.bf16.mxu0 %v2186
    %2218 = vmatpush1.bf16.msra.mxu0 %v2185
    %2219 = vmatprep.subr.bf16.mxu0 %v2188
    %2220 = vmatpush1.bf16.msra.mxu0 %v2187
    %2221 = vmatprep.subr.bf16.mxu0 %v2190
    %2222 = vmatpush1.bf16.msra.mxu0 %v2189
    %2223 = vmatprep.subr.bf16.mxu0 %v2192
    %2224 = vmatpush1.bf16.msra.mxu0 %v2191
    %2225 = vmatprep.subr.bf16.mxu0 %v2194
    %2226 = vmatpush1.bf16.msra.mxu0 %v2193
    %2227 = vmatprep.subr.bf16.mxu0 %v2196
    %2228 = vmatpush1.bf16.msra.mxu0 %v2195
    %2229 = vmatprep.subr.bf16.mxu0 %v2198
    %2230 = vmatpush1.bf16.msra.mxu0 %v2197
    %2231 = vmatprep.subr.bf16.mxu0 0
    %2232 = vmatpush1.bf16.msra.mxu0 0
    %2233 = vmatprep.subr.bf16.mxu0 0
    %2234 = vmatpush1.bf16.msra.mxu0 0
    %2235 = vmatprep.subr.bf16.mxu0 0
    %2236 = vmatpush1.bf16.msra.mxu0 0
    %2237 = vmatprep.subr.bf16.mxu0 0
    %2238 = vmatpush1.bf16.msra.mxu0 0
    %2239 = vmatprep.subr.bf16.mxu0 0
    %2240 = vmatpush1.bf16.msra.mxu0 0
    %2241 = vmatprep.subr.bf16.mxu0 0
    %2242 = vmatpush1.bf16.msra.mxu0 0
    %2243 = vmatprep.subr.bf16.mxu0 0
    %2244 = vmatpush1.bf16.msra.mxu0 0
    %2245 = vmatprep.subr.bf16.mxu0 0
    %2246 = vmatpush1.bf16.msra.mxu0 0
    %2247 = vmatprep.mubr.bf16.mxu0 0
    %2248 = vmatmul.mubr.bf16.gmra.mrb[0].mxu0 %v2105
    %v2249 = vpop.f32.mrb[0].mxu0
    %v2250 = vadd.f32 %v2128, %v2249
    %v2251 = vpop.f32.mrb[0].mxu0
    %v2252 = vadd.f32 %v2132, %v2251
    %v2253 = vpop.f32.mrb[0].mxu0
    %v2254 = vadd.f32 %v2128, %v2253
    %v2255 = vpop.f32.mrb[0].mxu0
    %v2256 = vadd.f32 %v2132, %v2255
    %2257 = vmatprep.mubr.bf16.mxu0 0
    %2258 = vmatmul.mubr.bf16.gmra.mrb[0].mxu0 %v2106
    %v2259 = vpop.f32.mrb[0].mxu0
    %v2260 = vadd.f32 %v2128, %v2259
    %v2261 = vpop.f32.mrb[0].mxu0
    %v2262 = vadd.f32 %v2132, %v2261
    %v2263 = vpop.f32.mrb[0].mxu0
    %v2264 = vadd.f32 %v2128, %v2263
    %v2265 = vpop.f32.mrb[0].mxu0
    %v2266 = vadd.f32 %v2132, %v2265
    %2267 = vdwg.mxu0
    %v2268 = vmax.f32 %v2250, %v2252
    %2269 = vmax.xlane.f32.xlu0 %v2268
    %v2270 = vpop.xlane.xlu0 %2269
    %v2271 = vmax.f32 %v2254, %v2256
    %2272 = vmax.xlane.f32.xlu0 %v2271
    %v2273 = vpop.xlane.xlu0 %2272
    %v2274 = vmax.f32 %v2260, %v2262
    %2275 = vmax.xlane.f32.xlu0 %v2274
    %v2276 = vpop.xlane.xlu0 %2275
    %v2277 = vmax.f32 %v2264, %v2266
    %2278 = vmax.xlane.f32.xlu0 %v2277
    %v2279 = vpop.xlane.xlu0 %2278
    %v2280 = vsub.f32 %v2250, %v2270
    %v2281 = vsub.f32 %v2252, %v2270
    %v2282 = vsub.f32 %v2254, %v2273
    %v2283 = vsub.f32 %v2256, %v2273
    %v2284 = vsub.f32 %v2260, %v2276
    %v2285 = vsub.f32 %v2262, %v2276
    %v2286 = vsub.f32 %v2264, %v2279
    %v2287 = vsub.f32 %v2266, %v2279
    %v2288 = vmul.f32 %v2280, 1.442695
    %v2289 = vpow.pop %v2288
    %v2290 = vmul.f32 %v2281, 1.442695
    %v2291 = vpow.pop %v2290
    %v2292 = vmul.f32 %v2282, 1.442695
    %v2293 = vpow.pop %v2292
    %v2294 = vmul.f32 %v2283, 1.442695
    %v2295 = vpow.pop %v2294
    %v2296 = vmul.f32 %v2284, 1.442695
    %v2297 = vpow.pop %v2296
    %v2298 = vmul.f32 %v2285, 1.442695
    %v2299 = vpow.pop %v2298
    %v2300 = vmul.f32 %v2286, 1.442695
    %v2301 = vpow.pop %v2300
    %v2302 = vmul.f32 %v2287, 1.442695
    %v2303 = vpow.pop %v2302
    %v2304 = vadd.f32 %v2289, %v2291
    %2305 = vadd.xlane.f32.xlu0 %v2304
    %v2306 = vpop.xlane.xlu0 %2305
    %v2307 = vadd.f32 %v2293, %v2295
    %2308 = vadd.xlane.f32.xlu0 %v2307
    %v2309 = vpop.xlane.xlu0 %2308
    %v2310 = vadd.f32 %v2297, %v2299
    %2311 = vadd.xlane.f32.xlu0 %v2310
    %v2312 = vpop.xlane.xlu0 %2311
    %v2313 = vadd.f32 %v2301, %v2303
    %2314 = vadd.xlane.f32.xlu0 %v2313
    %v2315 = vpop.xlane.xlu0 %2314
    %v2316 = vlog2.pop %v2306
    %v2317 = vmul.f32 %v2316, 0.6931472
    %v2318 = vlog2.pop %v2309
    %v2319 = vmul.f32 %v2318, 0.6931472
    %v2320 = vlog2.pop %v2312
    %v2321 = vmul.f32 %v2320, 0.6931472
    %v2322 = vlog2.pop %v2315
    %v2323 = vmul.f32 %v2322, 0.6931472
    %v2324 = vsub.f32 %v2280, %v2317
    %v2325 = vsub.f32 %v2281, %v2317
    %v2326 = vsub.f32 %v2282, %v2319
    %v2327 = vsub.f32 %v2283, %v2319
    %v2328 = vsub.f32 %v2284, %v2321
    %v2329 = vsub.f32 %v2285, %v2321
    %v2330 = vsub.f32 %v2286, %v2323
    %v2331 = vsub.f32 %v2287, %v2323
    %2332 = vst [vmem:[#allocation17] sm:$0xf] %v2102
    %v2333 = vld [vmem:[%s16] sm:$0xf]
    %v2334 = vsub.f32 %v2333, 0.5
    %v2335 = vrcp.pop 0.5
    %v2336 = vmul.f32 %v2334, %v2335
    %v2337 = vmax.f32 %v2336, 0.0
    %v2338 = vmin.f32 %v2337, 1.0
    %v2339 = vmax.f32 %v2102, 1e-06
    %v2340 = vmin.f32 %v2339, 0.999999
    %v2341 = vlog2.pop %v2340
    %v2342 = vmul.f32 %v2341, 0.6931472
    %v2343 = vmul.f32 %v2338, %v2342
    %v2344 = vsub.f32 1.0, %v2338
    %v2345 = vsub.f32 1.0, %v2340
    %v2346 = vlog2.pop %v2345
    %v2347 = vmul.f32 %v2346, 0.6931472
    %v2348 = vmul.f32 %v2344, %v2347
    %v2349 = vadd.f32 %v2343, %v2348
    %v2350 = vsub.f32 0.0, %v2349
    %v2351 = vld [vmem:[%s17] sm:$0xf]
    %v2352 = vmul.f32 %v2350, %v2351
    %v2353 = vsel %vm863, %v2352, 0.0
    %2354 = vadd.xlane.f32.xlu0 %v2353
    %v2355 = vpop.xlane.xlu0 %2354
    %vm2356 = vcmask 3072
    %2357 = vst.msk [vmem:[%s19] sm:$0xf] %vm2356, %v2355
    %v2358 = vld [vmem:[%s15] sm:$0xff]
    %v2359 = vld [vmem:[%s15 + $0x8] sm:$0xff]
    %v2360 = vld [vmem:[%s15 + $0x10] sm:$0xff]
    %v2361 = vld [vmem:[%s15 + $0x18] sm:$0xff]
    %v2362 = vlaneseq
    %v2363 = vand.u32 %v2362, 127
    %v2364 = vadd.s32 %v2363, 128
    %2365 = vset.pattern.permute.xlu0 0
    %2366 = vperm.xlu0 %2365, %v2358
    %v2367 = vpop.permute.xlu0 %2366
    %2368 = vset.pattern.permute.xlu0 0
    %2369 = vperm.xlu0 %2368, %v2359
    %v2370 = vpop.permute.xlu0 %2369
    %2371 = vset.pattern.permute.xlu0 0
    %2372 = vperm.xlu0 %2371, %v2360
    %v2373 = vpop.permute.xlu0 %2372
    %2374 = vset.pattern.permute.xlu0 0
    %2375 = vperm.xlu0 %2374, %v2361
    %v2376 = vpop.permute.xlu0 %2375
    %vm2377 = vcmp.eq.s32.totalorder %v2363, %v2367
    %vm2378 = vcmp.eq.s32.totalorder %v2364, %v2367
    %vm2379 = vcmp.eq.s32.totalorder %v2363, %v2370
    %vm2380 = vcmp.eq.s32.totalorder %v2364, %v2370
    %vm2381 = vcmp.eq.s32.totalorder %v2363, %v2373
    %vm2382 = vcmp.eq.s32.totalorder %v2364, %v2373
    %vm2383 = vcmp.eq.s32.totalorder %v2363, %v2376
    %vm2384 = vcmp.eq.s32.totalorder %v2364, %v2376
    %v2385 = vsel %vm2377, %v2324, 0.0
    %v2386 = vsel %vm2378, %v2325, 0.0
    %v2387 = vsel %vm2379, %v2326, 0.0
    %v2388 = vsel %vm2380, %v2327, 0.0
    %v2389 = vsel %vm2381, %v2328, 0.0
    %v2390 = vsel %vm2382, %v2329, 0.0
    %v2391 = vsel %vm2383, %v2330, 0.0
    %v2392 = vsel %vm2384, %v2331, 0.0
    %v2393 = vadd.f32 %v2385, %v2386
    %2394 = vadd.xlane.f32.xlu0 %v2393
    %v2395 = vpop.xlane.xlu0 %2394
    %v2396 = vadd.f32 %v2387, %v2388
    %2397 = vadd.xlane.f32.xlu0 %v2396
    %v2398 = vpop.xlane.xlu0 %2397
    %v2399 = vadd.f32 %v2389, %v2390
    %2400 = vadd.xlane.f32.xlu0 %v2399
    %v2401 = vpop.xlane.xlu0 %2400
    %v2402 = vadd.f32 %v2391, %v2392
    %2403 = vadd.xlane.f32.xlu0 %v2402
    %v2404 = vpop.xlane.xlu0 %2403
    %vm2405 = vcmp.eq.s32.totalorder %v2363, 0
    %vm2406 = vcmp.eq.s32.totalorder %v2364, 0
    %v2407 = vsel %vm2405, %v2324, 0.0
    %v2408 = vsel %vm2406, %v2325, 0.0
    %v2409 = vsel %vm2405, %v2326, 0.0
    %v2410 = vsel %vm2406, %v2327, 0.0
    %v2411 = vsel %vm2405, %v2328, 0.0
    %v2412 = vsel %vm2406, %v2329, 0.0
    %v2413 = vsel %vm2405, %v2330, 0.0
    %v2414 = vsel %vm2406, %v2331, 0.0
    %v2415 = vadd.f32 %v2407, %v2408
    %2416 = vadd.xlane.f32.xlu0 %v2415
    %v2417 = vpop.xlane.xlu0 %2416
    %v2418 = vadd.f32 %v2409, %v2410
    %2419 = vadd.xlane.f32.xlu0 %v2418
    %v2420 = vpop.xlane.xlu0 %2419
    %v2421 = vadd.f32 %v2411, %v2412
    %2422 = vadd.xlane.f32.xlu0 %v2421
    %v2423 = vpop.xlane.xlu0 %2422
    %v2424 = vadd.f32 %v2413, %v2414
    %2425 = vadd.xlane.f32.xlu0 %v2424
    %v2426 = vpop.xlane.xlu0 %2425
    %v2427 = vadd.f32 %v2324, %v2325
    %2428 = vadd.xlane.f32.xlu0 %v2427
    %v2429 = vpop.xlane.xlu0 %2428
    %v2430 = vadd.f32 %v2326, %v2327
    %2431 = vadd.xlane.f32.xlu0 %v2430
    %v2432 = vpop.xlane.xlu0 %2431
    %v2433 = vadd.f32 %v2328, %v2329
    %2434 = vadd.xlane.f32.xlu0 %v2433
    %v2435 = vpop.xlane.xlu0 %2434
    %v2436 = vadd.f32 %v2330, %v2331
    %2437 = vadd.xlane.f32.xlu0 %v2436
    %v2438 = vpop.xlane.xlu0 %2437
    %v2439 = vmul.f32 %v2395, 0.9
    %v2440 = vmul.f32 %v2398, 0.9
    %v2441 = vmul.f32 %v2401, 0.9
    %v2442 = vmul.f32 %v2404, 0.9
    %v2443 = vsub.f32 -0.8788164, %v2439
    %v2444 = vsub.f32 -0.8788164, %v2440
    %v2445 = vsub.f32 -0.8788164, %v2441
    %v2446 = vsub.f32 -0.8788164, %v2442
    %v2447 = vsub.f32 %v2429, %v2417
    %v2448 = vsub.f32 %v2432, %v2420
    %v2449 = vsub.f32 %v2435, %v2423
    %v2450 = vsub.f32 %v2438, %v2426
    %v2451 = vsub.f32 %v2447, %v2395
    %v2452 = vsub.f32 %v2448, %v2398
    %v2453 = vsub.f32 %v2449, %v2401
    %v2454 = vsub.f32 %v2450, %v2404
    %v2455 = vmul.f32 %v2451, 0.0003937008
    %v2456 = vmul.f32 %v2452, 0.0003937008
    %v2457 = vmul.f32 %v2453, 0.0003937008
    %v2458 = vmul.f32 %v2454, 0.0003937008
    %v2459 = vsub.f32 %v2443, %v2455
    %v2460 = vsub.f32 %v2444, %v2456
    %v2461 = vsub.f32 %v2445, %v2457
    %v2462 = vsub.f32 %v2446, %v2458
    %vm2463 = vcmp.ne.s32.totalorder %v2358, 0
    %vm2464 = vcmp.ne.s32.totalorder %v2359, 0
    %vm2465 = vcmp.ne.s32.totalorder %v2360, 0
    %vm2466 = vcmp.ne.s32.totalorder %v2361, 0
    %v2467 = vsel %vm2463, 1, 0
    %v2468 = vsel %vm2464, 1, 0
    %v2469 = vsel %vm2465, 1, 0
    %v2470 = vsel %vm2466, 1, 0
    %v2471 = vcvt.s32.f32 %v2467
    %v2472 = vcvt.s32.f32 %v2468
    %v2473 = vcvt.s32.f32 %v2469
    %v2474 = vcvt.s32.f32 %v2470
    %v2475 = vmul.f32 %v2459, %v2471
    %v2476 = vmul.f32 %v2460, %v2472
    %v2477 = vmul.f32 %v2461, %v2473
    %v2478 = vmul.f32 %v2462, %v2474
    %vm2479 = vcmask 7168
    %2480 = vst.msk [vmem:[%s20] sm:$0xff] %vm2479, %v2475
    %2481 = vst.msk [vmem:[%s20 + $0x8] sm:$0xff] %vm2479, %v2476
    %2482 = vst.msk [vmem:[%s20 + $0x10] sm:$0xff] %vm2479, %v2477
    %2483 = vst.msk [vmem:[%s20 + $0x18] sm:$0xff] %vm2479, %v2478
    // Predicated region
    $region110: #{tpu_custom_call.1} parent=1 // pred_check
      _
    $region111: #{tpu_custom_call.1} parent=1 // pred_check_branch
      %2485 = sbr.rel (0) target = $region113
    $region112: #{tpu_custom_call.1} parent=1 // pred_region
      %s2487 = ssub.s32 64, 64
      %2488 = vsyncadd [#allocation4], %s2487
      %s2490 = sshll.u32 [#allocation17], 4
      %s2491 = int_to_ptr.vmem [resolvable:$true] %s2490
      %2493 = dma.vmem_to_hbm [thread:$0]  %s2491, 64, %s18, [#allocation4]
    $region113: #{tpu_custom_call.1} parent=1 // pred_fallthru
      _
    // Predicated region
    $region114: #{tpu_custom_call.1} parent=1 // pred_check
      _
    $region115: #{tpu_custom_call.1} parent=1 // pred_check_branch
      %2495 = sbr.rel (0) target = $region117
    $region116: #{tpu_custom_call.1} parent=1 // pred_region
      _
    $region117: #{tpu_custom_call.1} parent=1 // pred_fallthru
      _
    // Predicated region
    $region118: #{tpu_custom_call.1} parent=1 // pred_check
      _
    $region119: #{tpu_custom_call.1} parent=1 // pred_check_branch
      %2497 = sbr.rel (0) target = $region121
    $region120: #{tpu_custom_call.1} parent=1 // pred_region
      _
    $region121: #{tpu_custom_call.1} parent=1 // pred_fallthru
      _
    // Predicated region
    $region122: #{tpu_custom_call.1} parent=1 // pred_check
      _
    $region123: #{tpu_custom_call.1} parent=1 // pred_check_branch
      %2499 = sbr.rel (0) target = $region125
    $region124: #{tpu_custom_call.1} parent=1 // pred_region
      %2500 = dma.done [#allocation4], 64
    $region125: #{tpu_custom_call.1} parent=1 // pred_fallthru
      _
    // Predicated region
    $region126: #{tpu_custom_call.1} parent=1 // pred_check
      _
    $region127: #{tpu_custom_call.1} parent=1 // pred_check_branch
      %2502 = sbr.rel (0) target = $region129
    $region128: #{tpu_custom_call.1} parent=1 // pred_region
      _
    $region129: #{tpu_custom_call.1} parent=1 // pred_fallthru
      _
    // Predicated region
    $region130: #{tpu_custom_call.1} parent=1 // pred_check
      _
    $region131: #{tpu_custom_call.1} parent=1 // pred_check_branch
      %2504 = sbr.rel (0) target = $region133
    $region132: #{tpu_custom_call.1} parent=1 // pred_region
      _
    $region133: #{tpu_custom_call.1} parent=1 // pred_fallthru
      _
    %2505 = vsyncpa [#allocation3], 1
    %2506 = vsyncpa [#allocation6], 1
    %2507 = vsyncpa [#allocation9], 1
    %2508 = vsyncpa [#allocation12], 1
    %2509 = vsyncpa [#allocation15], 1
    %2510 = vsyncpa [#allocation4], 1

</llo_original>
